<compile_context>
chip_gen: v7x
topology: tpu7x:2x2x1
jax: 0.10.0
libtpu: 0.0.40
codegen_flags: <defaults>
</compile_context>

<pallas_src>
import functools

import numpy as np
import jax
import jax.numpy as jnp
from jax.experimental import pallas as pl
from jax.experimental.pallas import tpu as pltpu


# ----------------------------- Pallas kernel --------------------------------


def _window_attention_kernel(x_ref, wqkv_ref, bqkv_ref, wproj_ref, bproj_ref,
                             bias_ref, o_ref, *, num_heads, head_dim, nw, bblk):
    # x_ref:    (Bblk, N, C)        block of windows, bf16
    # wqkv_ref: (C, 3C)             qkv weight (transposed, scale folded into Q cols), bf16
    # bqkv_ref: (1, 3C)             qkv bias (scale folded into Q part), f32
    # wproj_ref:(H, hd, C)          proj weight (transposed, split per head), bf16
    # bproj_ref:(1, C)              proj bias, f32
    # bias_ref: (nW, H, N, N)       rel-pos bias + window mask, f32
    # o_ref:    (Bblk, N, C)        output, f32
    C = num_heads * head_dim
    N = x_ref.shape[1]
    rep = bblk // nw
    T = bblk * N

    # ---- fused QKV projection over the whole block of windows (big-M matmul) ----
    x2 = x_ref[...].reshape(T, C)                                   # bf16 (T, C)
    qkv = jnp.dot(x2, wqkv_ref[...],
                  preferred_element_type=jnp.float32) + bqkv_ref[0]  # f32 (T, 3C)
    qkv = qkv.reshape(bblk, N, 3 * C)                               # leading split: free

    bias = bias_ref[...]                                            # f32 (nW, H, N, N)

    y = None
    for h in range(num_heads):
        q = qkv[:, :, h * head_dim:(h + 1) * head_dim].astype(jnp.bfloat16)
        k = qkv[:, :, C + h * head_dim:C + (h + 1) * head_dim].astype(jnp.bfloat16)
        v = qkv[:, :, 2 * C + h * head_dim:2 * C + (h + 1) * head_dim].astype(jnp.bfloat16)

        # scaled Q @ K^T, batched over windows, contracting head_dim (no explicit .T)
        s = jnp.einsum('bnd,bmd->bnm', q, k,
                       preferred_element_type=jnp.float32)          # f32 (Bblk, N, N)

        # + relative position bias + window mask (mask index = window_idx % nW)
        s = s.reshape(rep, nw, N, N) + bias[:, h][None]

        # softmax over keys, in f32
        s = s - jnp.max(s, axis=-1, keepdims=True)
        p = jnp.exp(s)
        p = p * pl.reciprocal(jnp.sum(p, axis=-1, keepdims=True), approx=True)
        p = p.reshape(bblk, N, N).astype(jnp.bfloat16)

        # P @ V, batched over windows
        o_h = jnp.einsum('bnm,bmd->bnd', p, v,
                         preferred_element_type=jnp.float32)        # f32 (Bblk, N, hd)

        # accumulate this head's contribution to the output projection
        # (equivalent to concat-over-heads followed by y @ Wproj, without the concat)
        contrib = jnp.dot(o_h.reshape(T, head_dim).astype(jnp.bfloat16),
                          wproj_ref[h],
                          preferred_element_type=jnp.float32)       # f32 (T, C)
        y = contrib if y is None else y + contrib

    out = y + bproj_ref[0]                                          # f32 (T, C)
    # NOTE: out block last-dim is C (=32) so stores are masked; kept to avoid a risky
    # lane-merging reshape — the store volume is negligible vs. the batched matmuls.
    o_ref[...] = out.reshape(bblk, N, C).astype(o_ref.dtype)


def window_attention_pallas(x_bf16, wqkv_t, bqkv, wproj_heads, bproj, combined_bias,
                            nW, num_heads, head_dim, max_block_windows):
    """x_bf16: (B_, N, C) bf16; wqkv_t: (C, 3C) bf16; bqkv: (1, 3C) f32;
    wproj_heads: (H, hd, C) bf16; bproj: (1, C) f32; combined_bias: (nW, H, N, N) f32."""
    B_, N, C = x_bf16.shape
    assert B_ % nW == 0

    # Pick a block of windows: multiple of nW (so mask tiling is exact) that divides B_.
    reps_total = B_ // nW
    max_reps = max(1, max_block_windows // nW)
    rep = 1
    for d in range(1, reps_total + 1):
        if reps_total % d == 0 and d <= max_reps:
            rep = d
    bblk = rep * nW
    assert B_ % bblk == 0
    grid = (B_ // bblk,)

    kernel = functools.partial(_window_attention_kernel,
                               num_heads=num_heads, head_dim=head_dim,
                               nw=nW, bblk=bblk)

    grid_spec = pltpu.PrefetchScalarGridSpec(
        num_scalar_prefetch=0,
        grid=grid,
        in_specs=[
            pl.BlockSpec((bblk, N, C), lambda g: (g, 0, 0)),                    # x
            pl.BlockSpec((C, 3 * C), lambda g: (0, 0)),                         # wqkv_t
            pl.BlockSpec((1, 3 * C), lambda g: (0, 0)),                         # bqkv
            pl.BlockSpec((num_heads, head_dim, C), lambda g: (0, 0, 0)),        # wproj (per head)
            pl.BlockSpec((1, C), lambda g: (0, 0)),                             # bproj
            pl.BlockSpec((nW, num_heads, N, N), lambda g: (0, 0, 0, 0)),        # bias + mask
        ],
        out_specs=pl.BlockSpec((bblk, N, C), lambda g: (g, 0, 0)),
    )

    return pl.pallas_call(
        kernel,
        out_shape=jax.ShapeDtypeStruct((B_, N, C), jnp.float32),
        grid_spec=grid_spec,
        compiler_params=pltpu.CompilerParams(
            dimension_semantics=("parallel",),
            vmem_limit_bytes=32 * 1024 * 1024),
    )(x_bf16, wqkv_t, bqkv, wproj_heads, bproj, combined_bias)


# ------------------------- parameter / buffer setup --------------------------


def make_relative_position_index(window_size):
    Wh, Ww = window_size
    coords_h = np.arange(Wh)
    coords_w = np.arange(Ww)
    coords = np.stack(np.meshgrid(coords_h, coords_w, indexing="ij"))   # (2, Wh, Ww)
    coords_flatten = coords.reshape(2, -1)                              # (2, N)
    rel = coords_flatten[:, :, None] - coords_flatten[:, None, :]       # (2, N, N)
    rel = rel.transpose(1, 2, 0)                                        # (N, N, 2)
    rel[:, :, 0] += Wh - 1
    rel[:, :, 1] += Ww - 1
    rel[:, :, 0] *= 2 * Ww - 1
    return rel.sum(-1)                                                  # (N, N)


def init_params(key, dim, window_size, num_heads):
    Wh, Ww = window_size
    k1, k2, k3, k4, k5 = jax.random.split(key, 5)
    table_size = (2 * Wh - 1) * (2 * Ww - 1)
    rel_table = 0.02 * jax.random.truncated_normal(
        k1, -2.0, 2.0, (table_size, num_heads), dtype=jnp.float32)
    wqkv = 0.05 * jax.random.normal(k2, (3 * dim, dim), dtype=jnp.float32)   # (out, in)
    bqkv = 0.05 * jax.random.normal(k3, (3 * dim,), dtype=jnp.float32)
    wproj = 0.05 * jax.random.normal(k4, (dim, dim), dtype=jnp.float32)      # (out, in)
    bproj = 0.05 * jax.random.normal(k5, (dim,), dtype=jnp.float32)
    return rel_table, wqkv, bqkv, wproj, bproj


def window_attention_forward(x, params, window_size, num_heads, mask=None, qk_scale=None,
                             max_block_windows=128):
    """Glue: gathers the rel-pos bias, pre-combines it with the window mask, folds the
    qk scale into the Q projection, reshapes the proj weight per head, and calls the
    fused Pallas kernel with bf16 matmul operands."""
    rel_table, wqkv, bqkv, wproj, bproj = params
    B_, N, C = x.shape
    head_dim = C // num_heads
    scale = qk_scale if qk_scale is not None else head_dim ** (-0.5)

    # relative-position bias, (H, N, N)
    rpi = make_relative_position_index(window_size)
    rel_bias = rel_table[rpi.reshape(-1)].reshape(N, N, num_heads)
    rel_bias = jnp.transpose(rel_bias, (2, 0, 1)).astype(jnp.float32)

    # pre-combined additive (rel bias + mask), (nW, H, N, N)
    if mask is None:
        nW = 1
        combined = rel_bias[None]
    else:
        nW = mask.shape[0]
        combined = rel_bias[None, :, :, :] + mask.astype(jnp.float32)[:, None, :, :]

    # fold qk scale into the Q columns of the qkv projection
    wqkv_t = jnp.transpose(wqkv)                              # (C, 3C), cols = [q | k | v]
    col_scale = jnp.concatenate([jnp.full((C,), scale, jnp.float32),
                                 jnp.ones((2 * C,), jnp.float32)])
    wqkv_t = wqkv_t * col_scale[None, :]
    bqkv_s = (bqkv * col_scale).reshape(1, -1).astype(jnp.float32)

    # per-head slabs of the output projection weight, (H, hd, C)
    wproj_heads = jnp.transpose(wproj).reshape(num_heads, head_dim, C)

    return window_attention_pallas(
        x.astype(jnp.bfloat16),
        wqkv_t.astype(jnp.bfloat16),
        bqkv_s,
        wproj_heads.astype(jnp.bfloat16),
        bproj.reshape(1, -1).astype(jnp.float32),
        combined,
        nW, num_heads, head_dim, max_block_windows)


# --------------------------- pure-JAX reference -------------------------------


def window_attention_ref(x, params, window_size, num_heads, mask=None, qk_scale=None):
    rel_table, wqkv, bqkv, wproj, bproj = params
    B_, N, C = x.shape
    head_dim = C // num_heads
    scale = qk_scale if qk_scale is not None else head_dim ** (-0.5)

    qkv = x @ wqkv.T + bqkv
    qkv = qkv.reshape(B_, N, 3, num_heads, head_dim).transpose(2, 0, 3, 1, 4)
    q, k, v = qkv[0], qkv[1], qkv[2]
    q = q * scale
    attn = q @ jnp.swapaxes(k, -2, -1)                                  # (B_, H, N, N)

    rpi = make_relative_position_index(window_size)
    rel_bias = rel_table[rpi.reshape(-1)].reshape(N, N, num_heads)
    rel_bias = jnp.transpose(rel_bias, (2, 0, 1))
    attn = attn + rel_bias[None]

    if mask is not None:
        nW = mask.shape[0]
        attn = attn.reshape(B_ // nW, nW, num_heads, N, N) + mask[None, :, None]
        attn = attn.reshape(-1, num_heads, N, N)
    attn = jax.nn.softmax(attn, axis=-1)

    out = (attn @ v).transpose(0, 2, 1, 3).reshape(B_, N, C)
    return out @ wproj.T + bproj


# ---------------------------------- main --------------------------------------


if __name__ == "__main__":
    dim = 32
    window_size = (8, 8)
    num_heads = 4
    N = window_size[0] * window_size[1]   # 64
    batch = 4
    nW = 2
    B_ = batch * nW                       # 8

    key = jax.random.PRNGKey(0)
    kx, km, kp = jax.random.split(key, 3)

    x = jax.random.normal(kx, (B_, N, dim), dtype=jnp.float32)

    # shifted-window style 0/-100 additive mask, (nW, N, N)
    mask_bits = jax.random.bernoulli(km, 0.15, (nW, N, N))
    mask = jnp.where(mask_bits, -100.0, 0.0).astype(jnp.float32)

    params = init_params(kp, dim, window_size, num_heads)

    # masked path; small max_block_windows so the grid has >1 step (exercises pipelining
    # and the per-block mask tiling).
    out = window_attention_forward(x, params, window_size, num_heads, mask=mask,
                                   max_block_windows=4)
    out = jax.block_until_ready(out)
    ref = window_attention_ref(x, params, window_size, num_heads, mask=mask)
    ref = jax.block_until_ready(ref)

    # no-mask path with the default (large) window block
    out_nomask = jax.block_until_ready(
        window_attention_forward(x, params, window_size, num_heads, mask=None))
    ref_nomask = window_attention_ref(x, params, window_size, num_heads, mask=None)

    assert out.shape == (B_, N, dim)
    # bf16 matmul operands with f32 accumulation -> slightly looser tolerance than pure f32.
    np.testing.assert_allclose(np.asarray(out), np.asarray(ref), atol=2e-2, rtol=2e-2)
    np.testing.assert_allclose(np.asarray(out_nomask), np.asarray(ref_nomask),
                               atol=2e-2, rtol=2e-2)

    print("KERNEL_OK")
</pallas_src>

<mosaic_0001>
module attributes {stable_mosaic.version = 11 : i64} {
  func.func @_window_attention_kernel(%arg0: i32, %arg1: memref<4x64x32xbf16, #tpu.memory_space<vmem>>, %arg2: memref<32x96xbf16, #tpu.memory_space<vmem>>, %arg3: memref<1x96xf32, #tpu.memory_space<vmem>>, %arg4: memref<4x8x32xbf16, #tpu.memory_space<vmem>>, %arg5: memref<1x32xf32, #tpu.memory_space<vmem>>, %arg6: memref<2x4x64x64xf32, #tpu.memory_space<vmem>>, %arg7: memref<4x64x32xf32, #tpu.memory_space<vmem>>) attributes {dimension_semantics = [#tpu.dimension_semantics<parallel>], iteration_bounds = array<i64: 2>, scalar_prefetch = 0 : i64, scratch_operands = 0 : i64, tpu.core_type = #tpu.core_type<tc>, window_params = [{transform_indices = @transform_0, window_bounds = array<i64: 4, 64, 32>}, {pipeline_mode = #tpu.pipeline_mode<synchronous>, transform_indices = @transform_1, window_bounds = array<i64: 32, 96>}, {pipeline_mode = #tpu.pipeline_mode<synchronous>, transform_indices = @transform_2, window_bounds = array<i64: 1, 96>}, {pipeline_mode = #tpu.pipeline_mode<synchronous>, transform_indices = @transform_3, window_bounds = array<i64: 4, 8, 32>}, {pipeline_mode = #tpu.pipeline_mode<synchronous>, transform_indices = @transform_4, window_bounds = array<i64: 1, 32>}, {pipeline_mode = #tpu.pipeline_mode<synchronous>, transform_indices = @transform_5, window_bounds = array<i64: 2, 4, 64, 64>}, {transform_indices = @transform_6, window_bounds = array<i64: 4, 64, 32>}]} {
    %c0 = arith.constant 0 : index
    %c0_0 = arith.constant 0 : index
    %c0_1 = arith.constant 0 : index
    %0 = vector.load %arg1[%c0, %c0_0, %c0_1] : memref<4x64x32xbf16, #tpu.memory_space<vmem>>, vector<4x64x32xbf16>
    %1 = vector.shape_cast %0 : vector<4x64x32xbf16> to vector<256x32xbf16>
    %c0_2 = arith.constant 0 : index
    %c0_3 = arith.constant 0 : index
    %2 = vector.load %arg2[%c0_2, %c0_3] : memref<32x96xbf16, #tpu.memory_space<vmem>>, vector<32x96xbf16>
    %cst = arith.constant dense<0.000000e+00> : vector<256x96xf32>
    %3 = tpu.matmul %1, %2, %cst {dimension_numbers = #tpu.dot_dimension_numbers<[1], [0], [0], [1], [0, 0, 1, 1], [], []>} : vector<256x32xbf16>, vector<32x96xbf16>, vector<256x96xf32> -> vector<256x96xf32>
    %c0_4 = arith.constant 0 : index
    %c0_5 = arith.constant 0 : index
    %4 = vector.load %arg3[%c0_4, %c0_5] : memref<1x96xf32, #tpu.memory_space<vmem>>, vector<1x96xf32>
    %5 = vector.shape_cast %4 : vector<1x96xf32> to vector<96xf32>
    %6 = vector.shape_cast %5 : vector<96xf32> to vector<1x96xf32>
    %7 = vector.broadcast %6 : vector<1x96xf32> to vector<256x96xf32>
    %8 = arith.addf %3, %7 : vector<256x96xf32>
    %9 = vector.shape_cast %8 : vector<256x96xf32> to vector<4x64x96xf32>
    %c0_6 = arith.constant 0 : index
    %c0_7 = arith.constant 0 : index
    %c0_8 = arith.constant 0 : index
    %c0_9 = arith.constant 0 : index
    %10 = vector.load %arg6[%c0_6, %c0_7, %c0_8, %c0_9] : memref<2x4x64x64xf32, #tpu.memory_space<vmem>>, vector<2x4x64x64xf32>
    %11 = vector.extract_strided_slice %9 {offsets = [0, 0, 0], sizes = [4, 64, 8], strides = [1, 1, 1]} : vector<4x64x96xf32> to vector<4x64x8xf32>
    %12 = arith.truncf %11 : vector<4x64x8xf32> to vector<4x64x8xbf16>
    %13 = vector.extract_strided_slice %9 {offsets = [0, 0, 32], sizes = [4, 64, 8], strides = [1, 1, 1]} : vector<4x64x96xf32> to vector<4x64x8xf32>
    %14 = arith.truncf %13 : vector<4x64x8xf32> to vector<4x64x8xbf16>
    %15 = vector.extract_strided_slice %9 {offsets = [0, 0, 64], sizes = [4, 64, 8], strides = [1, 1, 1]} : vector<4x64x96xf32> to vector<4x64x8xf32>
    %16 = arith.truncf %15 : vector<4x64x8xf32> to vector<4x64x8xbf16>
    "tpu.trace_start"() <{level = 10 : i32, message = "bnd,bmd->bnm"}> : () -> ()
    %cst_10 = arith.constant dense<0.000000e+00> : vector<4x64x64xf32>
    %17 = tpu.matmul %12, %14, %cst_10 {dimension_numbers = #tpu.dot_dimension_numbers<[2], [2], [1], [1], [0, 0, 0, 1, 1, 1], [0], [0]>} : vector<4x64x8xbf16>, vector<4x64x8xbf16>, vector<4x64x64xf32> -> vector<4x64x64xf32>
    "tpu.trace_stop"() : () -> ()
    %18 = vector.shape_cast %17 : vector<4x64x64xf32> to vector<2x2x64x64xf32>
    %19 = vector.extract_strided_slice %10 {offsets = [0, 0, 0, 0], sizes = [2, 1, 64, 64], strides = [1, 1, 1, 1]} : vector<2x4x64x64xf32> to vector<2x1x64x64xf32>
    %20 = vector.shape_cast %19 : vector<2x1x64x64xf32> to vector<2x64x64xf32>
    %21 = vector.shape_cast %20 : vector<2x64x64xf32> to vector<1x2x64x64xf32>
    %22 = vector.broadcast %21 : vector<1x2x64x64xf32> to vector<2x2x64x64xf32>
    %23 = arith.addf %18, %22 : vector<2x2x64x64xf32>
    %cst_11 = arith.constant dense<0xFF800000> : vector<2x2x64xf32>
    %24 = vector.multi_reduction <maximumf>, %23, %cst_11 [3] : vector<2x2x64x64xf32> to vector<2x2x64xf32>
    %25 = vector.shape_cast %24 : vector<2x2x64xf32> to vector<2x2x64x1xf32>
    %26 = vector.broadcast %25 : vector<2x2x64x1xf32> to vector<2x2x64x64xf32>
    %27 = arith.subf %23, %26 : vector<2x2x64x64xf32>
    %28 = math.exp %27 : vector<2x2x64x64xf32>
    %cst_12 = arith.constant dense<0.000000e+00> : vector<2x2x64xf32>
    %29 = vector.multi_reduction <add>, %28, %cst_12 [3] : vector<2x2x64x64xf32> to vector<2x2x64xf32>
    %30 = vector.shape_cast %29 : vector<2x2x64xf32> to vector<2x2x64x1xf32>
    %31 = tpu.reciprocal %30 {approx = true} : vector<2x2x64x1xf32> -> vector<2x2x64x1xf32>
    %32 = vector.broadcast %31 : vector<2x2x64x1xf32> to vector<2x2x64x64xf32>
    %33 = arith.mulf %28, %32 : vector<2x2x64x64xf32>
    %34 = vector.shape_cast %33 : vector<2x2x64x64xf32> to vector<4x64x64xf32>
    %35 = arith.truncf %34 : vector<4x64x64xf32> to vector<4x64x64xbf16>
    "tpu.trace_start"() <{level = 10 : i32, message = "bnm,bmd->bnd"}> : () -> ()
    %cst_13 = arith.constant dense<0.000000e+00> : vector<4x64x8xf32>
    %36 = tpu.matmul %35, %16, %cst_13 {dimension_numbers = #tpu.dot_dimension_numbers<[2], [1], [1], [2], [0, 0, 0, 1, 1, 2], [0], [0]>} : vector<4x64x64xbf16>, vector<4x64x8xbf16>, vector<4x64x8xf32> -> vector<4x64x8xf32>
    "tpu.trace_stop"() : () -> ()
    %37 = vector.shape_cast %36 : vector<4x64x8xf32> to vector<256x8xf32>
    %38 = arith.truncf %37 : vector<256x8xf32> to vector<256x8xbf16>
    %c0_14 = arith.constant 0 : index
    %c0_15 = arith.constant 0 : index
    %c0_16 = arith.constant 0 : index
    %39 = vector.load %arg4[%c0_14, %c0_15, %c0_16] : memref<4x8x32xbf16, #tpu.memory_space<vmem>>, vector<1x8x32xbf16>
    %40 = vector.shape_cast %39 : vector<1x8x32xbf16> to vector<8x32xbf16>
    %cst_17 = arith.constant dense<0.000000e+00> : vector<256x32xf32>
    %41 = tpu.matmul %38, %40, %cst_17 {dimension_numbers = #tpu.dot_dimension_numbers<[1], [0], [0], [1], [0, 0, 1, 1], [], []>} : vector<256x8xbf16>, vector<8x32xbf16>, vector<256x32xf32> -> vector<256x32xf32>
    %42 = vector.extract_strided_slice %9 {offsets = [0, 0, 8], sizes = [4, 64, 8], strides = [1, 1, 1]} : vector<4x64x96xf32> to vector<4x64x8xf32>
    %43 = arith.truncf %42 : vector<4x64x8xf32> to vector<4x64x8xbf16>
    %44 = vector.extract_strided_slice %9 {offsets = [0, 0, 40], sizes = [4, 64, 8], strides = [1, 1, 1]} : vector<4x64x96xf32> to vector<4x64x8xf32>
    %45 = arith.truncf %44 : vector<4x64x8xf32> to vector<4x64x8xbf16>
    %46 = vector.extract_strided_slice %9 {offsets = [0, 0, 72], sizes = [4, 64, 8], strides = [1, 1, 1]} : vector<4x64x96xf32> to vector<4x64x8xf32>
    %47 = arith.truncf %46 : vector<4x64x8xf32> to vector<4x64x8xbf16>
    "tpu.trace_start"() <{level = 10 : i32, message = "bnd,bmd->bnm"}> : () -> ()
    %cst_18 = arith.constant dense<0.000000e+00> : vector<4x64x64xf32>
    %48 = tpu.matmul %43, %45, %cst_18 {dimension_numbers = #tpu.dot_dimension_numbers<[2], [2], [1], [1], [0, 0, 0, 1, 1, 1], [0], [0]>} : vector<4x64x8xbf16>, vector<4x64x8xbf16>, vector<4x64x64xf32> -> vector<4x64x64xf32>
    "tpu.trace_stop"() : () -> ()
    %49 = vector.shape_cast %48 : vector<4x64x64xf32> to vector<2x2x64x64xf32>
    %50 = vector.extract_strided_slice %10 {offsets = [0, 1, 0, 0], sizes = [2, 1, 64, 64], strides = [1, 1, 1, 1]} : vector<2x4x64x64xf32> to vector<2x1x64x64xf32>
    %51 = vector.shape_cast %50 : vector<2x1x64x64xf32> to vector<2x64x64xf32>
    %52 = vector.shape_cast %51 : vector<2x64x64xf32> to vector<1x2x64x64xf32>
    %53 = vector.broadcast %52 : vector<1x2x64x64xf32> to vector<2x2x64x64xf32>
    %54 = arith.addf %49, %53 : vector<2x2x64x64xf32>
    %cst_19 = arith.constant dense<0xFF800000> : vector<2x2x64xf32>
    %55 = vector.multi_reduction <maximumf>, %54, %cst_19 [3] : vector<2x2x64x64xf32> to vector<2x2x64xf32>
    %56 = vector.shape_cast %55 : vector<2x2x64xf32> to vector<2x2x64x1xf32>
    %57 = vector.broadcast %56 : vector<2x2x64x1xf32> to vector<2x2x64x64xf32>
    %58 = arith.subf %54, %57 : vector<2x2x64x64xf32>
    %59 = math.exp %58 : vector<2x2x64x64xf32>
    %cst_20 = arith.constant dense<0.000000e+00> : vector<2x2x64xf32>
    %60 = vector.multi_reduction <add>, %59, %cst_20 [3] : vector<2x2x64x64xf32> to vector<2x2x64xf32>
    %61 = vector.shape_cast %60 : vector<2x2x64xf32> to vector<2x2x64x1xf32>
    %62 = tpu.reciprocal %61 {approx = true} : vector<2x2x64x1xf32> -> vector<2x2x64x1xf32>
    %63 = vector.broadcast %62 : vector<2x2x64x1xf32> to vector<2x2x64x64xf32>
    %64 = arith.mulf %59, %63 : vector<2x2x64x64xf32>
    %65 = vector.shape_cast %64 : vector<2x2x64x64xf32> to vector<4x64x64xf32>
    %66 = arith.truncf %65 : vector<4x64x64xf32> to vector<4x64x64xbf16>
    "tpu.trace_start"() <{level = 10 : i32, message = "bnm,bmd->bnd"}> : () -> ()
    %cst_21 = arith.constant dense<0.000000e+00> : vector<4x64x8xf32>
    %67 = tpu.matmul %66, %47, %cst_21 {dimension_numbers = #tpu.dot_dimension_numbers<[2], [1], [1], [2], [0, 0, 0, 1, 1, 2], [0], [0]>} : vector<4x64x64xbf16>, vector<4x64x8xbf16>, vector<4x64x8xf32> -> vector<4x64x8xf32>
    "tpu.trace_stop"() : () -> ()
    %68 = vector.shape_cast %67 : vector<4x64x8xf32> to vector<256x8xf32>
    %69 = arith.truncf %68 : vector<256x8xf32> to vector<256x8xbf16>
    %c1 = arith.constant 1 : index
    %c0_22 = arith.constant 0 : index
    %c0_23 = arith.constant 0 : index
    %70 = vector.load %arg4[%c1, %c0_22, %c0_23] : memref<4x8x32xbf16, #tpu.memory_space<vmem>>, vector<1x8x32xbf16>
    %71 = vector.shape_cast %70 : vector<1x8x32xbf16> to vector<8x32xbf16>
    %cst_24 = arith.constant dense<0.000000e+00> : vector<256x32xf32>
    %72 = tpu.matmul %69, %71, %cst_24 {dimension_numbers = #tpu.dot_dimension_numbers<[1], [0], [0], [1], [0, 0, 1, 1], [], []>} : vector<256x8xbf16>, vector<8x32xbf16>, vector<256x32xf32> -> vector<256x32xf32>
    %73 = arith.addf %41, %72 : vector<256x32xf32>
    %74 = vector.extract_strided_slice %9 {offsets = [0, 0, 16], sizes = [4, 64, 8], strides = [1, 1, 1]} : vector<4x64x96xf32> to vector<4x64x8xf32>
    %75 = arith.truncf %74 : vector<4x64x8xf32> to vector<4x64x8xbf16>
    %76 = vector.extract_strided_slice %9 {offsets = [0, 0, 48], sizes = [4, 64, 8], strides = [1, 1, 1]} : vector<4x64x96xf32> to vector<4x64x8xf32>
    %77 = arith.truncf %76 : vector<4x64x8xf32> to vector<4x64x8xbf16>
    %78 = vector.extract_strided_slice %9 {offsets = [0, 0, 80], sizes = [4, 64, 8], strides = [1, 1, 1]} : vector<4x64x96xf32> to vector<4x64x8xf32>
    %79 = arith.truncf %78 : vector<4x64x8xf32> to vector<4x64x8xbf16>
    "tpu.trace_start"() <{level = 10 : i32, message = "bnd,bmd->bnm"}> : () -> ()
    %cst_25 = arith.constant dense<0.000000e+00> : vector<4x64x64xf32>
    %80 = tpu.matmul %75, %77, %cst_25 {dimension_numbers = #tpu.dot_dimension_numbers<[2], [2], [1], [1], [0, 0, 0, 1, 1, 1], [0], [0]>} : vector<4x64x8xbf16>, vector<4x64x8xbf16>, vector<4x64x64xf32> -> vector<4x64x64xf32>
    "tpu.trace_stop"() : () -> ()
    %81 = vector.shape_cast %80 : vector<4x64x64xf32> to vector<2x2x64x64xf32>
    %82 = vector.extract_strided_slice %10 {offsets = [0, 2, 0, 0], sizes = [2, 1, 64, 64], strides = [1, 1, 1, 1]} : vector<2x4x64x64xf32> to vector<2x1x64x64xf32>
    %83 = vector.shape_cast %82 : vector<2x1x64x64xf32> to vector<2x64x64xf32>
    %84 = vector.shape_cast %83 : vector<2x64x64xf32> to vector<1x2x64x64xf32>
    %85 = vector.broadcast %84 : vector<1x2x64x64xf32> to vector<2x2x64x64xf32>
    %86 = arith.addf %81, %85 : vector<2x2x64x64xf32>
    %cst_26 = arith.constant dense<0xFF800000> : vector<2x2x64xf32>
    %87 = vector.multi_reduction <maximumf>, %86, %cst_26 [3] : vector<2x2x64x64xf32> to vector<2x2x64xf32>
    %88 = vector.shape_cast %87 : vector<2x2x64xf32> to vector<2x2x64x1xf32>
    %89 = vector.broadcast %88 : vector<2x2x64x1xf32> to vector<2x2x64x64xf32>
    %90 = arith.subf %86, %89 : vector<2x2x64x64xf32>
    %91 = math.exp %90 : vector<2x2x64x64xf32>
    %cst_27 = arith.constant dense<0.000000e+00> : vector<2x2x64xf32>
    %92 = vector.multi_reduction <add>, %91, %cst_27 [3] : vector<2x2x64x64xf32> to vector<2x2x64xf32>
    %93 = vector.shape_cast %92 : vector<2x2x64xf32> to vector<2x2x64x1xf32>
    %94 = tpu.reciprocal %93 {approx = true} : vector<2x2x64x1xf32> -> vector<2x2x64x1xf32>
    %95 = vector.broadcast %94 : vector<2x2x64x1xf32> to vector<2x2x64x64xf32>
    %96 = arith.mulf %91, %95 : vector<2x2x64x64xf32>
    %97 = vector.shape_cast %96 : vector<2x2x64x64xf32> to vector<4x64x64xf32>
    %98 = arith.truncf %97 : vector<4x64x64xf32> to vector<4x64x64xbf16>
    "tpu.trace_start"() <{level = 10 : i32, message = "bnm,bmd->bnd"}> : () -> ()
    %cst_28 = arith.constant dense<0.000000e+00> : vector<4x64x8xf32>
    %99 = tpu.matmul %98, %79, %cst_28 {dimension_numbers = #tpu.dot_dimension_numbers<[2], [1], [1], [2], [0, 0, 0, 1, 1, 2], [0], [0]>} : vector<4x64x64xbf16>, vector<4x64x8xbf16>, vector<4x64x8xf32> -> vector<4x64x8xf32>
    "tpu.trace_stop"() : () -> ()
    %100 = vector.shape_cast %99 : vector<4x64x8xf32> to vector<256x8xf32>
    %101 = arith.truncf %100 : vector<256x8xf32> to vector<256x8xbf16>
    %c2 = arith.constant 2 : index
    %c0_29 = arith.constant 0 : index
    %c0_30 = arith.constant 0 : index
    %102 = vector.load %arg4[%c2, %c0_29, %c0_30] : memref<4x8x32xbf16, #tpu.memory_space<vmem>>, vector<1x8x32xbf16>
    %103 = vector.shape_cast %102 : vector<1x8x32xbf16> to vector<8x32xbf16>
    %cst_31 = arith.constant dense<0.000000e+00> : vector<256x32xf32>
    %104 = tpu.matmul %101, %103, %cst_31 {dimension_numbers = #tpu.dot_dimension_numbers<[1], [0], [0], [1], [0, 0, 1, 1], [], []>} : vector<256x8xbf16>, vector<8x32xbf16>, vector<256x32xf32> -> vector<256x32xf32>
    %105 = arith.addf %73, %104 : vector<256x32xf32>
    %106 = vector.extract_strided_slice %9 {offsets = [0, 0, 24], sizes = [4, 64, 8], strides = [1, 1, 1]} : vector<4x64x96xf32> to vector<4x64x8xf32>
    %107 = arith.truncf %106 : vector<4x64x8xf32> to vector<4x64x8xbf16>
    %108 = vector.extract_strided_slice %9 {offsets = [0, 0, 56], sizes = [4, 64, 8], strides = [1, 1, 1]} : vector<4x64x96xf32> to vector<4x64x8xf32>
    %109 = arith.truncf %108 : vector<4x64x8xf32> to vector<4x64x8xbf16>
    %110 = vector.extract_strided_slice %9 {offsets = [0, 0, 88], sizes = [4, 64, 8], strides = [1, 1, 1]} : vector<4x64x96xf32> to vector<4x64x8xf32>
    %111 = arith.truncf %110 : vector<4x64x8xf32> to vector<4x64x8xbf16>
    "tpu.trace_start"() <{level = 10 : i32, message = "bnd,bmd->bnm"}> : () -> ()
    %cst_32 = arith.constant dense<0.000000e+00> : vector<4x64x64xf32>
    %112 = tpu.matmul %107, %109, %cst_32 {dimension_numbers = #tpu.dot_dimension_numbers<[2], [2], [1], [1], [0, 0, 0, 1, 1, 1], [0], [0]>} : vector<4x64x8xbf16>, vector<4x64x8xbf16>, vector<4x64x64xf32> -> vector<4x64x64xf32>
    "tpu.trace_stop"() : () -> ()
    %113 = vector.shape_cast %112 : vector<4x64x64xf32> to vector<2x2x64x64xf32>
    %114 = vector.extract_strided_slice %10 {offsets = [0, 3, 0, 0], sizes = [2, 1, 64, 64], strides = [1, 1, 1, 1]} : vector<2x4x64x64xf32> to vector<2x1x64x64xf32>
    %115 = vector.shape_cast %114 : vector<2x1x64x64xf32> to vector<2x64x64xf32>
    %116 = vector.shape_cast %115 : vector<2x64x64xf32> to vector<1x2x64x64xf32>
    %117 = vector.broadcast %116 : vector<1x2x64x64xf32> to vector<2x2x64x64xf32>
    %118 = arith.addf %113, %117 : vector<2x2x64x64xf32>
    %cst_33 = arith.constant dense<0xFF800000> : vector<2x2x64xf32>
    %119 = vector.multi_reduction <maximumf>, %118, %cst_33 [3] : vector<2x2x64x64xf32> to vector<2x2x64xf32>
    %120 = vector.shape_cast %119 : vector<2x2x64xf32> to vector<2x2x64x1xf32>
    %121 = vector.broadcast %120 : vector<2x2x64x1xf32> to vector<2x2x64x64xf32>
    %122 = arith.subf %118, %121 : vector<2x2x64x64xf32>
    %123 = math.exp %122 : vector<2x2x64x64xf32>
    %cst_34 = arith.constant dense<0.000000e+00> : vector<2x2x64xf32>
    %124 = vector.multi_reduction <add>, %123, %cst_34 [3] : vector<2x2x64x64xf32> to vector<2x2x64xf32>
    %125 = vector.shape_cast %124 : vector<2x2x64xf32> to vector<2x2x64x1xf32>
    %126 = tpu.reciprocal %125 {approx = true} : vector<2x2x64x1xf32> -> vector<2x2x64x1xf32>
    %127 = vector.broadcast %126 : vector<2x2x64x1xf32> to vector<2x2x64x64xf32>
    %128 = arith.mulf %123, %127 : vector<2x2x64x64xf32>
    %129 = vector.shape_cast %128 : vector<2x2x64x64xf32> to vector<4x64x64xf32>
    %130 = arith.truncf %129 : vector<4x64x64xf32> to vector<4x64x64xbf16>
    "tpu.trace_start"() <{level = 10 : i32, message = "bnm,bmd->bnd"}> : () -> ()
    %cst_35 = arith.constant dense<0.000000e+00> : vector<4x64x8xf32>
    %131 = tpu.matmul %130, %111, %cst_35 {dimension_numbers = #tpu.dot_dimension_numbers<[2], [1], [1], [2], [0, 0, 0, 1, 1, 2], [0], [0]>} : vector<4x64x64xbf16>, vector<4x64x8xbf16>, vector<4x64x8xf32> -> vector<4x64x8xf32>
    "tpu.trace_stop"() : () -> ()
    %132 = vector.shape_cast %131 : vector<4x64x8xf32> to vector<256x8xf32>
    %133 = arith.truncf %132 : vector<256x8xf32> to vector<256x8xbf16>
    %c3 = arith.constant 3 : index
    %c0_36 = arith.constant 0 : index
    %c0_37 = arith.constant 0 : index
    %134 = vector.load %arg4[%c3, %c0_36, %c0_37] : memref<4x8x32xbf16, #tpu.memory_space<vmem>>, vector<1x8x32xbf16>
    %135 = vector.shape_cast %134 : vector<1x8x32xbf16> to vector<8x32xbf16>
    %cst_38 = arith.constant dense<0.000000e+00> : vector<256x32xf32>
    %136 = tpu.matmul %133, %135, %cst_38 {dimension_numbers = #tpu.dot_dimension_numbers<[1], [0], [0], [1], [0, 0, 1, 1], [], []>} : vector<256x8xbf16>, vector<8x32xbf16>, vector<256x32xf32> -> vector<256x32xf32>
    %137 = arith.addf %105, %136 : vector<256x32xf32>
    %c0_39 = arith.constant 0 : index
    %c0_40 = arith.constant 0 : index
    %138 = vector.load %arg5[%c0_39, %c0_40] : memref<1x32xf32, #tpu.memory_space<vmem>>, vector<1x32xf32>
    %139 = vector.shape_cast %138 : vector<1x32xf32> to vector<32xf32>
    %140 = vector.shape_cast %139 : vector<32xf32> to vector<1x32xf32>
    %141 = vector.broadcast %140 : vector<1x32xf32> to vector<256x32xf32>
    %142 = arith.addf %137, %141 : vector<256x32xf32>
    %143 = vector.shape_cast %142 : vector<256x32xf32> to vector<4x64x32xf32>
    %c0_41 = arith.constant 0 : index
    %c0_42 = arith.constant 0 : index
    %c0_43 = arith.constant 0 : index
    %144 = vector.load %arg7[%c0_41, %c0_42, %c0_43] : memref<4x64x32xf32, #tpu.memory_space<vmem>>, vector<4x64x32xf32>
    tpu.vector_store %arg7[%c0_41, %c0_42, %c0_43], %143 {strides = array<i32>} : memref<4x64x32xf32, #tpu.memory_space<vmem>>, vector<4x64x32xf32>,
    return
  }
  func.func @transform_0(%arg0: i32) -> (i32, i32, i32) {
    %c0_i32 = arith.constant 0 : i32
    %c0_i32_0 = arith.constant 0 : i32
    %c0_i32_1 = arith.constant 0 : i32
    return %arg0, %c0_i32, %c0_i32_0 : i32, i32, i32
  }
  func.func @transform_1(%arg0: i32) -> (i32, i32) {
    %c0_i32 = arith.constant 0 : i32
    %c0_i32_0 = arith.constant 0 : i32
    %c0_i32_1 = arith.constant 0 : i32
    return %c0_i32, %c0_i32_0 : i32, i32
  }
  func.func @transform_2(%arg0: i32) -> (i32, i32) {
    %c0_i32 = arith.constant 0 : i32
    %c0_i32_0 = arith.constant 0 : i32
    %c0_i32_1 = arith.constant 0 : i32
    return %c0_i32, %c0_i32_0 : i32, i32
  }
  func.func @transform_3(%arg0: i32) -> (i32, i32, i32) {
    %c0_i32 = arith.constant 0 : i32
    %c0_i32_0 = arith.constant 0 : i32
    %c0_i32_1 = arith.constant 0 : i32
    %c0_i32_2 = arith.constant 0 : i32
    return %c0_i32, %c0_i32_0, %c0_i32_1 : i32, i32, i32
  }
  func.func @transform_4(%arg0: i32) -> (i32, i32) {
    %c0_i32 = arith.constant 0 : i32
    %c0_i32_0 = arith.constant 0 : i32
    %c0_i32_1 = arith.constant 0 : i32
    return %c0_i32, %c0_i32_0 : i32, i32
  }
  func.func @transform_5(%arg0: i32) -> (i32, i32, i32, i32) {
    %c0_i32 = arith.constant 0 : i32
    %c0_i32_0 = arith.constant 0 : i32
    %c0_i32_1 = arith.constant 0 : i32
    %c0_i32_2 = arith.constant 0 : i32
    %c0_i32_3 = arith.constant 0 : i32
    return %c0_i32, %c0_i32_0, %c0_i32_1, %c0_i32_2 : i32, i32, i32, i32
  }
  func.func @transform_6(%arg0: i32) -> (i32, i32, i32) {
    %c0_i32 = arith.constant 0 : i32
    %c0_i32_0 = arith.constant 0 : i32
    %c0_i32_1 = arith.constant 0 : i32
    return %arg0, %c0_i32, %c0_i32_0 : i32, i32, i32
  }
}

</mosaic_0001>

<llo_original>
// kernel: tpu_custom_call.1
$region0: #{tpu_custom_call.1}
  #allocation0 [shape = 'u32[]', space=smem, size = 0x4, offset = 0x4, fixed_abs, tag = 'smem constant byte address 0x4 - core index']
  #allocation1 [shape = 'u32[144,128]{1,0:T(1,128)}', space=vmem, size = 0x12000, scoped, tag = 'internal scratch']
  %s0 = inlined_call_operand.vmem [shape: bf16[8,64,32], index: 0, kind: input, shape index: {}]
  %s1 = inlined_call_operand.vmem [shape: bf16[32,96], index: 1, kind: input, shape index: {}]
  %s2 = inlined_call_operand.vmem [shape: f32[1,96], index: 2, kind: input, shape index: {}]
  %s3 = inlined_call_operand.vmem [shape: bf16[4,8,32], index: 3, kind: input, shape index: {}]
  %s4 = inlined_call_operand.vmem [shape: f32[1,32], index: 4, kind: input, shape index: {}]
  %s5 = inlined_call_operand.hbm [shape: f32[2,4,64,64], index: 5, kind: input, shape index: {}]
  %s6 = inlined_call_operand.vmem [shape: f32[8,64,32], index: 6, kind: output, shape index: {}]
  %s7 = sld [smem:[#allocation0]]
  $region61: #{tpu_custom_call.1} parent=0
    _
  %s9 = ssub.s32 1, %s7
  %s10 = scalar_select 0, %s9, %s7
  $region1: #{tpu_custom_call.1} parent=0
    #allocation2 [shape = 'u8[262144]{0}', space=vmem, size = 0x40000, scoped, tag = 'input window, operand 5, single buffered']
    #allocation3 [shape = 's32[2]{0}', space=sflag, size = 0x8, scoped, tag = 'scoped memory for tpu_custom_call.1']
    %11 = vsyncpa [#allocation3], 0
    loop: start=0, step=1, limit=4
    $region2: #{tpu_custom_call.1} parent=1 // loop_pre_header
      _
    $region3: #{tpu_custom_call.1} parent=1 // loop_header
      %s13 = sphi 0, %s17
      %p14 = scmp.ge.s32.totalorder %s13, 4
      %s23 = sphi 0, %s25
      %s26 = sphi 0, %s23
      %s27 = sphi 0, %s26
      %s43 = sphi 0, %s27
      %s47 = sphi 0, %s47
      %s49 = sphi 0, %s47
      %s50 = sphi 0, %s49
      %s64 = sphi 0, %s50
      %s68 = sphi 0, %s68
      %s70 = sphi 0, %s68
      %s71 = sphi 0, %s70
      %s85 = sphi 0, %s71
      %s89 = sphi 0, %s89
      %s91 = sphi 0, %s89
      %s92 = sphi 0, %s91
      %s106 = sphi 0, %s92
      %s110 = sphi 0, %s110
      %s112 = sphi 0, %s110
      %s113 = sphi 0, %s112
      %s127 = sphi 0, %s113
      %s131 = sphi 0, %s131
      %s133 = sphi 0, %s131
      %s134 = sphi 0, %s133
      %s148 = sphi 0, %s134
      %s154 = sphi 0, %s156
      %s157 = sphi 0, %s154
      %s158 = sphi 0, %s157
      %s174 = sphi 0, %s158
    $region4: #{tpu_custom_call.1} parent=1 // loop_header_branch
      %16 = sbr.rel (%p14) target = $region8
    $region5: #{tpu_custom_call.1} parent=1 // loop_body
      %s18 = ssub.s32 %s13, 1
      %s19 = ssub.s32 %s13, 2
      %s20 = sadd.s32 %s13, 1
      %s21 = ssub.s32 %s13, %s20
      %p22 = scmp.eq.s32.totalorder %s21, 0
      %s24 = sadd.s32 %s23, 1
      %s25 = scalar_select %p22, %s23, %s24
      %p28 = pneg %p22
      %p29 = scmp.eq.s32.totalorder %s13, 1
      %p30 = por %p28, %p29
      %p31 = scmp.ne.s32.totalorder %s23, %s26
      %p32 = scmp.eq.s32.totalorder %s13, 0
      %p33 = por %p31, %p32
      %p34 = scmp.ne.s32.totalorder %s23, %s26
      %p35 = scmp.eq.s32.totalorder %s18, 1
      %p36 = por %p34, %p35
      %p37 = scmp.ne.s32.totalorder %s26, %s27
      %p38 = scmp.eq.s32.totalorder %s18, 0
      %p39 = por %p37, %p38
      %p40 = scmp.ne.s32.totalorder %s26, %s27
      %p41 = scmp.eq.s32.totalorder %s19, 1
      %p42 = por %p40, %p41
      %p44 = scmp.ne.s32.totalorder %s27, %s43
      %p45 = scmp.eq.s32.totalorder %s19, 0
      %p46 = por %p44, %p45
      %s48 = sadd.s32 %s47, 1
      %p51 = scmp.eq.s32.totalorder %s13, 1
      %p52 = scmp.ne.s32.totalorder %s47, %s49
      %p53 = scmp.eq.s32.totalorder %s13, 0
      %p54 = por %p52, %p53
      %p55 = scmp.ne.s32.totalorder %s47, %s49
      %p56 = scmp.eq.s32.totalorder %s18, 1
      %p57 = por %p55, %p56
      %p58 = scmp.ne.s32.totalorder %s49, %s50
      %p59 = scmp.eq.s32.totalorder %s18, 0
      %p60 = por %p58, %p59
      %p61 = scmp.ne.s32.totalorder %s49, %s50
      %p62 = scmp.eq.s32.totalorder %s19, 1
      %p63 = por %p61, %p62
      %p65 = scmp.ne.s32.totalorder %s50, %s64
      %p66 = scmp.eq.s32.totalorder %s19, 0
      %p67 = por %p65, %p66
      %s69 = sadd.s32 %s68, 1
      %p72 = scmp.eq.s32.totalorder %s13, 1
      %p73 = scmp.ne.s32.totalorder %s68, %s70
      %p74 = scmp.eq.s32.totalorder %s13, 0
      %p75 = por %p73, %p74
      %p76 = scmp.ne.s32.totalorder %s68, %s70
      %p77 = scmp.eq.s32.totalorder %s18, 1
      %p78 = por %p76, %p77
      %p79 = scmp.ne.s32.totalorder %s70, %s71
      %p80 = scmp.eq.s32.totalorder %s18, 0
      %p81 = por %p79, %p80
      %p82 = scmp.ne.s32.totalorder %s70, %s71
      %p83 = scmp.eq.s32.totalorder %s19, 1
      %p84 = por %p82, %p83
      %p86 = scmp.ne.s32.totalorder %s71, %s85
      %p87 = scmp.eq.s32.totalorder %s19, 0
      %p88 = por %p86, %p87
      %s90 = sadd.s32 %s89, 1
      %p93 = scmp.eq.s32.totalorder %s13, 1
      %p94 = scmp.ne.s32.totalorder %s89, %s91
      %p95 = scmp.eq.s32.totalorder %s13, 0
      %p96 = por %p94, %p95
      %p97 = scmp.ne.s32.totalorder %s89, %s91
      %p98 = scmp.eq.s32.totalorder %s18, 1
      %p99 = por %p97, %p98
      %p100 = scmp.ne.s32.totalorder %s91, %s92
      %p101 = scmp.eq.s32.totalorder %s18, 0
      %p102 = por %p100, %p101
      %p103 = scmp.ne.s32.totalorder %s91, %s92
      %p104 = scmp.eq.s32.totalorder %s19, 1
      %p105 = por %p103, %p104
      %p107 = scmp.ne.s32.totalorder %s92, %s106
      %p108 = scmp.eq.s32.totalorder %s19, 0
      %p109 = por %p107, %p108
      %s111 = sadd.s32 %s110, 1
      %p114 = scmp.eq.s32.totalorder %s13, 1
      %p115 = scmp.ne.s32.totalorder %s110, %s112
      %p116 = scmp.eq.s32.totalorder %s13, 0
      %p117 = por %p115, %p116
      %p118 = scmp.ne.s32.totalorder %s110, %s112
      %p119 = scmp.eq.s32.totalorder %s18, 1
      %p120 = por %p118, %p119
      %p121 = scmp.ne.s32.totalorder %s112, %s113
      %p122 = scmp.eq.s32.totalorder %s18, 0
      %p123 = por %p121, %p122
      %p124 = scmp.ne.s32.totalorder %s112, %s113
      %p125 = scmp.eq.s32.totalorder %s19, 1
      %p126 = por %p124, %p125
      %p128 = scmp.ne.s32.totalorder %s113, %s127
      %p129 = scmp.eq.s32.totalorder %s19, 0
      %p130 = por %p128, %p129
      %s132 = sadd.s32 %s131, 1
      %p135 = scmp.eq.s32.totalorder %s13, 1
      %p136 = scmp.ne.s32.totalorder %s131, %s133
      %p137 = scmp.eq.s32.totalorder %s13, 0
      %p138 = por %p136, %p137
      %p139 = scmp.ne.s32.totalorder %s131, %s133
      %p140 = scmp.eq.s32.totalorder %s18, 1
      %p141 = por %p139, %p140
      %p142 = scmp.ne.s32.totalorder %s133, %s134
      %p143 = scmp.eq.s32.totalorder %s18, 0
      %p144 = por %p142, %p143
      %p145 = scmp.ne.s32.totalorder %s133, %s134
      %p146 = scmp.eq.s32.totalorder %s19, 1
      %p147 = por %p145, %p146
      %p149 = scmp.ne.s32.totalorder %s134, %s148
      %p150 = scmp.eq.s32.totalorder %s19, 0
      %p151 = por %p149, %p150
      %s152 = ssub.s32 %s13, %s20
      %p153 = scmp.eq.s32.totalorder %s152, 0
      %s155 = sadd.s32 %s154, 1
      %s156 = scalar_select %p153, %s154, %s155
      %p159 = pneg %p153
      %p160 = scmp.eq.s32.totalorder %s13, 1
      %p161 = por %p159, %p160
      %p162 = scmp.ne.s32.totalorder %s154, %s157
      %p163 = scmp.eq.s32.totalorder %s13, 0
      %p164 = por %p162, %p163
      %p165 = scmp.ne.s32.totalorder %s154, %s157
      %p166 = scmp.eq.s32.totalorder %s18, 1
      %p167 = por %p165, %p166
      %p168 = scmp.ne.s32.totalorder %s157, %s158
      %p169 = scmp.eq.s32.totalorder %s18, 0
      %p170 = por %p168, %p169
      %p171 = scmp.ne.s32.totalorder %s157, %s158
      %p172 = scmp.eq.s32.totalorder %s19, 1
      %p173 = por %p171, %p172
      %p175 = scmp.ne.s32.totalorder %s158, %s174
      %p176 = scmp.eq.s32.totalorder %s19, 0
      %p177 = por %p175, %p176
      %p178 = scmp.le.s32.totalorder 1, %s13
      %p179 = scmp.lt.s32.totalorder %s13, 3
      %p180 = pnand %p178, %p179
      %p181 = pneg %p180
      // Predicated region
      $region9: #{tpu_custom_call.1} parent=5 // pred_check
        _
      $region10: #{tpu_custom_call.1} parent=5 // pred_check_branch
        %183 = sbr.rel (%p180) target = $region12
      $region11: #{tpu_custom_call.1} parent=5 // pred_region
        %s184 = ssub.s32 %s13, 1
        // Predicated region
        $region13: #{tpu_custom_call.1} parent=11 // pred_check
          %p185 = pneg %p60
        $region14: #{tpu_custom_call.1} parent=11 // pred_check_branch
          %187 = sbr.rel (%p185) target = $region16
        $region15: #{tpu_custom_call.1} parent=11 // pred_region
          _
        $region16: #{tpu_custom_call.1} parent=11 // pred_fallthru
          _
        // Predicated region
        $region17: #{tpu_custom_call.1} parent=11 // pred_check
          %p188 = pneg %p81
        $region18: #{tpu_custom_call.1} parent=11 // pred_check_branch
          %190 = sbr.rel (%p188) target = $region20
        $region19: #{tpu_custom_call.1} parent=11 // pred_region
          _
        $region20: #{tpu_custom_call.1} parent=11 // pred_fallthru
          _
        // Predicated region
        $region21: #{tpu_custom_call.1} parent=11 // pred_check
          %p191 = pneg %p102
        $region22: #{tpu_custom_call.1} parent=11 // pred_check_branch
          %193 = sbr.rel (%p191) target = $region24
        $region23: #{tpu_custom_call.1} parent=11 // pred_region
          _
        $region24: #{tpu_custom_call.1} parent=11 // pred_fallthru
          _
        // Predicated region
        $region25: #{tpu_custom_call.1} parent=11 // pred_check
          %p194 = pneg %p123
        $region26: #{tpu_custom_call.1} parent=11 // pred_check_branch
          %196 = sbr.rel (%p194) target = $region28
        $region27: #{tpu_custom_call.1} parent=11 // pred_region
          _
        $region28: #{tpu_custom_call.1} parent=11 // pred_fallthru
          _
        // Predicated region
        $region29: #{tpu_custom_call.1} parent=11 // pred_check
          %p197 = pneg %p144
        $region30: #{tpu_custom_call.1} parent=11 // pred_check_branch
          %199 = sbr.rel (%p197) target = $region32
        $region31: #{tpu_custom_call.1} parent=11 // pred_region
          %s201 = ssub.s32 8192, 8192
          %202 = vsyncadd [#allocation3], %s201
          %s203 = sshll.u32 [#allocation2], 4
          %s204 = int_to_ptr.vmem [resolvable:$true] %s203
          %209 = dma.hbm_to_vmem [thread:$0]  %s5, 8192, %s204, [#allocation3], 128, 128, 8
        $region32: #{tpu_custom_call.1} parent=11 // pred_fallthru
          _
      $region12: #{tpu_custom_call.1} parent=5 // pred_fallthru
        _
      %p210 = scmp.lt.s32.totalorder %s13, 2
      // Predicated region
      $region33: #{tpu_custom_call.1} parent=5 // pred_check
        %p211 = pneg %p210
      $region34: #{tpu_custom_call.1} parent=5 // pred_check_branch
        %213 = sbr.rel (%p211) target = $region36
      $region35: #{tpu_custom_call.1} parent=5 // pred_region
        // Predicated region
        $region37: #{tpu_custom_call.1} parent=35 // pred_check
          %p214 = pneg %p33
        $region38: #{tpu_custom_call.1} parent=35 // pred_check_branch
          %216 = sbr.rel (%p214) target = $region40
        $region39: #{tpu_custom_call.1} parent=35 // pred_region
          %s217 = smul.u32 4, %s13
          %p218 = scmp.lt.s32.totalorder %s217, 7
          %s219 = scalar_select %p218, %s217, 7
          %s220 = smul.addr %s219, 8
          %s221 = smul.addr %s220, 4
          %s222 = scalar_lea.vmem %s0, %s221
          %s223 = smul.u32 4, %s13
        $region40: #{tpu_custom_call.1} parent=35 // pred_fallthru
          _
      $region36: #{tpu_custom_call.1} parent=5 // pred_fallthru
        _
      %p224 = scmp.le.s32.totalorder 1, %s13
      %p225 = scmp.lt.s32.totalorder %s13, 3
      %p226 = pnand %p224, %p225
      %p227 = pneg %p226
      // Predicated region
      $region41: #{tpu_custom_call.1} parent=5 // pred_check
        _
      $region42: #{tpu_custom_call.1} parent=5 // pred_check_branch
        %229 = sbr.rel (%p226) target = $region44
      $region43: #{tpu_custom_call.1} parent=5 // pred_region
        %s230 = ssub.s32 %s13, 1
        // Predicated region
        $region45: #{tpu_custom_call.1} parent=43 // pred_check
          %p231 = pneg %p144
        $region46: #{tpu_custom_call.1} parent=43 // pred_check_branch
          %233 = sbr.rel (%p231) target = $region48
        $region47: #{tpu_custom_call.1} parent=43 // pred_region
          %234 = dma.done [#allocation3], 8192
        $region48: #{tpu_custom_call.1} parent=43 // pred_fallthru
          _
        %s235 = smul.u32 4, %s18
        %p236 = scmp.lt.s32.totalorder %s235, 7
        %s237 = scalar_select %p236, %s235, 7
        %s238 = smul.addr %s237, 8
        %s239 = smul.addr %s238, 4
        %s240 = scalar_lea.vmem %s0, %s239
        %p241 = pneg %p39
        %p242 = pneg %p36
        %p243 = pneg %p60
        %p244 = pneg %p57
        %p245 = pneg %p81
        %p246 = pneg %p78
        %p247 = pneg %p102
        %p248 = pneg %p99
        %p249 = pneg %p123
        %p250 = pneg %p120
        %p251 = pneg %p144
        %p252 = pneg %p141
        %p253 = pneg %p170
        %p254 = pneg %p167
        %s255 = smul.u32 4, %s18
        %p256 = scmp.lt.s32.totalorder %s255, 7
        %s257 = scalar_select %p256, %s255, 7
        %s258 = smul.addr %s257, 8
        %s259 = smul.addr %s258, 8
        %s260 = scalar_lea.vmem %s6, %s259
        %s261 = smul.u32 4, %s18
        %p262 = scmp.lt.s32.totalorder %s261, 7
        %s263 = scalar_select %p262, %s261, 7
        %s264 = smul.addr %s263, 8
        %s265 = smul.addr %s264, 4
        %s266 = scalar_lea.vmem %s0, %s265
        %s267 = smul.u32 4, %s18
        %s268 = smul.u32 4, %s18
        %p269 = scmp.lt.s32.totalorder %s268, 7
        %s270 = scalar_select %p269, %s268, 7
        %s271 = smul.addr %s270, 8
        %s272 = smul.addr %s271, 8
        %s273 = scalar_lea.vmem %s6, %s272
        %s274 = smul.u32 4, %s18
        %v276 = vld [vmem:[%s266] sm:$0xf]
        %v277 = vld [vmem:[%s266 + $0x4] sm:$0xf]
        %v278 = vld [vmem:[%s266 + $0x8] sm:$0xf]
        %v279 = vld [vmem:[%s266 + $0xc] sm:$0xf]
        %v280 = vld [vmem:[%s266 + $0x10] sm:$0xf]
        %v281 = vld [vmem:[%s266 + $0x14] sm:$0xf]
        %v282 = vld [vmem:[%s266 + $0x18] sm:$0xf]
        %v283 = vld [vmem:[%s266 + $0x1c] sm:$0xf]
        %v284 = vld [vmem:[%s266 + $0x20] sm:$0xf]
        %v285 = vld [vmem:[%s266 + $0x24] sm:$0xf]
        %v286 = vld [vmem:[%s266 + $0x28] sm:$0xf]
        %v287 = vld [vmem:[%s266 + $0x2c] sm:$0xf]
        %v288 = vld [vmem:[%s266 + $0x30] sm:$0xf]
        %v289 = vld [vmem:[%s266 + $0x34] sm:$0xf]
        %v290 = vld [vmem:[%s266 + $0x38] sm:$0xf]
        %v291 = vld [vmem:[%s266 + $0x3c] sm:$0xf]
        %v292 = vld [vmem:[%s266 + $0x40] sm:$0xf]
        %v293 = vld [vmem:[%s266 + $0x44] sm:$0xf]
        %v294 = vld [vmem:[%s266 + $0x48] sm:$0xf]
        %v295 = vld [vmem:[%s266 + $0x4c] sm:$0xf]
        %v296 = vld [vmem:[%s266 + $0x50] sm:$0xf]
        %v297 = vld [vmem:[%s266 + $0x54] sm:$0xf]
        %v298 = vld [vmem:[%s266 + $0x58] sm:$0xf]
        %v299 = vld [vmem:[%s266 + $0x5c] sm:$0xf]
        %v300 = vld [vmem:[%s266 + $0x60] sm:$0xf]
        %v301 = vld [vmem:[%s266 + $0x64] sm:$0xf]
        %v302 = vld [vmem:[%s266 + $0x68] sm:$0xf]
        %v303 = vld [vmem:[%s266 + $0x6c] sm:$0xf]
        %v304 = vld [vmem:[%s266 + $0x70] sm:$0xf]
        %v305 = vld [vmem:[%s266 + $0x74] sm:$0xf]
        %v306 = vld [vmem:[%s266 + $0x78] sm:$0xf]
        %v307 = vld [vmem:[%s266 + $0x7c] sm:$0xf]
        %v308 = vld [vmem:[%s1] sm:$0xf]
        %v309 = vld [vmem:[%s1 + $0x4] sm:$0xf]
        %v310 = vld [vmem:[%s1 + $0x8] sm:$0xf]
        %v311 = vld [vmem:[%s1 + $0xc] sm:$0xf]
        %v312 = vld [vmem:[%s2] sm:$0x1]
        %v314 = vlaneseq
        %v315 = vshrl.u32 %v314, 7
        %v316 = vsub.s32 0, %v315
        %v317 = vrot.slane %v312, %v316
        %v351 = vunpack.c.l.b16 %v276
        %v352 = vunpack.c.l.b16 %v277
        %v353 = vunpack.c.l.b16 %v278
        %v354 = vunpack.c.l.b16 %v279
        %v355 = vunpack.c.l.b16 %v280
        %v356 = vunpack.c.l.b16 %v281
        %v357 = vunpack.c.l.b16 %v282
        %v358 = vunpack.c.l.b16 %v283
        %v359 = vunpack.c.l.b16 %v284
        %v360 = vunpack.c.l.b16 %v285
        %v361 = vunpack.c.l.b16 %v286
        %v362 = vunpack.c.l.b16 %v287
        %v363 = vunpack.c.l.b16 %v288
        %v364 = vunpack.c.l.b16 %v289
        %v365 = vunpack.c.l.b16 %v290
        %v366 = vunpack.c.l.b16 %v291
        %v367 = vunpack.c.l.b16 %v292
        %v368 = vunpack.c.l.b16 %v293
        %v369 = vunpack.c.l.b16 %v294
        %v370 = vunpack.c.l.b16 %v295
        %v371 = vunpack.c.l.b16 %v296
        %v372 = vunpack.c.l.b16 %v297
        %v373 = vunpack.c.l.b16 %v298
        %v374 = vunpack.c.l.b16 %v299
        %v375 = vunpack.c.l.b16 %v300
        %v376 = vunpack.c.l.b16 %v301
        %v377 = vunpack.c.l.b16 %v302
        %v378 = vunpack.c.l.b16 %v303
        %v379 = vunpack.c.l.b16 %v304
        %v380 = vunpack.c.l.b16 %v305
        %v381 = vunpack.c.l.b16 %v306
        %v382 = vunpack.c.l.b16 %v307
        %v383 = vpack.c.b16 %v352, %v351
        %v384 = vpack.c.b16 %v354, %v353
        %v385 = vpack.c.b16 %v356, %v355
        %v386 = vpack.c.b16 %v358, %v357
        %v387 = vpack.c.b16 %v360, %v359
        %v388 = vpack.c.b16 %v362, %v361
        %v389 = vpack.c.b16 %v364, %v363
        %v390 = vpack.c.b16 %v366, %v365
        %v391 = vpack.c.b16 %v368, %v367
        %v392 = vpack.c.b16 %v370, %v369
        %v393 = vpack.c.b16 %v372, %v371
        %v394 = vpack.c.b16 %v374, %v373
        %v395 = vpack.c.b16 %v376, %v375
        %v396 = vpack.c.b16 %v378, %v377
        %v397 = vpack.c.b16 %v380, %v379
        %v398 = vpack.c.b16 %v382, %v381
        %v403 = vunpack.c.l.b16 %v308
        %v404 = vunpack.c.l.b16 %v309
        %v405 = vunpack.c.l.b16 %v310
        %v406 = vunpack.c.l.b16 %v311
        %v407 = vpack.c.b16 %v404, %v403
        %v408 = vpack.c.b16 %v406, %v405
        %vm411 = vcmask 261120
        %v413 = vsel %vm411, %v383, 0
        %v416 = vsel %vm411, %v384, 0
        %v419 = vsel %vm411, %v385, 0
        %v422 = vsel %vm411, %v386, 0
        %v425 = vsel %vm411, %v387, 0
        %v428 = vsel %vm411, %v388, 0
        %v431 = vsel %vm411, %v389, 0
        %v434 = vsel %vm411, %v390, 0
        %v437 = vsel %vm411, %v391, 0
        %v440 = vsel %vm411, %v392, 0
        %v443 = vsel %vm411, %v393, 0
        %v446 = vsel %vm411, %v394, 0
        %v449 = vsel %vm411, %v395, 0
        %v452 = vsel %vm411, %v396, 0
        %v455 = vsel %vm411, %v397, 0
        %v458 = vsel %vm411, %v398, 0
        %460 = vmatprep.subr.bf16.mxu0 0
        %461 = vmatpush1.bf16.msra.mxu0 %v407
        %462 = vmatprep.subr.bf16.mxu0 0
        %463 = vmatpush1.bf16.msra.mxu0 %v408
        %464 = vmatprep.subr.bf16.mxu0 0
        %465 = vmatpush1.bf16.msra.mxu0 0
        %466 = vmatprep.subr.bf16.mxu0 0
        %467 = vmatpush1.bf16.msra.mxu0 0
        %468 = vmatprep.subr.bf16.mxu0 0
        %469 = vmatpush1.bf16.msra.mxu0 0
        %470 = vmatprep.subr.bf16.mxu0 0
        %471 = vmatpush1.bf16.msra.mxu0 0
        %472 = vmatprep.subr.bf16.mxu0 0
        %473 = vmatpush1.bf16.msra.mxu0 0
        %474 = vmatprep.subr.bf16.mxu0 0
        %475 = vmatpush1.bf16.msra.mxu0 0
        %476 = vmatprep.subr.bf16.mxu0 0
        %477 = vmatpush1.bf16.msra.mxu0 0
        %478 = vmatprep.subr.bf16.mxu0 0
        %479 = vmatpush1.bf16.msra.mxu0 0
        %480 = vmatprep.subr.bf16.mxu0 0
        %481 = vmatpush1.bf16.msra.mxu0 0
        %482 = vmatprep.subr.bf16.mxu0 0
        %483 = vmatpush1.bf16.msra.mxu0 0
        %484 = vmatprep.subr.bf16.mxu0 0
        %485 = vmatpush1.bf16.msra.mxu0 0
        %486 = vmatprep.subr.bf16.mxu0 0
        %487 = vmatpush1.bf16.msra.mxu0 0
        %488 = vmatprep.subr.bf16.mxu0 0
        %489 = vmatpush1.bf16.msra.mxu0 0
        %490 = vmatprep.subr.bf16.mxu0 0
        %491 = vmatpush1.bf16.msra.mxu0 0
        %492 = vmatprep.mubr.bf16.mxu0 0
        %493 = vmatmul.mubr.bf16.gmra.mrb[0].mxu0 %v413
        %v494 = vpop.f32.mrb[0].mxu0
        %v495 = vadd.f32 %v317, %v494
        %v496 = vpop.f32.mrb[0].mxu0
        %v497 = vpop.f32.mrb[0].mxu0
        %v498 = vadd.f32 %v317, %v497
        %v499 = vpop.f32.mrb[0].mxu0
        %500 = vmatprep.mubr.bf16.mxu0 0
        %501 = vmatmul.mubr.bf16.gmra.mrb[0].mxu0 %v416
        %v502 = vpop.f32.mrb[0].mxu0
        %v503 = vadd.f32 %v317, %v502
        %v504 = vpop.f32.mrb[0].mxu0
        %v505 = vpop.f32.mrb[0].mxu0
        %v506 = vadd.f32 %v317, %v505
        %v507 = vpop.f32.mrb[0].mxu0
        %508 = vmatprep.mubr.bf16.mxu0 0
        %509 = vmatmul.mubr.bf16.gmra.mrb[0].mxu0 %v419
        %v510 = vpop.f32.mrb[0].mxu0
        %v511 = vadd.f32 %v317, %v510
        %v512 = vpop.f32.mrb[0].mxu0
        %v513 = vpop.f32.mrb[0].mxu0
        %v514 = vadd.f32 %v317, %v513
        %v515 = vpop.f32.mrb[0].mxu0
        %516 = vmatprep.mubr.bf16.mxu0 0
        %517 = vmatmul.mubr.bf16.gmra.mrb[0].mxu0 %v422
        %v518 = vpop.f32.mrb[0].mxu0
        %v519 = vadd.f32 %v317, %v518
        %v520 = vpop.f32.mrb[0].mxu0
        %v521 = vpop.f32.mrb[0].mxu0
        %v522 = vadd.f32 %v317, %v521
        %v523 = vpop.f32.mrb[0].mxu0
        %524 = vmatprep.mubr.bf16.mxu0 0
        %525 = vmatmul.mubr.bf16.gmra.mrb[0].mxu0 %v425
        %v526 = vpop.f32.mrb[0].mxu0
        %v527 = vadd.f32 %v317, %v526
        %v528 = vpop.f32.mrb[0].mxu0
        %v529 = vpop.f32.mrb[0].mxu0
        %v530 = vadd.f32 %v317, %v529
        %v531 = vpop.f32.mrb[0].mxu0
        %532 = vmatprep.mubr.bf16.mxu0 0
        %533 = vmatmul.mubr.bf16.gmra.mrb[0].mxu0 %v428
        %v534 = vpop.f32.mrb[0].mxu0
        %v535 = vadd.f32 %v317, %v534
        %v536 = vpop.f32.mrb[0].mxu0
        %v537 = vpop.f32.mrb[0].mxu0
        %v538 = vadd.f32 %v317, %v537
        %v539 = vpop.f32.mrb[0].mxu0
        %540 = vmatprep.mubr.bf16.mxu0 0
        %541 = vmatmul.mubr.bf16.gmra.mrb[0].mxu0 %v431
        %v542 = vpop.f32.mrb[0].mxu0
        %v543 = vadd.f32 %v317, %v542
        %v544 = vpop.f32.mrb[0].mxu0
        %v545 = vpop.f32.mrb[0].mxu0
        %v546 = vadd.f32 %v317, %v545
        %v547 = vpop.f32.mrb[0].mxu0
        %548 = vmatprep.mubr.bf16.mxu0 0
        %549 = vmatmul.mubr.bf16.gmra.mrb[0].mxu0 %v434
        %v550 = vpop.f32.mrb[0].mxu0
        %v551 = vadd.f32 %v317, %v550
        %v552 = vpop.f32.mrb[0].mxu0
        %v553 = vpop.f32.mrb[0].mxu0
        %v554 = vadd.f32 %v317, %v553
        %v555 = vpop.f32.mrb[0].mxu0
        %556 = vmatprep.mubr.bf16.mxu0 0
        %557 = vmatmul.mubr.bf16.gmra.mrb[0].mxu0 %v437
        %v558 = vpop.f32.mrb[0].mxu0
        %v559 = vadd.f32 %v317, %v558
        %v560 = vpop.f32.mrb[0].mxu0
        %v561 = vpop.f32.mrb[0].mxu0
        %v562 = vadd.f32 %v317, %v561
        %v563 = vpop.f32.mrb[0].mxu0
        %564 = vmatprep.mubr.bf16.mxu0 0
        %565 = vmatmul.mubr.bf16.gmra.mrb[0].mxu0 %v440
        %v566 = vpop.f32.mrb[0].mxu0
        %v567 = vadd.f32 %v317, %v566
        %v568 = vpop.f32.mrb[0].mxu0
        %v569 = vpop.f32.mrb[0].mxu0
        %v570 = vadd.f32 %v317, %v569
        %v571 = vpop.f32.mrb[0].mxu0
        %572 = vmatprep.mubr.bf16.mxu0 0
        %573 = vmatmul.mubr.bf16.gmra.mrb[0].mxu0 %v443
        %v574 = vpop.f32.mrb[0].mxu0
        %v575 = vadd.f32 %v317, %v574
        %v576 = vpop.f32.mrb[0].mxu0
        %v577 = vpop.f32.mrb[0].mxu0
        %v578 = vadd.f32 %v317, %v577
        %v579 = vpop.f32.mrb[0].mxu0
        %580 = vmatprep.mubr.bf16.mxu0 0
        %581 = vmatmul.mubr.bf16.gmra.mrb[0].mxu0 %v446
        %v582 = vpop.f32.mrb[0].mxu0
        %v583 = vadd.f32 %v317, %v582
        %v584 = vpop.f32.mrb[0].mxu0
        %v585 = vpop.f32.mrb[0].mxu0
        %v586 = vadd.f32 %v317, %v585
        %v587 = vpop.f32.mrb[0].mxu0
        %588 = vmatprep.mubr.bf16.mxu0 0
        %589 = vmatmul.mubr.bf16.gmra.mrb[0].mxu0 %v449
        %v590 = vpop.f32.mrb[0].mxu0
        %v591 = vadd.f32 %v317, %v590
        %v592 = vpop.f32.mrb[0].mxu0
        %v593 = vpop.f32.mrb[0].mxu0
        %v594 = vadd.f32 %v317, %v593
        %v595 = vpop.f32.mrb[0].mxu0
        %596 = vmatprep.mubr.bf16.mxu0 0
        %597 = vmatmul.mubr.bf16.gmra.mrb[0].mxu0 %v452
        %v598 = vpop.f32.mrb[0].mxu0
        %v599 = vadd.f32 %v317, %v598
        %v600 = vpop.f32.mrb[0].mxu0
        %v601 = vpop.f32.mrb[0].mxu0
        %v602 = vadd.f32 %v317, %v601
        %v603 = vpop.f32.mrb[0].mxu0
        %604 = vmatprep.mubr.bf16.mxu0 0
        %605 = vmatmul.mubr.bf16.gmra.mrb[0].mxu0 %v455
        %v606 = vpop.f32.mrb[0].mxu0
        %v607 = vadd.f32 %v317, %v606
        %v608 = vpop.f32.mrb[0].mxu0
        %v609 = vpop.f32.mrb[0].mxu0
        %v610 = vadd.f32 %v317, %v609
        %v611 = vpop.f32.mrb[0].mxu0
        %612 = vmatprep.mubr.bf16.mxu0 0
        %613 = vmatmul.mubr.bf16.gmra.mrb[0].mxu0 %v458
        %v614 = vpop.f32.mrb[0].mxu0
        %v615 = vadd.f32 %v317, %v614
        %v616 = vpop.f32.mrb[0].mxu0
        %v617 = vpop.f32.mrb[0].mxu0
        %v618 = vadd.f32 %v317, %v617
        %v619 = vpop.f32.mrb[0].mxu0
        %620 = vdwg.mxu0
        %v621 = vld [vmem:[#allocation2] sm:$0xff]
        %v622 = vld [vmem:[#allocation2 + $0x8] sm:$0xff]
        %v623 = vld [vmem:[#allocation2 + $0x10] sm:$0xff]
        %v624 = vld [vmem:[#allocation2 + $0x18] sm:$0xff]
        %v625 = vld [vmem:[#allocation2 + $0x20] sm:$0xff]
        %v626 = vld [vmem:[#allocation2 + $0x28] sm:$0xff]
        %v627 = vld [vmem:[#allocation2 + $0x30] sm:$0xff]
        %v628 = vld [vmem:[#allocation2 + $0x38] sm:$0xff]
        %v629 = vld [vmem:[#allocation2 + $0x40] sm:$0xff]
        %v630 = vld [vmem:[#allocation2 + $0x48] sm:$0xff]
        %v631 = vld [vmem:[#allocation2 + $0x50] sm:$0xff]
        %v632 = vld [vmem:[#allocation2 + $0x58] sm:$0xff]
        %v633 = vld [vmem:[#allocation2 + $0x60] sm:$0xff]
        %v634 = vld [vmem:[#allocation2 + $0x68] sm:$0xff]
        %v635 = vld [vmem:[#allocation2 + $0x70] sm:$0xff]
        %v636 = vld [vmem:[#allocation2 + $0x78] sm:$0xff]
        %v637 = vld [vmem:[#allocation2 + $0x80] sm:$0xff]
        %v638 = vld [vmem:[#allocation2 + $0x88] sm:$0xff]
        %v639 = vld [vmem:[#allocation2 + $0x90] sm:$0xff]
        %v640 = vld [vmem:[#allocation2 + $0x98] sm:$0xff]
        %v641 = vld [vmem:[#allocation2 + $0xa0] sm:$0xff]
        %v642 = vld [vmem:[#allocation2 + $0xa8] sm:$0xff]
        %v643 = vld [vmem:[#allocation2 + $0xb0] sm:$0xff]
        %v644 = vld [vmem:[#allocation2 + $0xb8] sm:$0xff]
        %v645 = vld [vmem:[#allocation2 + $0xc0] sm:$0xff]
        %v646 = vld [vmem:[#allocation2 + $0xc8] sm:$0xff]
        %v647 = vld [vmem:[#allocation2 + $0xd0] sm:$0xff]
        %v648 = vld [vmem:[#allocation2 + $0xd8] sm:$0xff]
        %v649 = vld [vmem:[#allocation2 + $0xe0] sm:$0xff]
        %v650 = vld [vmem:[#allocation2 + $0xe8] sm:$0xff]
        %v651 = vld [vmem:[#allocation2 + $0xf0] sm:$0xff]
        %v652 = vld [vmem:[#allocation2 + $0xf8] sm:$0xff]
        %v653 = vld [vmem:[#allocation2 + $0x100] sm:$0xff]
        %v654 = vld [vmem:[#allocation2 + $0x108] sm:$0xff]
        %v655 = vld [vmem:[#allocation2 + $0x110] sm:$0xff]
        %v656 = vld [vmem:[#allocation2 + $0x118] sm:$0xff]
        %v657 = vld [vmem:[#allocation2 + $0x120] sm:$0xff]
        %v658 = vld [vmem:[#allocation2 + $0x128] sm:$0xff]
        %v659 = vld [vmem:[#allocation2 + $0x130] sm:$0xff]
        %v660 = vld [vmem:[#allocation2 + $0x138] sm:$0xff]
        %v661 = vld [vmem:[#allocation2 + $0x140] sm:$0xff]
        %v662 = vld [vmem:[#allocation2 + $0x148] sm:$0xff]
        %v663 = vld [vmem:[#allocation2 + $0x150] sm:$0xff]
        %v664 = vld [vmem:[#allocation2 + $0x158] sm:$0xff]
        %v665 = vld [vmem:[#allocation2 + $0x160] sm:$0xff]
        %v666 = vld [vmem:[#allocation2 + $0x168] sm:$0xff]
        %v667 = vld [vmem:[#allocation2 + $0x170] sm:$0xff]
        %v668 = vld [vmem:[#allocation2 + $0x178] sm:$0xff]
        %v669 = vld [vmem:[#allocation2 + $0x180] sm:$0xff]
        %v670 = vld [vmem:[#allocation2 + $0x188] sm:$0xff]
        %v671 = vld [vmem:[#allocation2 + $0x190] sm:$0xff]
        %v672 = vld [vmem:[#allocation2 + $0x198] sm:$0xff]
        %v673 = vld [vmem:[#allocation2 + $0x1a0] sm:$0xff]
        %v674 = vld [vmem:[#allocation2 + $0x1a8] sm:$0xff]
        %v675 = vld [vmem:[#allocation2 + $0x1b0] sm:$0xff]
        %v676 = vld [vmem:[#allocation2 + $0x1b8] sm:$0xff]
        %v677 = vld [vmem:[#allocation2 + $0x1c0] sm:$0xff]
        %v678 = vld [vmem:[#allocation2 + $0x1c8] sm:$0xff]
        %v679 = vld [vmem:[#allocation2 + $0x1d0] sm:$0xff]
        %v680 = vld [vmem:[#allocation2 + $0x1d8] sm:$0xff]
        %v681 = vld [vmem:[#allocation2 + $0x1e0] sm:$0xff]
        %v682 = vld [vmem:[#allocation2 + $0x1e8] sm:$0xff]
        %v683 = vld [vmem:[#allocation2 + $0x1f0] sm:$0xff]
        %v684 = vld [vmem:[#allocation2 + $0x1f8] sm:$0xff]
        %v685 = vpack.c.bf16 %v498, %v495
        %v686 = vpack.c.bf16 %v506, %v503
        %v687 = vpack.c.bf16 %v514, %v511
        %v688 = vpack.c.bf16 %v522, %v519
        %v689 = vpack.c.bf16 %v530, %v527
        %v690 = vpack.c.bf16 %v538, %v535
        %v691 = vpack.c.bf16 %v546, %v543
        %v692 = vpack.c.bf16 %v554, %v551
        %v693 = vpack.c.bf16 %v562, %v559
        %v694 = vpack.c.bf16 %v570, %v567
        %v695 = vpack.c.bf16 %v578, %v575
        %v696 = vpack.c.bf16 %v586, %v583
        %v697 = vpack.c.bf16 %v594, %v591
        %v698 = vpack.c.bf16 %v602, %v599
        %v699 = vpack.c.bf16 %v610, %v607
        %v700 = vpack.c.bf16 %v618, %v615
        %705 = vrot.lane.b32.xlu0 %v685, 96
        %v706 = vpop.permute.xlu0 %705
        %707 = vrot.lane.b32.xlu0 %v686, 96
        %v708 = vpop.permute.xlu0 %707
        %709 = vrot.lane.b32.xlu0 %v687, 96
        %v710 = vpop.permute.xlu0 %709
        %711 = vrot.lane.b32.xlu0 %v688, 96
        %v712 = vpop.permute.xlu0 %711
        %vm713 = vcmask 64512
        %v715 = vsel %vm713, %v685, 0
        %v718 = vsel %vm713, %v686, 0
        %v721 = vsel %vm713, %v687, 0
        %v724 = vsel %vm713, %v688, 0
        %v727 = vsel %vm713, %v706, 0
        %v730 = vsel %vm713, %v708, 0
        %v733 = vsel %vm713, %v710, 0
        %v736 = vsel %vm713, %v712, 0
        %738 = vmatprep.subr.bf16.mxu0 0
        %739 = vmatpush1.bf16.xpose.msra.mxu0 %v727
        %740 = vmatprep.subr.bf16.mxu0 0
        %741 = vmatpush1.bf16.xpose.msra.mxu0 %v730
        %742 = vmatprep.subr.bf16.mxu0 0
        %743 = vmatpush1.bf16.xpose.msra.mxu0 %v733
        %744 = vmatprep.subr.bf16.mxu0 0
        %745 = vmatpush1.bf16.xpose.msra.mxu0 %v736
        %746 = vmatprep.subr.bf16.mxu0 0
        %747 = vmatpush1.bf16.xpose.msra.mxu0 0
        %748 = vmatprep.subr.bf16.mxu0 0
        %749 = vmatpush1.bf16.xpose.msra.mxu0 0
        %750 = vmatprep.subr.bf16.mxu0 0
        %751 = vmatpush1.bf16.xpose.msra.mxu0 0
        %752 = vmatprep.subr.bf16.mxu0 0
        %753 = vmatpush1.bf16.xpose.msra.mxu0 0
        %754 = vmatprep.subr.bf16.mxu0 0
        %755 = vmatpush1.bf16.xpose.msra.mxu0 0
        %756 = vmatprep.subr.bf16.mxu0 0
        %757 = vmatpush1.bf16.xpose.msra.mxu0 0
        %758 = vmatprep.subr.bf16.mxu0 0
        %759 = vmatpush1.bf16.xpose.msra.mxu0 0
        %760 = vmatprep.subr.bf16.mxu0 0
        %761 = vmatpush1.bf16.xpose.msra.mxu0 0
        %762 = vmatprep.subr.bf16.mxu0 0
        %763 = vmatpush1.bf16.xpose.msra.mxu0 0
        %764 = vmatprep.subr.bf16.mxu0 0
        %765 = vmatpush1.bf16.xpose.msra.mxu0 0
        %766 = vmatprep.subr.bf16.mxu0 0
        %767 = vmatpush1.bf16.xpose.msra.mxu0 0
        %768 = vmatprep.subr.bf16.mxu0 0
        %769 = vmatpush1.bf16.xpose.msra.mxu0 0
        %770 = vmatprep.mubr.bf16.mxu0 0
        %771 = vmatmul.mubr.bf16.gmra.mrb[0].mxu0 %v715
        %v772 = vpop.f32.mrb[0].mxu0
        %v773 = vadd.f32 0.0, %v772
        %v774 = vpop.f32.mrb[0].mxu0
        %v775 = vpop.f32.mrb[0].mxu0
        %v776 = vadd.f32 0.0, %v775
        %v777 = vpop.f32.mrb[0].mxu0
        %778 = vmatprep.mubr.bf16.mxu0 0
        %779 = vmatmul.mubr.bf16.gmra.mrb[0].mxu0 %v718
        %v780 = vpop.f32.mrb[0].mxu0
        %v781 = vadd.f32 0.0, %v780
        %v782 = vpop.f32.mrb[0].mxu0
        %v783 = vpop.f32.mrb[0].mxu0
        %v784 = vadd.f32 0.0, %v783
        %v785 = vpop.f32.mrb[0].mxu0
        %786 = vmatprep.mubr.bf16.mxu0 0
        %787 = vmatmul.mubr.bf16.gmra.mrb[0].mxu0 %v721
        %v788 = vpop.f32.mrb[0].mxu0
        %v789 = vadd.f32 0.0, %v788
        %v790 = vpop.f32.mrb[0].mxu0
        %v791 = vpop.f32.mrb[0].mxu0
        %v792 = vadd.f32 0.0, %v791
        %v793 = vpop.f32.mrb[0].mxu0
        %794 = vmatprep.mubr.bf16.mxu0 0
        %795 = vmatmul.mubr.bf16.gmra.mrb[0].mxu0 %v724
        %v796 = vpop.f32.mrb[0].mxu0
        %v797 = vadd.f32 0.0, %v796
        %v798 = vpop.f32.mrb[0].mxu0
        %v799 = vpop.f32.mrb[0].mxu0
        %v800 = vadd.f32 0.0, %v799
        %v801 = vpop.f32.mrb[0].mxu0
        %802 = vdwg.mxu0
        %807 = vrot.lane.b32.xlu0 %v689, 96
        %v808 = vpop.permute.xlu0 %807
        %809 = vrot.lane.b32.xlu0 %v690, 96
        %v810 = vpop.permute.xlu0 %809
        %811 = vrot.lane.b32.xlu0 %v691, 96
        %v812 = vpop.permute.xlu0 %811
        %813 = vrot.lane.b32.xlu0 %v692, 96
        %v814 = vpop.permute.xlu0 %813
        %v816 = vsel %vm713, %v689, 0
        %v819 = vsel %vm713, %v690, 0
        %v822 = vsel %vm713, %v691, 0
        %v825 = vsel %vm713, %v692, 0
        %v828 = vsel %vm713, %v808, 0
        %v831 = vsel %vm713, %v810, 0
        %v834 = vsel %vm713, %v812, 0
        %v837 = vsel %vm713, %v814, 0
        %839 = vmatprep.subr.bf16.mxu0 0
        %840 = vmatpush1.bf16.xpose.msra.mxu0 %v828
        %841 = vmatprep.subr.bf16.mxu0 0
        %842 = vmatpush1.bf16.xpose.msra.mxu0 %v831
        %843 = vmatprep.subr.bf16.mxu0 0
        %844 = vmatpush1.bf16.xpose.msra.mxu0 %v834
        %845 = vmatprep.subr.bf16.mxu0 0
        %846 = vmatpush1.bf16.xpose.msra.mxu0 %v837
        %847 = vmatprep.subr.bf16.mxu0 0
        %848 = vmatpush1.bf16.xpose.msra.mxu0 0
        %849 = vmatprep.subr.bf16.mxu0 0
        %850 = vmatpush1.bf16.xpose.msra.mxu0 0
        %851 = vmatprep.subr.bf16.mxu0 0
        %852 = vmatpush1.bf16.xpose.msra.mxu0 0
        %853 = vmatprep.subr.bf16.mxu0 0
        %854 = vmatpush1.bf16.xpose.msra.mxu0 0
        %855 = vmatprep.subr.bf16.mxu0 0
        %856 = vmatpush1.bf16.xpose.msra.mxu0 0
        %857 = vmatprep.subr.bf16.mxu0 0
        %858 = vmatpush1.bf16.xpose.msra.mxu0 0
        %859 = vmatprep.subr.bf16.mxu0 0
        %860 = vmatpush1.bf16.xpose.msra.mxu0 0
        %861 = vmatprep.subr.bf16.mxu0 0
        %862 = vmatpush1.bf16.xpose.msra.mxu0 0
        %863 = vmatprep.subr.bf16.mxu0 0
        %864 = vmatpush1.bf16.xpose.msra.mxu0 0
        %865 = vmatprep.subr.bf16.mxu0 0
        %866 = vmatpush1.bf16.xpose.msra.mxu0 0
        %867 = vmatprep.subr.bf16.mxu0 0
        %868 = vmatpush1.bf16.xpose.msra.mxu0 0
        %869 = vmatprep.subr.bf16.mxu0 0
        %870 = vmatpush1.bf16.xpose.msra.mxu0 0
        %871 = vmatprep.mubr.bf16.mxu0 0
        %872 = vmatmul.mubr.bf16.gmra.mrb[0].mxu0 %v816
        %v873 = vpop.f32.mrb[0].mxu0
        %v874 = vadd.f32 0.0, %v873
        %v875 = vpop.f32.mrb[0].mxu0
        %v876 = vpop.f32.mrb[0].mxu0
        %v877 = vadd.f32 0.0, %v876
        %v878 = vpop.f32.mrb[0].mxu0
        %879 = vmatprep.mubr.bf16.mxu0 0
        %880 = vmatmul.mubr.bf16.gmra.mrb[0].mxu0 %v819
        %v881 = vpop.f32.mrb[0].mxu0
        %v882 = vadd.f32 0.0, %v881
        %v883 = vpop.f32.mrb[0].mxu0
        %v884 = vpop.f32.mrb[0].mxu0
        %v885 = vadd.f32 0.0, %v884
        %v886 = vpop.f32.mrb[0].mxu0
        %887 = vmatprep.mubr.bf16.mxu0 0
        %888 = vmatmul.mubr.bf16.gmra.mrb[0].mxu0 %v822
        %v889 = vpop.f32.mrb[0].mxu0
        %v890 = vadd.f32 0.0, %v889
        %v891 = vpop.f32.mrb[0].mxu0
        %v892 = vpop.f32.mrb[0].mxu0
        %v893 = vadd.f32 0.0, %v892
        %v894 = vpop.f32.mrb[0].mxu0
        %895 = vmatprep.mubr.bf16.mxu0 0
        %896 = vmatmul.mubr.bf16.gmra.mrb[0].mxu0 %v825
        %v897 = vpop.f32.mrb[0].mxu0
        %v898 = vadd.f32 0.0, %v897
        %v899 = vpop.f32.mrb[0].mxu0
        %v900 = vpop.f32.mrb[0].mxu0
        %v901 = vadd.f32 0.0, %v900
        %v902 = vpop.f32.mrb[0].mxu0
        %903 = vdwg.mxu0
        %908 = vrot.lane.b32.xlu0 %v693, 96
        %v909 = vpop.permute.xlu0 %908
        %910 = vrot.lane.b32.xlu0 %v694, 96
        %v911 = vpop.permute.xlu0 %910
        %912 = vrot.lane.b32.xlu0 %v695, 96
        %v913 = vpop.permute.xlu0 %912
        %914 = vrot.lane.b32.xlu0 %v696, 96
        %v915 = vpop.permute.xlu0 %914
        %v917 = vsel %vm713, %v693, 0
        %v920 = vsel %vm713, %v694, 0
        %v923 = vsel %vm713, %v695, 0
        %v926 = vsel %vm713, %v696, 0
        %v929 = vsel %vm713, %v909, 0
        %v932 = vsel %vm713, %v911, 0
        %v935 = vsel %vm713, %v913, 0
        %v938 = vsel %vm713, %v915, 0
        %940 = vmatprep.subr.bf16.mxu0 0
        %941 = vmatpush1.bf16.xpose.msra.mxu0 %v929
        %942 = vmatprep.subr.bf16.mxu0 0
        %943 = vmatpush1.bf16.xpose.msra.mxu0 %v932
        %944 = vmatprep.subr.bf16.mxu0 0
        %945 = vmatpush1.bf16.xpose.msra.mxu0 %v935
        %946 = vmatprep.subr.bf16.mxu0 0
        %947 = vmatpush1.bf16.xpose.msra.mxu0 %v938
        %948 = vmatprep.subr.bf16.mxu0 0
        %949 = vmatpush1.bf16.xpose.msra.mxu0 0
        %950 = vmatprep.subr.bf16.mxu0 0
        %951 = vmatpush1.bf16.xpose.msra.mxu0 0
        %952 = vmatprep.subr.bf16.mxu0 0
        %953 = vmatpush1.bf16.xpose.msra.mxu0 0
        %954 = vmatprep.subr.bf16.mxu0 0
        %955 = vmatpush1.bf16.xpose.msra.mxu0 0
        %956 = vmatprep.subr.bf16.mxu0 0
        %957 = vmatpush1.bf16.xpose.msra.mxu0 0
        %958 = vmatprep.subr.bf16.mxu0 0
        %959 = vmatpush1.bf16.xpose.msra.mxu0 0
        %960 = vmatprep.subr.bf16.mxu0 0
        %961 = vmatpush1.bf16.xpose.msra.mxu0 0
        %962 = vmatprep.subr.bf16.mxu0 0
        %963 = vmatpush1.bf16.xpose.msra.mxu0 0
        %964 = vmatprep.subr.bf16.mxu0 0
        %965 = vmatpush1.bf16.xpose.msra.mxu0 0
        %966 = vmatprep.subr.bf16.mxu0 0
        %967 = vmatpush1.bf16.xpose.msra.mxu0 0
        %968 = vmatprep.subr.bf16.mxu0 0
        %969 = vmatpush1.bf16.xpose.msra.mxu0 0
        %970 = vmatprep.subr.bf16.mxu0 0
        %971 = vmatpush1.bf16.xpose.msra.mxu0 0
        %972 = vmatprep.mubr.bf16.mxu0 0
        %973 = vmatmul.mubr.bf16.gmra.mrb[0].mxu0 %v917
        %v974 = vpop.f32.mrb[0].mxu0
        %v975 = vadd.f32 0.0, %v974
        %v976 = vpop.f32.mrb[0].mxu0
        %v977 = vpop.f32.mrb[0].mxu0
        %v978 = vadd.f32 0.0, %v977
        %v979 = vpop.f32.mrb[0].mxu0
        %980 = vmatprep.mubr.bf16.mxu0 0
        %981 = vmatmul.mubr.bf16.gmra.mrb[0].mxu0 %v920
        %v982 = vpop.f32.mrb[0].mxu0
        %v983 = vadd.f32 0.0, %v982
        %v984 = vpop.f32.mrb[0].mxu0
        %v985 = vpop.f32.mrb[0].mxu0
        %v986 = vadd.f32 0.0, %v985
        %v987 = vpop.f32.mrb[0].mxu0
        %988 = vmatprep.mubr.bf16.mxu0 0
        %989 = vmatmul.mubr.bf16.gmra.mrb[0].mxu0 %v923
        %v990 = vpop.f32.mrb[0].mxu0
        %v991 = vadd.f32 0.0, %v990
        %v992 = vpop.f32.mrb[0].mxu0
        %v993 = vpop.f32.mrb[0].mxu0
        %v994 = vadd.f32 0.0, %v993
        %v995 = vpop.f32.mrb[0].mxu0
        %996 = vmatprep.mubr.bf16.mxu0 0
        %997 = vmatmul.mubr.bf16.gmra.mrb[0].mxu0 %v926
        %v998 = vpop.f32.mrb[0].mxu0
        %v999 = vadd.f32 0.0, %v998
        %v1000 = vpop.f32.mrb[0].mxu0
        %v1001 = vpop.f32.mrb[0].mxu0
        %v1002 = vadd.f32 0.0, %v1001
        %v1003 = vpop.f32.mrb[0].mxu0
        %1004 = vdwg.mxu0
        %1009 = vrot.lane.b32.xlu0 %v697, 96
        %v1010 = vpop.permute.xlu0 %1009
        %1011 = vrot.lane.b32.xlu0 %v698, 96
        %v1012 = vpop.permute.xlu0 %1011
        %1013 = vrot.lane.b32.xlu0 %v699, 96
        %v1014 = vpop.permute.xlu0 %1013
        %1015 = vrot.lane.b32.xlu0 %v700, 96
        %v1016 = vpop.permute.xlu0 %1015
        %v1018 = vsel %vm713, %v697, 0
        %v1021 = vsel %vm713, %v698, 0
        %v1024 = vsel %vm713, %v699, 0
        %v1027 = vsel %vm713, %v700, 0
        %v1030 = vsel %vm713, %v1010, 0
        %v1033 = vsel %vm713, %v1012, 0
        %v1036 = vsel %vm713, %v1014, 0
        %v1039 = vsel %vm713, %v1016, 0
        %1041 = vmatprep.subr.bf16.mxu0 0
        %1042 = vmatpush1.bf16.xpose.msra.mxu0 %v1030
        %1043 = vmatprep.subr.bf16.mxu0 0
        %1044 = vmatpush1.bf16.xpose.msra.mxu0 %v1033
        %1045 = vmatprep.subr.bf16.mxu0 0
        %1046 = vmatpush1.bf16.xpose.msra.mxu0 %v1036
        %1047 = vmatprep.subr.bf16.mxu0 0
        %1048 = vmatpush1.bf16.xpose.msra.mxu0 %v1039
        %1049 = vmatprep.subr.bf16.mxu0 0
        %1050 = vmatpush1.bf16.xpose.msra.mxu0 0
        %1051 = vmatprep.subr.bf16.mxu0 0
        %1052 = vmatpush1.bf16.xpose.msra.mxu0 0
        %1053 = vmatprep.subr.bf16.mxu0 0
        %1054 = vmatpush1.bf16.xpose.msra.mxu0 0
        %1055 = vmatprep.subr.bf16.mxu0 0
        %1056 = vmatpush1.bf16.xpose.msra.mxu0 0
        %1057 = vmatprep.subr.bf16.mxu0 0
        %1058 = vmatpush1.bf16.xpose.msra.mxu0 0
        %1059 = vmatprep.subr.bf16.mxu0 0
        %1060 = vmatpush1.bf16.xpose.msra.mxu0 0
        %1061 = vmatprep.subr.bf16.mxu0 0
        %1062 = vmatpush1.bf16.xpose.msra.mxu0 0
        %1063 = vmatprep.subr.bf16.mxu0 0
        %1064 = vmatpush1.bf16.xpose.msra.mxu0 0
        %1065 = vmatprep.subr.bf16.mxu0 0
        %1066 = vmatpush1.bf16.xpose.msra.mxu0 0
        %1067 = vmatprep.subr.bf16.mxu0 0
        %1068 = vmatpush1.bf16.xpose.msra.mxu0 0
        %1069 = vmatprep.subr.bf16.mxu0 0
        %1070 = vmatpush1.bf16.xpose.msra.mxu0 0
        %1071 = vmatprep.subr.bf16.mxu0 0
        %1072 = vmatpush1.bf16.xpose.msra.mxu0 0
        %1073 = vmatprep.mubr.bf16.mxu0 0
        %1074 = vmatmul.mubr.bf16.gmra.mrb[0].mxu0 %v1018
        %v1075 = vpop.f32.mrb[0].mxu0
        %v1076 = vadd.f32 0.0, %v1075
        %v1077 = vpop.f32.mrb[0].mxu0
        %v1078 = vpop.f32.mrb[0].mxu0
        %v1079 = vadd.f32 0.0, %v1078
        %v1080 = vpop.f32.mrb[0].mxu0
        %1081 = vmatprep.mubr.bf16.mxu0 0
        %1082 = vmatmul.mubr.bf16.gmra.mrb[0].mxu0 %v1021
        %v1083 = vpop.f32.mrb[0].mxu0
        %v1084 = vadd.f32 0.0, %v1083
        %v1085 = vpop.f32.mrb[0].mxu0
        %v1086 = vpop.f32.mrb[0].mxu0
        %v1087 = vadd.f32 0.0, %v1086
        %v1088 = vpop.f32.mrb[0].mxu0
        %1089 = vmatprep.mubr.bf16.mxu0 0
        %1090 = vmatmul.mubr.bf16.gmra.mrb[0].mxu0 %v1024
        %v1091 = vpop.f32.mrb[0].mxu0
        %v1092 = vadd.f32 0.0, %v1091
        %v1093 = vpop.f32.mrb[0].mxu0
        %v1094 = vpop.f32.mrb[0].mxu0
        %v1095 = vadd.f32 0.0, %v1094
        %v1096 = vpop.f32.mrb[0].mxu0
        %1097 = vmatprep.mubr.bf16.mxu0 0
        %1098 = vmatmul.mubr.bf16.gmra.mrb[0].mxu0 %v1027
        %v1099 = vpop.f32.mrb[0].mxu0
        %v1100 = vadd.f32 0.0, %v1099
        %v1101 = vpop.f32.mrb[0].mxu0
        %v1102 = vpop.f32.mrb[0].mxu0
        %v1103 = vadd.f32 0.0, %v1102
        %v1104 = vpop.f32.mrb[0].mxu0
        %1105 = vdwg.mxu0
        %v1106 = vadd.f32 %v773, %v621
        %v1107 = vadd.f32 %v776, %v622
        %v1108 = vadd.f32 %v781, %v623
        %v1109 = vadd.f32 %v784, %v624
        %v1110 = vadd.f32 %v789, %v625
        %v1111 = vadd.f32 %v792, %v626
        %v1112 = vadd.f32 %v797, %v627
        %v1113 = vadd.f32 %v800, %v628
        %v1114 = vadd.f32 %v874, %v653
        %v1115 = vadd.f32 %v877, %v654
        %v1116 = vadd.f32 %v882, %v655
        %v1117 = vadd.f32 %v885, %v656
        %v1118 = vadd.f32 %v890, %v657
        %v1119 = vadd.f32 %v893, %v658
        %v1120 = vadd.f32 %v898, %v659
        %v1121 = vadd.f32 %v901, %v660
        %v1122 = vadd.f32 %v975, %v621
        %v1123 = vadd.f32 %v978, %v622
        %v1124 = vadd.f32 %v983, %v623
        %v1125 = vadd.f32 %v986, %v624
        %v1126 = vadd.f32 %v991, %v625
        %v1127 = vadd.f32 %v994, %v626
        %v1128 = vadd.f32 %v999, %v627
        %v1129 = vadd.f32 %v1002, %v628
        %v1130 = vadd.f32 %v1076, %v653
        %v1131 = vadd.f32 %v1079, %v654
        %v1132 = vadd.f32 %v1084, %v655
        %v1133 = vadd.f32 %v1087, %v656
        %v1134 = vadd.f32 %v1092, %v657
        %v1135 = vadd.f32 %v1095, %v658
        %v1136 = vadd.f32 %v1100, %v659
        %v1137 = vadd.f32 %v1103, %v660
        %vm1138 = vcmask 523264
        %v1139 = vsel %vm1138, %v1106, -inf
        %1140 = vmax.xlane.f32.xlu0 %v1139
        %v1141 = vpop.xlane.xlu0 %1140
        %v1142 = vsel %vm1138, %v1107, -inf
        %1143 = vmax.xlane.f32.xlu0 %v1142
        %v1144 = vpop.xlane.xlu0 %1143
        %v1145 = vsel %vm1138, %v1108, -inf
        %1146 = vmax.xlane.f32.xlu0 %v1145
        %v1147 = vpop.xlane.xlu0 %1146
        %v1148 = vsel %vm1138, %v1109, -inf
        %1149 = vmax.xlane.f32.xlu0 %v1148
        %v1150 = vpop.xlane.xlu0 %1149
        %v1151 = vsel %vm1138, %v1110, -inf
        %1152 = vmax.xlane.f32.xlu0 %v1151
        %v1153 = vpop.xlane.xlu0 %1152
        %v1154 = vsel %vm1138, %v1111, -inf
        %1155 = vmax.xlane.f32.xlu0 %v1154
        %v1156 = vpop.xlane.xlu0 %1155
        %v1157 = vsel %vm1138, %v1112, -inf
        %1158 = vmax.xlane.f32.xlu0 %v1157
        %v1159 = vpop.xlane.xlu0 %1158
        %v1160 = vsel %vm1138, %v1113, -inf
        %1161 = vmax.xlane.f32.xlu0 %v1160
        %v1162 = vpop.xlane.xlu0 %1161
        %v1163 = vsel %vm1138, %v1114, -inf
        %1164 = vmax.xlane.f32.xlu0 %v1163
        %v1165 = vpop.xlane.xlu0 %1164
        %v1166 = vsel %vm1138, %v1115, -inf
        %1167 = vmax.xlane.f32.xlu0 %v1166
        %v1168 = vpop.xlane.xlu0 %1167
        %v1169 = vsel %vm1138, %v1116, -inf
        %1170 = vmax.xlane.f32.xlu0 %v1169
        %v1171 = vpop.xlane.xlu0 %1170
        %v1172 = vsel %vm1138, %v1117, -inf
        %1173 = vmax.xlane.f32.xlu0 %v1172
        %v1174 = vpop.xlane.xlu0 %1173
        %v1175 = vsel %vm1138, %v1118, -inf
        %1176 = vmax.xlane.f32.xlu0 %v1175
        %v1177 = vpop.xlane.xlu0 %1176
        %v1178 = vsel %vm1138, %v1119, -inf
        %1179 = vmax.xlane.f32.xlu0 %v1178
        %v1180 = vpop.xlane.xlu0 %1179
        %v1181 = vsel %vm1138, %v1120, -inf
        %1182 = vmax.xlane.f32.xlu0 %v1181
        %v1183 = vpop.xlane.xlu0 %1182
        %v1184 = vsel %vm1138, %v1121, -inf
        %1185 = vmax.xlane.f32.xlu0 %v1184
        %v1186 = vpop.xlane.xlu0 %1185
        %v1187 = vsel %vm1138, %v1122, -inf
        %1188 = vmax.xlane.f32.xlu0 %v1187
        %v1189 = vpop.xlane.xlu0 %1188
        %v1190 = vsel %vm1138, %v1123, -inf
        %1191 = vmax.xlane.f32.xlu0 %v1190
        %v1192 = vpop.xlane.xlu0 %1191
        %v1193 = vsel %vm1138, %v1124, -inf
        %1194 = vmax.xlane.f32.xlu0 %v1193
        %v1195 = vpop.xlane.xlu0 %1194
        %v1196 = vsel %vm1138, %v1125, -inf
        %1197 = vmax.xlane.f32.xlu0 %v1196
        %v1198 = vpop.xlane.xlu0 %1197
        %v1199 = vsel %vm1138, %v1126, -inf
        %1200 = vmax.xlane.f32.xlu0 %v1199
        %v1201 = vpop.xlane.xlu0 %1200
        %v1202 = vsel %vm1138, %v1127, -inf
        %1203 = vmax.xlane.f32.xlu0 %v1202
        %v1204 = vpop.xlane.xlu0 %1203
        %v1205 = vsel %vm1138, %v1128, -inf
        %1206 = vmax.xlane.f32.xlu0 %v1205
        %v1207 = vpop.xlane.xlu0 %1206
        %v1208 = vsel %vm1138, %v1129, -inf
        %1209 = vmax.xlane.f32.xlu0 %v1208
        %v1210 = vpop.xlane.xlu0 %1209
        %v1211 = vsel %vm1138, %v1130, -inf
        %1212 = vmax.xlane.f32.xlu0 %v1211
        %v1213 = vpop.xlane.xlu0 %1212
        %v1214 = vsel %vm1138, %v1131, -inf
        %1215 = vmax.xlane.f32.xlu0 %v1214
        %v1216 = vpop.xlane.xlu0 %1215
        %v1217 = vsel %vm1138, %v1132, -inf
        %1218 = vmax.xlane.f32.xlu0 %v1217
        %v1219 = vpop.xlane.xlu0 %1218
        %v1220 = vsel %vm1138, %v1133, -inf
        %1221 = vmax.xlane.f32.xlu0 %v1220
        %v1222 = vpop.xlane.xlu0 %1221
        %v1223 = vsel %vm1138, %v1134, -inf
        %1224 = vmax.xlane.f32.xlu0 %v1223
        %v1225 = vpop.xlane.xlu0 %1224
        %v1226 = vsel %vm1138, %v1135, -inf
        %1227 = vmax.xlane.f32.xlu0 %v1226
        %v1228 = vpop.xlane.xlu0 %1227
        %v1229 = vsel %vm1138, %v1136, -inf
        %1230 = vmax.xlane.f32.xlu0 %v1229
        %v1231 = vpop.xlane.xlu0 %1230
        %v1232 = vsel %vm1138, %v1137, -inf
        %1233 = vmax.xlane.f32.xlu0 %v1232
        %v1234 = vpop.xlane.xlu0 %1233
        %v1235 = vsub.f32 %v1106, %v1141
        %v1236 = vsub.f32 %v1107, %v1144
        %v1237 = vsub.f32 %v1108, %v1147
        %v1238 = vsub.f32 %v1109, %v1150
        %v1239 = vsub.f32 %v1110, %v1153
        %v1240 = vsub.f32 %v1111, %v1156
        %v1241 = vsub.f32 %v1112, %v1159
        %v1242 = vsub.f32 %v1113, %v1162
        %v1243 = vsub.f32 %v1114, %v1165
        %v1244 = vsub.f32 %v1115, %v1168
        %v1245 = vsub.f32 %v1116, %v1171
        %v1246 = vsub.f32 %v1117, %v1174
        %v1247 = vsub.f32 %v1118, %v1177
        %v1248 = vsub.f32 %v1119, %v1180
        %v1249 = vsub.f32 %v1120, %v1183
        %v1250 = vsub.f32 %v1121, %v1186
        %v1251 = vsub.f32 %v1122, %v1189
        %v1252 = vsub.f32 %v1123, %v1192
        %v1253 = vsub.f32 %v1124, %v1195
        %v1254 = vsub.f32 %v1125, %v1198
        %v1255 = vsub.f32 %v1126, %v1201
        %v1256 = vsub.f32 %v1127, %v1204
        %v1257 = vsub.f32 %v1128, %v1207
        %v1258 = vsub.f32 %v1129, %v1210
        %v1259 = vsub.f32 %v1130, %v1213
        %v1260 = vsub.f32 %v1131, %v1216
        %v1261 = vsub.f32 %v1132, %v1219
        %v1262 = vsub.f32 %v1133, %v1222
        %v1263 = vsub.f32 %v1134, %v1225
        %v1264 = vsub.f32 %v1135, %v1228
        %v1265 = vsub.f32 %v1136, %v1231
        %v1266 = vsub.f32 %v1137, %v1234
        %v1267 = vmul.f32 %v1235, 1.442695
        %v1268 = vpow.pop %v1267
        %v1269 = vmul.f32 %v1236, 1.442695
        %v1270 = vpow.pop %v1269
        %v1271 = vmul.f32 %v1237, 1.442695
        %v1272 = vpow.pop %v1271
        %v1273 = vmul.f32 %v1238, 1.442695
        %v1274 = vpow.pop %v1273
        %v1275 = vmul.f32 %v1239, 1.442695
        %v1276 = vpow.pop %v1275
        %v1277 = vmul.f32 %v1240, 1.442695
        %v1278 = vpow.pop %v1277
        %v1279 = vmul.f32 %v1241, 1.442695
        %v1280 = vpow.pop %v1279
        %v1281 = vmul.f32 %v1242, 1.442695
        %v1282 = vpow.pop %v1281
        %v1283 = vmul.f32 %v1243, 1.442695
        %v1284 = vpow.pop %v1283
        %v1285 = vmul.f32 %v1244, 1.442695
        %v1286 = vpow.pop %v1285
        %v1287 = vmul.f32 %v1245, 1.442695
        %v1288 = vpow.pop %v1287
        %v1289 = vmul.f32 %v1246, 1.442695
        %v1290 = vpow.pop %v1289
        %v1291 = vmul.f32 %v1247, 1.442695
        %v1292 = vpow.pop %v1291
        %v1293 = vmul.f32 %v1248, 1.442695
        %v1294 = vpow.pop %v1293
        %v1295 = vmul.f32 %v1249, 1.442695
        %v1296 = vpow.pop %v1295
        %v1297 = vmul.f32 %v1250, 1.442695
        %v1298 = vpow.pop %v1297
        %v1299 = vmul.f32 %v1251, 1.442695
        %v1300 = vpow.pop %v1299
        %v1301 = vmul.f32 %v1252, 1.442695
        %v1302 = vpow.pop %v1301
        %v1303 = vmul.f32 %v1253, 1.442695
        %v1304 = vpow.pop %v1303
        %v1305 = vmul.f32 %v1254, 1.442695
        %v1306 = vpow.pop %v1305
        %v1307 = vmul.f32 %v1255, 1.442695
        %v1308 = vpow.pop %v1307
        %v1309 = vmul.f32 %v1256, 1.442695
        %v1310 = vpow.pop %v1309
        %v1311 = vmul.f32 %v1257, 1.442695
        %v1312 = vpow.pop %v1311
        %v1313 = vmul.f32 %v1258, 1.442695
        %v1314 = vpow.pop %v1313
        %v1315 = vmul.f32 %v1259, 1.442695
        %v1316 = vpow.pop %v1315
        %v1317 = vmul.f32 %v1260, 1.442695
        %v1318 = vpow.pop %v1317
        %v1319 = vmul.f32 %v1261, 1.442695
        %v1320 = vpow.pop %v1319
        %v1321 = vmul.f32 %v1262, 1.442695
        %v1322 = vpow.pop %v1321
        %v1323 = vmul.f32 %v1263, 1.442695
        %v1324 = vpow.pop %v1323
        %v1325 = vmul.f32 %v1264, 1.442695
        %v1326 = vpow.pop %v1325
        %v1327 = vmul.f32 %v1265, 1.442695
        %v1328 = vpow.pop %v1327
        %v1329 = vmul.f32 %v1266, 1.442695
        %v1330 = vpow.pop %v1329
        %v1331 = vsel %vm1138, %v1268, 0.0
        %1332 = vadd.xlane.f32.xlu0 %v1331
        %v1333 = vpop.xlane.xlu0 %1332
        %v1334 = vsel %vm1138, %v1270, 0.0
        %1335 = vadd.xlane.f32.xlu0 %v1334
        %v1336 = vpop.xlane.xlu0 %1335
        %v1337 = vsel %vm1138, %v1272, 0.0
        %1338 = vadd.xlane.f32.xlu0 %v1337
        %v1339 = vpop.xlane.xlu0 %1338
        %v1340 = vsel %vm1138, %v1274, 0.0
        %1341 = vadd.xlane.f32.xlu0 %v1340
        %v1342 = vpop.xlane.xlu0 %1341
        %v1343 = vsel %vm1138, %v1276, 0.0
        %1344 = vadd.xlane.f32.xlu0 %v1343
        %v1345 = vpop.xlane.xlu0 %1344
        %v1346 = vsel %vm1138, %v1278, 0.0
        %1347 = vadd.xlane.f32.xlu0 %v1346
        %v1348 = vpop.xlane.xlu0 %1347
        %v1349 = vsel %vm1138, %v1280, 0.0
        %1350 = vadd.xlane.f32.xlu0 %v1349
        %v1351 = vpop.xlane.xlu0 %1350
        %v1352 = vsel %vm1138, %v1282, 0.0
        %1353 = vadd.xlane.f32.xlu0 %v1352
        %v1354 = vpop.xlane.xlu0 %1353
        %v1355 = vsel %vm1138, %v1284, 0.0
        %1356 = vadd.xlane.f32.xlu0 %v1355
        %v1357 = vpop.xlane.xlu0 %1356
        %v1358 = vsel %vm1138, %v1286, 0.0
        %1359 = vadd.xlane.f32.xlu0 %v1358
        %v1360 = vpop.xlane.xlu0 %1359
        %v1361 = vsel %vm1138, %v1288, 0.0
        %1362 = vadd.xlane.f32.xlu0 %v1361
        %v1363 = vpop.xlane.xlu0 %1362
        %v1364 = vsel %vm1138, %v1290, 0.0
        %1365 = vadd.xlane.f32.xlu0 %v1364
        %v1366 = vpop.xlane.xlu0 %1365
        %v1367 = vsel %vm1138, %v1292, 0.0
        %1368 = vadd.xlane.f32.xlu0 %v1367
        %v1369 = vpop.xlane.xlu0 %1368
        %v1370 = vsel %vm1138, %v1294, 0.0
        %1371 = vadd.xlane.f32.xlu0 %v1370
        %v1372 = vpop.xlane.xlu0 %1371
        %v1373 = vsel %vm1138, %v1296, 0.0
        %1374 = vadd.xlane.f32.xlu0 %v1373
        %v1375 = vpop.xlane.xlu0 %1374
        %v1376 = vsel %vm1138, %v1298, 0.0
        %1377 = vadd.xlane.f32.xlu0 %v1376
        %v1378 = vpop.xlane.xlu0 %1377
        %v1379 = vsel %vm1138, %v1300, 0.0
        %1380 = vadd.xlane.f32.xlu0 %v1379
        %v1381 = vpop.xlane.xlu0 %1380
        %v1382 = vsel %vm1138, %v1302, 0.0
        %1383 = vadd.xlane.f32.xlu0 %v1382
        %v1384 = vpop.xlane.xlu0 %1383
        %v1385 = vsel %vm1138, %v1304, 0.0
        %1386 = vadd.xlane.f32.xlu0 %v1385
        %v1387 = vpop.xlane.xlu0 %1386
        %v1388 = vsel %vm1138, %v1306, 0.0
        %1389 = vadd.xlane.f32.xlu0 %v1388
        %v1390 = vpop.xlane.xlu0 %1389
        %v1391 = vsel %vm1138, %v1308, 0.0
        %1392 = vadd.xlane.f32.xlu0 %v1391
        %v1393 = vpop.xlane.xlu0 %1392
        %v1394 = vsel %vm1138, %v1310, 0.0
        %1395 = vadd.xlane.f32.xlu0 %v1394
        %v1396 = vpop.xlane.xlu0 %1395
        %v1397 = vsel %vm1138, %v1312, 0.0
        %1398 = vadd.xlane.f32.xlu0 %v1397
        %v1399 = vpop.xlane.xlu0 %1398
        %v1400 = vsel %vm1138, %v1314, 0.0
        %1401 = vadd.xlane.f32.xlu0 %v1400
        %v1402 = vpop.xlane.xlu0 %1401
        %v1403 = vsel %vm1138, %v1316, 0.0
        %1404 = vadd.xlane.f32.xlu0 %v1403
        %v1405 = vpop.xlane.xlu0 %1404
        %v1406 = vsel %vm1138, %v1318, 0.0
        %1407 = vadd.xlane.f32.xlu0 %v1406
        %v1408 = vpop.xlane.xlu0 %1407
        %v1409 = vsel %vm1138, %v1320, 0.0
        %1410 = vadd.xlane.f32.xlu0 %v1409
        %v1411 = vpop.xlane.xlu0 %1410
        %v1412 = vsel %vm1138, %v1322, 0.0
        %1413 = vadd.xlane.f32.xlu0 %v1412
        %v1414 = vpop.xlane.xlu0 %1413
        %v1415 = vsel %vm1138, %v1324, 0.0
        %1416 = vadd.xlane.f32.xlu0 %v1415
        %v1417 = vpop.xlane.xlu0 %1416
        %v1418 = vsel %vm1138, %v1326, 0.0
        %1419 = vadd.xlane.f32.xlu0 %v1418
        %v1420 = vpop.xlane.xlu0 %1419
        %v1421 = vsel %vm1138, %v1328, 0.0
        %1422 = vadd.xlane.f32.xlu0 %v1421
        %v1423 = vpop.xlane.xlu0 %1422
        %v1424 = vsel %vm1138, %v1330, 0.0
        %1425 = vadd.xlane.f32.xlu0 %v1424
        %v1426 = vpop.xlane.xlu0 %1425
        %v1427 = vrcp.pop %v1333
        %v1428 = vrcp.pop %v1336
        %v1429 = vrcp.pop %v1339
        %v1430 = vrcp.pop %v1342
        %v1431 = vrcp.pop %v1345
        %v1432 = vrcp.pop %v1348
        %v1433 = vrcp.pop %v1351
        %v1434 = vrcp.pop %v1354
        %v1435 = vrcp.pop %v1357
        %v1436 = vrcp.pop %v1360
        %v1437 = vrcp.pop %v1363
        %v1438 = vrcp.pop %v1366
        %v1439 = vrcp.pop %v1369
        %v1440 = vrcp.pop %v1372
        %v1441 = vrcp.pop %v1375
        %v1442 = vrcp.pop %v1378
        %v1443 = vrcp.pop %v1381
        %v1444 = vrcp.pop %v1384
        %v1445 = vrcp.pop %v1387
        %v1446 = vrcp.pop %v1390
        %v1447 = vrcp.pop %v1393
        %v1448 = vrcp.pop %v1396
        %v1449 = vrcp.pop %v1399
        %v1450 = vrcp.pop %v1402
        %v1451 = vrcp.pop %v1405
        %v1452 = vrcp.pop %v1408
        %v1453 = vrcp.pop %v1411
        %v1454 = vrcp.pop %v1414
        %v1455 = vrcp.pop %v1417
        %v1456 = vrcp.pop %v1420
        %v1457 = vrcp.pop %v1423
        %v1458 = vrcp.pop %v1426
        %v1459 = vmul.f32 %v1268, %v1427
        %v1460 = vmul.f32 %v1270, %v1428
        %v1461 = vmul.f32 %v1272, %v1429
        %v1462 = vmul.f32 %v1274, %v1430
        %v1463 = vmul.f32 %v1276, %v1431
        %v1464 = vmul.f32 %v1278, %v1432
        %v1465 = vmul.f32 %v1280, %v1433
        %v1466 = vmul.f32 %v1282, %v1434
        %v1467 = vmul.f32 %v1284, %v1435
        %v1468 = vmul.f32 %v1286, %v1436
        %v1469 = vmul.f32 %v1288, %v1437
        %v1470 = vmul.f32 %v1290, %v1438
        %v1471 = vmul.f32 %v1292, %v1439
        %v1472 = vmul.f32 %v1294, %v1440
        %v1473 = vmul.f32 %v1296, %v1441
        %v1474 = vmul.f32 %v1298, %v1442
        %v1475 = vmul.f32 %v1300, %v1443
        %v1476 = vmul.f32 %v1302, %v1444
        %v1477 = vmul.f32 %v1304, %v1445
        %v1478 = vmul.f32 %v1306, %v1446
        %v1479 = vmul.f32 %v1308, %v1447
        %v1480 = vmul.f32 %v1310, %v1448
        %v1481 = vmul.f32 %v1312, %v1449
        %v1482 = vmul.f32 %v1314, %v1450
        %v1483 = vmul.f32 %v1316, %v1451
        %v1484 = vmul.f32 %v1318, %v1452
        %v1485 = vmul.f32 %v1320, %v1453
        %v1486 = vmul.f32 %v1322, %v1454
        %v1487 = vmul.f32 %v1324, %v1455
        %v1488 = vmul.f32 %v1326, %v1456
        %v1489 = vmul.f32 %v1328, %v1457
        %v1490 = vmul.f32 %v1330, %v1458
        %v1491 = vpack.c.bf16 %v1460, %v1459
        %v1492 = vpack.c.bf16 %v1462, %v1461
        %v1493 = vpack.c.bf16 %v1464, %v1463
        %v1494 = vpack.c.bf16 %v1466, %v1465
        %v1495 = vpack.c.bf16 %v1468, %v1467
        %v1496 = vpack.c.bf16 %v1470, %v1469
        %v1497 = vpack.c.bf16 %v1472, %v1471
        %v1498 = vpack.c.bf16 %v1474, %v1473
        %v1499 = vpack.c.bf16 %v1476, %v1475
        %v1500 = vpack.c.bf16 %v1478, %v1477
        %v1501 = vpack.c.bf16 %v1480, %v1479
        %v1502 = vpack.c.bf16 %v1482, %v1481
        %v1503 = vpack.c.bf16 %v1484, %v1483
        %v1504 = vpack.c.bf16 %v1486, %v1485
        %v1505 = vpack.c.bf16 %v1488, %v1487
        %v1506 = vpack.c.bf16 %v1490, %v1489
        %1507 = vrot.lane.b32.xlu0 %v685, 64
        %v1508 = vpop.permute.xlu0 %1507
        %1509 = vrot.lane.b32.xlu0 %v686, 64
        %v1510 = vpop.permute.xlu0 %1509
        %1511 = vrot.lane.b32.xlu0 %v687, 64
        %v1512 = vpop.permute.xlu0 %1511
        %1513 = vrot.lane.b32.xlu0 %v688, 64
        %v1514 = vpop.permute.xlu0 %1513
        %v1520 = vsel %vm1138, %v1491, 0
        %v1523 = vsel %vm1138, %v1492, 0
        %v1526 = vsel %vm1138, %v1493, 0
        %v1529 = vsel %vm1138, %v1494, 0
        %1531 = vmatprep.subr.bf16.mxu0 0
        %1532 = vmatpush1.bf16.msra.mxu0 %v1508
        %1533 = vmatprep.subr.bf16.mxu0 0
        %1534 = vmatpush1.bf16.msra.mxu0 %v1510
        %1535 = vmatprep.subr.bf16.mxu0 0
        %1536 = vmatpush1.bf16.msra.mxu0 %v1512
        %1537 = vmatprep.subr.bf16.mxu0 0
        %1538 = vmatpush1.bf16.msra.mxu0 %v1514
        %1539 = vmatprep.subr.bf16.mxu0 0
        %1540 = vmatpush1.bf16.msra.mxu0 0
        %1541 = vmatprep.subr.bf16.mxu0 0
        %1542 = vmatpush1.bf16.msra.mxu0 0
        %1543 = vmatprep.subr.bf16.mxu0 0
        %1544 = vmatpush1.bf16.msra.mxu0 0
        %1545 = vmatprep.subr.bf16.mxu0 0
        %1546 = vmatpush1.bf16.msra.mxu0 0
        %1547 = vmatprep.subr.bf16.mxu0 0
        %1548 = vmatpush1.bf16.msra.mxu0 0
        %1549 = vmatprep.subr.bf16.mxu0 0
        %1550 = vmatpush1.bf16.msra.mxu0 0
        %1551 = vmatprep.subr.bf16.mxu0 0
        %1552 = vmatpush1.bf16.msra.mxu0 0
        %1553 = vmatprep.subr.bf16.mxu0 0
        %1554 = vmatpush1.bf16.msra.mxu0 0
        %1555 = vmatprep.subr.bf16.mxu0 0
        %1556 = vmatpush1.bf16.msra.mxu0 0
        %1557 = vmatprep.subr.bf16.mxu0 0
        %1558 = vmatpush1.bf16.msra.mxu0 0
        %1559 = vmatprep.subr.bf16.mxu0 0
        %1560 = vmatpush1.bf16.msra.mxu0 0
        %1561 = vmatprep.subr.bf16.mxu0 0
        %1562 = vmatpush1.bf16.msra.mxu0 0
        %1563 = vmatprep.mubr.bf16.mxu0 0
        %1564 = vmatmul.mubr.bf16.gmra.mrb[0].mxu0 %v1520
        %v1565 = vpop.f32.mrb[0].mxu0
        %v1566 = vadd.f32 0.0, %v1565
        %v1567 = vpop.f32.mrb[0].mxu0
        %v1568 = vpop.f32.mrb[0].mxu0
        %v1569 = vadd.f32 0.0, %v1568
        %v1570 = vpop.f32.mrb[0].mxu0
        %1571 = vmatprep.mubr.bf16.mxu0 0
        %1572 = vmatmul.mubr.bf16.gmra.mrb[0].mxu0 %v1523
        %v1573 = vpop.f32.mrb[0].mxu0
        %v1574 = vadd.f32 0.0, %v1573
        %v1575 = vpop.f32.mrb[0].mxu0
        %v1576 = vpop.f32.mrb[0].mxu0
        %v1577 = vadd.f32 0.0, %v1576
        %v1578 = vpop.f32.mrb[0].mxu0
        %1579 = vmatprep.mubr.bf16.mxu0 0
        %1580 = vmatmul.mubr.bf16.gmra.mrb[0].mxu0 %v1526
        %v1581 = vpop.f32.mrb[0].mxu0
        %v1582 = vadd.f32 0.0, %v1581
        %v1583 = vpop.f32.mrb[0].mxu0
        %v1584 = vpop.f32.mrb[0].mxu0
        %v1585 = vadd.f32 0.0, %v1584
        %v1586 = vpop.f32.mrb[0].mxu0
        %1587 = vmatprep.mubr.bf16.mxu0 0
        %1588 = vmatmul.mubr.bf16.gmra.mrb[0].mxu0 %v1529
        %v1589 = vpop.f32.mrb[0].mxu0
        %v1590 = vadd.f32 0.0, %v1589
        %v1591 = vpop.f32.mrb[0].mxu0
        %v1592 = vpop.f32.mrb[0].mxu0
        %v1593 = vadd.f32 0.0, %v1592
        %v1594 = vpop.f32.mrb[0].mxu0
        %1595 = vdwg.mxu0
        %1596 = vrot.lane.b32.xlu0 %v689, 64
        %v1597 = vpop.permute.xlu0 %1596
        %1598 = vrot.lane.b32.xlu0 %v690, 64
        %v1599 = vpop.permute.xlu0 %1598
        %1600 = vrot.lane.b32.xlu0 %v691, 64
        %v1601 = vpop.permute.xlu0 %1600
        %1602 = vrot.lane.b32.xlu0 %v692, 64
        %v1603 = vpop.permute.xlu0 %1602
        %v1609 = vsel %vm1138, %v1495, 0
        %v1612 = vsel %vm1138, %v1496, 0
        %v1615 = vsel %vm1138, %v1497, 0
        %v1618 = vsel %vm1138, %v1498, 0
        %1620 = vmatprep.subr.bf16.mxu0 0
        %1621 = vmatpush1.bf16.msra.mxu0 %v1597
        %1622 = vmatprep.subr.bf16.mxu0 0
        %1623 = vmatpush1.bf16.msra.mxu0 %v1599
        %1624 = vmatprep.subr.bf16.mxu0 0
        %1625 = vmatpush1.bf16.msra.mxu0 %v1601
        %1626 = vmatprep.subr.bf16.mxu0 0
        %1627 = vmatpush1.bf16.msra.mxu0 %v1603
        %1628 = vmatprep.subr.bf16.mxu0 0
        %1629 = vmatpush1.bf16.msra.mxu0 0
        %1630 = vmatprep.subr.bf16.mxu0 0
        %1631 = vmatpush1.bf16.msra.mxu0 0
        %1632 = vmatprep.subr.bf16.mxu0 0
        %1633 = vmatpush1.bf16.msra.mxu0 0
        %1634 = vmatprep.subr.bf16.mxu0 0
        %1635 = vmatpush1.bf16.msra.mxu0 0
        %1636 = vmatprep.subr.bf16.mxu0 0
        %1637 = vmatpush1.bf16.msra.mxu0 0
        %1638 = vmatprep.subr.bf16.mxu0 0
        %1639 = vmatpush1.bf16.msra.mxu0 0
        %1640 = vmatprep.subr.bf16.mxu0 0
        %1641 = vmatpush1.bf16.msra.mxu0 0
        %1642 = vmatprep.subr.bf16.mxu0 0
        %1643 = vmatpush1.bf16.msra.mxu0 0
        %1644 = vmatprep.subr.bf16.mxu0 0
        %1645 = vmatpush1.bf16.msra.mxu0 0
        %1646 = vmatprep.subr.bf16.mxu0 0
        %1647 = vmatpush1.bf16.msra.mxu0 0
        %1648 = vmatprep.subr.bf16.mxu0 0
        %1649 = vmatpush1.bf16.msra.mxu0 0
        %1650 = vmatprep.subr.bf16.mxu0 0
        %1651 = vmatpush1.bf16.msra.mxu0 0
        %1652 = vmatprep.mubr.bf16.mxu0 0
        %1653 = vmatmul.mubr.bf16.gmra.mrb[0].mxu0 %v1609
        %v1654 = vpop.f32.mrb[0].mxu0
        %v1655 = vadd.f32 0.0, %v1654
        %v1656 = vpop.f32.mrb[0].mxu0
        %v1657 = vpop.f32.mrb[0].mxu0
        %v1658 = vadd.f32 0.0, %v1657
        %v1659 = vpop.f32.mrb[0].mxu0
        %1660 = vmatprep.mubr.bf16.mxu0 0
        %1661 = vmatmul.mubr.bf16.gmra.mrb[0].mxu0 %v1612
        %v1662 = vpop.f32.mrb[0].mxu0
        %v1663 = vadd.f32 0.0, %v1662
        %v1664 = vpop.f32.mrb[0].mxu0
        %v1665 = vpop.f32.mrb[0].mxu0
        %v1666 = vadd.f32 0.0, %v1665
        %v1667 = vpop.f32.mrb[0].mxu0
        %1668 = vmatprep.mubr.bf16.mxu0 0
        %1669 = vmatmul.mubr.bf16.gmra.mrb[0].mxu0 %v1615
        %v1670 = vpop.f32.mrb[0].mxu0
        %v1671 = vadd.f32 0.0, %v1670
        %v1672 = vpop.f32.mrb[0].mxu0
        %v1673 = vpop.f32.mrb[0].mxu0
        %v1674 = vadd.f32 0.0, %v1673
        %v1675 = vpop.f32.mrb[0].mxu0
        %1676 = vmatprep.mubr.bf16.mxu0 0
        %1677 = vmatmul.mubr.bf16.gmra.mrb[0].mxu0 %v1618
        %v1678 = vpop.f32.mrb[0].mxu0
        %v1679 = vadd.f32 0.0, %v1678
        %v1680 = vpop.f32.mrb[0].mxu0
        %v1681 = vpop.f32.mrb[0].mxu0
        %v1682 = vadd.f32 0.0, %v1681
        %v1683 = vpop.f32.mrb[0].mxu0
        %1684 = vdwg.mxu0
        %1685 = vrot.lane.b32.xlu0 %v693, 64
        %v1686 = vpop.permute.xlu0 %1685
        %1687 = vrot.lane.b32.xlu0 %v694, 64
        %v1688 = vpop.permute.xlu0 %1687
        %1689 = vrot.lane.b32.xlu0 %v695, 64
        %v1690 = vpop.permute.xlu0 %1689
        %1691 = vrot.lane.b32.xlu0 %v696, 64
        %v1692 = vpop.permute.xlu0 %1691
        %v1698 = vsel %vm1138, %v1499, 0
        %v1701 = vsel %vm1138, %v1500, 0
        %v1704 = vsel %vm1138, %v1501, 0
        %v1707 = vsel %vm1138, %v1502, 0
        %1709 = vmatprep.subr.bf16.mxu0 0
        %1710 = vmatpush1.bf16.msra.mxu0 %v1686
        %1711 = vmatprep.subr.bf16.mxu0 0
        %1712 = vmatpush1.bf16.msra.mxu0 %v1688
        %1713 = vmatprep.subr.bf16.mxu0 0
        %1714 = vmatpush1.bf16.msra.mxu0 %v1690
        %1715 = vmatprep.subr.bf16.mxu0 0
        %1716 = vmatpush1.bf16.msra.mxu0 %v1692
        %1717 = vmatprep.subr.bf16.mxu0 0
        %1718 = vmatpush1.bf16.msra.mxu0 0
        %1719 = vmatprep.subr.bf16.mxu0 0
        %1720 = vmatpush1.bf16.msra.mxu0 0
        %1721 = vmatprep.subr.bf16.mxu0 0
        %1722 = vmatpush1.bf16.msra.mxu0 0
        %1723 = vmatprep.subr.bf16.mxu0 0
        %1724 = vmatpush1.bf16.msra.mxu0 0
        %1725 = vmatprep.subr.bf16.mxu0 0
        %1726 = vmatpush1.bf16.msra.mxu0 0
        %1727 = vmatprep.subr.bf16.mxu0 0
        %1728 = vmatpush1.bf16.msra.mxu0 0
        %1729 = vmatprep.subr.bf16.mxu0 0
        %1730 = vmatpush1.bf16.msra.mxu0 0
        %1731 = vmatprep.subr.bf16.mxu0 0
        %1732 = vmatpush1.bf16.msra.mxu0 0
        %1733 = vmatprep.subr.bf16.mxu0 0
        %1734 = vmatpush1.bf16.msra.mxu0 0
        %1735 = vmatprep.subr.bf16.mxu0 0
        %1736 = vmatpush1.bf16.msra.mxu0 0
        %1737 = vmatprep.subr.bf16.mxu0 0
        %1738 = vmatpush1.bf16.msra.mxu0 0
        %1739 = vmatprep.subr.bf16.mxu0 0
        %1740 = vmatpush1.bf16.msra.mxu0 0
        %1741 = vmatprep.mubr.bf16.mxu0 0
        %1742 = vmatmul.mubr.bf16.gmra.mrb[0].mxu0 %v1698
        %v1743 = vpop.f32.mrb[0].mxu0
        %v1744 = vadd.f32 0.0, %v1743
        %v1745 = vpop.f32.mrb[0].mxu0
        %v1746 = vpop.f32.mrb[0].mxu0
        %v1747 = vadd.f32 0.0, %v1746
        %v1748 = vpop.f32.mrb[0].mxu0
        %1749 = vmatprep.mubr.bf16.mxu0 0
        %1750 = vmatmul.mubr.bf16.gmra.mrb[0].mxu0 %v1701
        %v1751 = vpop.f32.mrb[0].mxu0
        %v1752 = vadd.f32 0.0, %v1751
        %v1753 = vpop.f32.mrb[0].mxu0
        %v1754 = vpop.f32.mrb[0].mxu0
        %v1755 = vadd.f32 0.0, %v1754
        %v1756 = vpop.f32.mrb[0].mxu0
        %1757 = vmatprep.mubr.bf16.mxu0 0
        %1758 = vmatmul.mubr.bf16.gmra.mrb[0].mxu0 %v1704
        %v1759 = vpop.f32.mrb[0].mxu0
        %v1760 = vadd.f32 0.0, %v1759
        %v1761 = vpop.f32.mrb[0].mxu0
        %v1762 = vpop.f32.mrb[0].mxu0
        %v1763 = vadd.f32 0.0, %v1762
        %v1764 = vpop.f32.mrb[0].mxu0
        %1765 = vmatprep.mubr.bf16.mxu0 0
        %1766 = vmatmul.mubr.bf16.gmra.mrb[0].mxu0 %v1707
        %v1767 = vpop.f32.mrb[0].mxu0
        %v1768 = vadd.f32 0.0, %v1767
        %v1769 = vpop.f32.mrb[0].mxu0
        %v1770 = vpop.f32.mrb[0].mxu0
        %v1771 = vadd.f32 0.0, %v1770
        %v1772 = vpop.f32.mrb[0].mxu0
        %1773 = vdwg.mxu0
        %1774 = vrot.lane.b32.xlu0 %v697, 64
        %v1775 = vpop.permute.xlu0 %1774
        %1776 = vrot.lane.b32.xlu0 %v698, 64
        %v1777 = vpop.permute.xlu0 %1776
        %1778 = vrot.lane.b32.xlu0 %v699, 64
        %v1779 = vpop.permute.xlu0 %1778
        %1780 = vrot.lane.b32.xlu0 %v700, 64
        %v1781 = vpop.permute.xlu0 %1780
        %v1787 = vsel %vm1138, %v1503, 0
        %v1790 = vsel %vm1138, %v1504, 0
        %v1793 = vsel %vm1138, %v1505, 0
        %v1796 = vsel %vm1138, %v1506, 0
        %1798 = vmatprep.subr.bf16.mxu0 0
        %1799 = vmatpush1.bf16.msra.mxu0 %v1775
        %1800 = vmatprep.subr.bf16.mxu0 0
        %1801 = vmatpush1.bf16.msra.mxu0 %v1777
        %1802 = vmatprep.subr.bf16.mxu0 0
        %1803 = vmatpush1.bf16.msra.mxu0 %v1779
        %1804 = vmatprep.subr.bf16.mxu0 0
        %1805 = vmatpush1.bf16.msra.mxu0 %v1781
        %1806 = vmatprep.subr.bf16.mxu0 0
        %1807 = vmatpush1.bf16.msra.mxu0 0
        %1808 = vmatprep.subr.bf16.mxu0 0
        %1809 = vmatpush1.bf16.msra.mxu0 0
        %1810 = vmatprep.subr.bf16.mxu0 0
        %1811 = vmatpush1.bf16.msra.mxu0 0
        %1812 = vmatprep.subr.bf16.mxu0 0
        %1813 = vmatpush1.bf16.msra.mxu0 0
        %1814 = vmatprep.subr.bf16.mxu0 0
        %1815 = vmatpush1.bf16.msra.mxu0 0
        %1816 = vmatprep.subr.bf16.mxu0 0
        %1817 = vmatpush1.bf16.msra.mxu0 0
        %1818 = vmatprep.subr.bf16.mxu0 0
        %1819 = vmatpush1.bf16.msra.mxu0 0
        %1820 = vmatprep.subr.bf16.mxu0 0
        %1821 = vmatpush1.bf16.msra.mxu0 0
        %1822 = vmatprep.subr.bf16.mxu0 0
        %1823 = vmatpush1.bf16.msra.mxu0 0
        %1824 = vmatprep.subr.bf16.mxu0 0
        %1825 = vmatpush1.bf16.msra.mxu0 0
        %1826 = vmatprep.subr.bf16.mxu0 0
        %1827 = vmatpush1.bf16.msra.mxu0 0
        %1828 = vmatprep.subr.bf16.mxu0 0
        %1829 = vmatpush1.bf16.msra.mxu0 0
        %1830 = vmatprep.mubr.bf16.mxu0 0
        %1831 = vmatmul.mubr.bf16.gmra.mrb[0].mxu0 %v1787
        %v1832 = vpop.f32.mrb[0].mxu0
        %v1833 = vadd.f32 0.0, %v1832
        %v1834 = vpop.f32.mrb[0].mxu0
        %v1835 = vpop.f32.mrb[0].mxu0
        %v1836 = vadd.f32 0.0, %v1835
        %v1837 = vpop.f32.mrb[0].mxu0
        %1838 = vmatprep.mubr.bf16.mxu0 0
        %1839 = vmatmul.mubr.bf16.gmra.mrb[0].mxu0 %v1790
        %v1840 = vpop.f32.mrb[0].mxu0
        %v1841 = vadd.f32 0.0, %v1840
        %v1842 = vpop.f32.mrb[0].mxu0
        %v1843 = vpop.f32.mrb[0].mxu0
        %v1844 = vadd.f32 0.0, %v1843
        %v1845 = vpop.f32.mrb[0].mxu0
        %1846 = vmatprep.mubr.bf16.mxu0 0
        %1847 = vmatmul.mubr.bf16.gmra.mrb[0].mxu0 %v1793
        %v1848 = vpop.f32.mrb[0].mxu0
        %v1849 = vadd.f32 0.0, %v1848
        %v1850 = vpop.f32.mrb[0].mxu0
        %v1851 = vpop.f32.mrb[0].mxu0
        %v1852 = vadd.f32 0.0, %v1851
        %v1853 = vpop.f32.mrb[0].mxu0
        %1854 = vmatprep.mubr.bf16.mxu0 0
        %1855 = vmatmul.mubr.bf16.gmra.mrb[0].mxu0 %v1796
        %v1856 = vpop.f32.mrb[0].mxu0
        %v1857 = vadd.f32 0.0, %v1856
        %v1858 = vpop.f32.mrb[0].mxu0
        %v1859 = vpop.f32.mrb[0].mxu0
        %v1860 = vadd.f32 0.0, %v1859
        %v1861 = vpop.f32.mrb[0].mxu0
        %1862 = vdwg.mxu0
        %v1863 = vpack.c.bf16 %v1569, %v1566
        %v1864 = vpack.c.bf16 %v1577, %v1574
        %v1865 = vpack.c.bf16 %v1585, %v1582
        %v1866 = vpack.c.bf16 %v1593, %v1590
        %v1867 = vpack.c.bf16 %v1658, %v1655
        %v1868 = vpack.c.bf16 %v1666, %v1663
        %v1869 = vpack.c.bf16 %v1674, %v1671
        %v1870 = vpack.c.bf16 %v1682, %v1679
        %v1871 = vpack.c.bf16 %v1747, %v1744
        %v1872 = vpack.c.bf16 %v1755, %v1752
        %v1873 = vpack.c.bf16 %v1763, %v1760
        %v1874 = vpack.c.bf16 %v1771, %v1768
        %v1875 = vpack.c.bf16 %v1836, %v1833
        %v1876 = vpack.c.bf16 %v1844, %v1841
        %v1877 = vpack.c.bf16 %v1852, %v1849
        %v1878 = vpack.c.bf16 %v1860, %v1857
        %v1879 = vld [vmem:[%s3] sm:$0xf]
        %1880 = vrot.lane.b32.xlu0 %v685, 120
        %v1881 = vpop.permute.xlu0 %1880
        %1882 = vrot.lane.b32.xlu0 %v686, 120
        %v1883 = vpop.permute.xlu0 %1882
        %1884 = vrot.lane.b32.xlu0 %v687, 120
        %v1885 = vpop.permute.xlu0 %1884
        %1886 = vrot.lane.b32.xlu0 %v688, 120
        %v1887 = vpop.permute.xlu0 %1886
        %1888 = vrot.lane.b32.xlu0 %v685, 88
        %v1889 = vpop.permute.xlu0 %1888
        %1890 = vrot.lane.b32.xlu0 %v686, 88
        %v1891 = vpop.permute.xlu0 %1890
        %1892 = vrot.lane.b32.xlu0 %v687, 88
        %v1893 = vpop.permute.xlu0 %1892
        %1894 = vrot.lane.b32.xlu0 %v688, 88
        %v1895 = vpop.permute.xlu0 %1894
        %v1897 = vsel %vm713, %v1881, 0
        %v1900 = vsel %vm713, %v1883, 0
        %v1903 = vsel %vm713, %v1885, 0
        %v1906 = vsel %vm713, %v1887, 0
        %v1909 = vsel %vm713, %v1889, 0
        %v1912 = vsel %vm713, %v1891, 0
        %v1915 = vsel %vm713, %v1893, 0
        %v1918 = vsel %vm713, %v1895, 0
        %1920 = vmatprep.subr.bf16.mxu0 0
        %1921 = vmatpush1.bf16.xpose.msra.mxu0 %v1909
        %1922 = vmatprep.subr.bf16.mxu0 0
        %1923 = vmatpush1.bf16.xpose.msra.mxu0 %v1912
        %1924 = vmatprep.subr.bf16.mxu0 0
        %1925 = vmatpush1.bf16.xpose.msra.mxu0 %v1915
        %1926 = vmatprep.subr.bf16.mxu0 0
        %1927 = vmatpush1.bf16.xpose.msra.mxu0 %v1918
        %1928 = vmatprep.subr.bf16.mxu0 0
        %1929 = vmatpush1.bf16.xpose.msra.mxu0 0
        %1930 = vmatprep.subr.bf16.mxu0 0
        %1931 = vmatpush1.bf16.xpose.msra.mxu0 0
        %1932 = vmatprep.subr.bf16.mxu0 0
        %1933 = vmatpush1.bf16.xpose.msra.mxu0 0
        %1934 = vmatprep.subr.bf16.mxu0 0
        %1935 = vmatpush1.bf16.xpose.msra.mxu0 0
        %1936 = vmatprep.subr.bf16.mxu0 0
        %1937 = vmatpush1.bf16.xpose.msra.mxu0 0
        %1938 = vmatprep.subr.bf16.mxu0 0
        %1939 = vmatpush1.bf16.xpose.msra.mxu0 0
        %1940 = vmatprep.subr.bf16.mxu0 0
        %1941 = vmatpush1.bf16.xpose.msra.mxu0 0
        %1942 = vmatprep.subr.bf16.mxu0 0
        %1943 = vmatpush1.bf16.xpose.msra.mxu0 0
        %1944 = vmatprep.subr.bf16.mxu0 0
        %1945 = vmatpush1.bf16.xpose.msra.mxu0 0
        %1946 = vmatprep.subr.bf16.mxu0 0
        %1947 = vmatpush1.bf16.xpose.msra.mxu0 0
        %1948 = vmatprep.subr.bf16.mxu0 0
        %1949 = vmatpush1.bf16.xpose.msra.mxu0 0
        %1950 = vmatprep.subr.bf16.mxu0 0
        %1951 = vmatpush1.bf16.xpose.msra.mxu0 0
        %1952 = vmatprep.mubr.bf16.mxu0 0
        %1953 = vmatmul.mubr.bf16.gmra.mrb[0].mxu0 %v1897
        %v1954 = vpop.f32.mrb[0].mxu0
        %v1955 = vadd.f32 0.0, %v1954
        %v1956 = vpop.f32.mrb[0].mxu0
        %v1957 = vpop.f32.mrb[0].mxu0
        %v1958 = vadd.f32 0.0, %v1957
        %v1959 = vpop.f32.mrb[0].mxu0
        %1960 = vmatprep.mubr.bf16.mxu0 0
        %1961 = vmatmul.mubr.bf16.gmra.mrb[0].mxu0 %v1900
        %v1962 = vpop.f32.mrb[0].mxu0
        %v1963 = vadd.f32 0.0, %v1962
        %v1964 = vpop.f32.mrb[0].mxu0
        %v1965 = vpop.f32.mrb[0].mxu0
        %v1966 = vadd.f32 0.0, %v1965
        %v1967 = vpop.f32.mrb[0].mxu0
        %1968 = vmatprep.mubr.bf16.mxu0 0
        %1969 = vmatmul.mubr.bf16.gmra.mrb[0].mxu0 %v1903
        %v1970 = vpop.f32.mrb[0].mxu0
        %v1971 = vadd.f32 0.0, %v1970
        %v1972 = vpop.f32.mrb[0].mxu0
        %v1973 = vpop.f32.mrb[0].mxu0
        %v1974 = vadd.f32 0.0, %v1973
        %v1975 = vpop.f32.mrb[0].mxu0
        %1976 = vmatprep.mubr.bf16.mxu0 0
        %1977 = vmatmul.mubr.bf16.gmra.mrb[0].mxu0 %v1906
        %v1978 = vpop.f32.mrb[0].mxu0
        %v1979 = vadd.f32 0.0, %v1978
        %v1980 = vpop.f32.mrb[0].mxu0
        %v1981 = vpop.f32.mrb[0].mxu0
        %v1982 = vadd.f32 0.0, %v1981
        %v1983 = vpop.f32.mrb[0].mxu0
        %1984 = vdwg.mxu0
        %1985 = vrot.lane.b32.xlu0 %v689, 120
        %v1986 = vpop.permute.xlu0 %1985
        %1987 = vrot.lane.b32.xlu0 %v690, 120
        %v1988 = vpop.permute.xlu0 %1987
        %1989 = vrot.lane.b32.xlu0 %v691, 120
        %v1990 = vpop.permute.xlu0 %1989
        %1991 = vrot.lane.b32.xlu0 %v692, 120
        %v1992 = vpop.permute.xlu0 %1991
        %1993 = vrot.lane.b32.xlu0 %v689, 88
        %v1994 = vpop.permute.xlu0 %1993
        %1995 = vrot.lane.b32.xlu0 %v690, 88
        %v1996 = vpop.permute.xlu0 %1995
        %1997 = vrot.lane.b32.xlu0 %v691, 88
        %v1998 = vpop.permute.xlu0 %1997
        %1999 = vrot.lane.b32.xlu0 %v692, 88
        %v2000 = vpop.permute.xlu0 %1999
        %v2002 = vsel %vm713, %v1986, 0
        %v2005 = vsel %vm713, %v1988, 0
        %v2008 = vsel %vm713, %v1990, 0
        %v2011 = vsel %vm713, %v1992, 0
        %v2014 = vsel %vm713, %v1994, 0
        %v2017 = vsel %vm713, %v1996, 0
        %v2020 = vsel %vm713, %v1998, 0
        %v2023 = vsel %vm713, %v2000, 0
        %2025 = vmatprep.subr.bf16.mxu0 0
        %2026 = vmatpush1.bf16.xpose.msra.mxu0 %v2014
        %2027 = vmatprep.subr.bf16.mxu0 0
        %2028 = vmatpush1.bf16.xpose.msra.mxu0 %v2017
        %2029 = vmatprep.subr.bf16.mxu0 0
        %2030 = vmatpush1.bf16.xpose.msra.mxu0 %v2020
        %2031 = vmatprep.subr.bf16.mxu0 0
        %2032 = vmatpush1.bf16.xpose.msra.mxu0 %v2023
        %2033 = vmatprep.subr.bf16.mxu0 0
        %2034 = vmatpush1.bf16.xpose.msra.mxu0 0
        %2035 = vmatprep.subr.bf16.mxu0 0
        %2036 = vmatpush1.bf16.xpose.msra.mxu0 0
        %2037 = vmatprep.subr.bf16.mxu0 0
        %2038 = vmatpush1.bf16.xpose.msra.mxu0 0
        %2039 = vmatprep.subr.bf16.mxu0 0
        %2040 = vmatpush1.bf16.xpose.msra.mxu0 0
        %2041 = vmatprep.subr.bf16.mxu0 0
        %2042 = vmatpush1.bf16.xpose.msra.mxu0 0
        %2043 = vmatprep.subr.bf16.mxu0 0
        %2044 = vmatpush1.bf16.xpose.msra.mxu0 0
        %2045 = vmatprep.subr.bf16.mxu0 0
        %2046 = vmatpush1.bf16.xpose.msra.mxu0 0
        %2047 = vmatprep.subr.bf16.mxu0 0
        %2048 = vmatpush1.bf16.xpose.msra.mxu0 0
        %2049 = vmatprep.subr.bf16.mxu0 0
        %2050 = vmatpush1.bf16.xpose.msra.mxu0 0
        %2051 = vmatprep.subr.bf16.mxu0 0
        %2052 = vmatpush1.bf16.xpose.msra.mxu0 0
        %2053 = vmatprep.subr.bf16.mxu0 0
        %2054 = vmatpush1.bf16.xpose.msra.mxu0 0
        %2055 = vmatprep.subr.bf16.mxu0 0
        %2056 = vmatpush1.bf16.xpose.msra.mxu0 0
        %2057 = vmatprep.mubr.bf16.mxu0 0
        %2058 = vmatmul.mubr.bf16.gmra.mrb[0].mxu0 %v2002
        %v2059 = vpop.f32.mrb[0].mxu0
        %v2060 = vadd.f32 0.0, %v2059
        %v2061 = vpop.f32.mrb[0].mxu0
        %v2062 = vpop.f32.mrb[0].mxu0
        %v2063 = vadd.f32 0.0, %v2062
        %v2064 = vpop.f32.mrb[0].mxu0
        %2065 = vmatprep.mubr.bf16.mxu0 0
        %2066 = vmatmul.mubr.bf16.gmra.mrb[0].mxu0 %v2005
        %v2067 = vpop.f32.mrb[0].mxu0
        %v2068 = vadd.f32 0.0, %v2067
        %v2069 = vpop.f32.mrb[0].mxu0
        %v2070 = vpop.f32.mrb[0].mxu0
        %v2071 = vadd.f32 0.0, %v2070
        %v2072 = vpop.f32.mrb[0].mxu0
        %2073 = vmatprep.mubr.bf16.mxu0 0
        %2074 = vmatmul.mubr.bf16.gmra.mrb[0].mxu0 %v2008
        %v2075 = vpop.f32.mrb[0].mxu0
        %v2076 = vadd.f32 0.0, %v2075
        %v2077 = vpop.f32.mrb[0].mxu0
        %v2078 = vpop.f32.mrb[0].mxu0
        %v2079 = vadd.f32 0.0, %v2078
        %v2080 = vpop.f32.mrb[0].mxu0
        %2081 = vmatprep.mubr.bf16.mxu0 0
        %2082 = vmatmul.mubr.bf16.gmra.mrb[0].mxu0 %v2011
        %v2083 = vpop.f32.mrb[0].mxu0
        %v2084 = vadd.f32 0.0, %v2083
        %v2085 = vpop.f32.mrb[0].mxu0
        %v2086 = vpop.f32.mrb[0].mxu0
        %v2087 = vadd.f32 0.0, %v2086
        %v2088 = vpop.f32.mrb[0].mxu0
        %2089 = vdwg.mxu0
        %2090 = vrot.lane.b32.xlu0 %v693, 120
        %v2091 = vpop.permute.xlu0 %2090
        %2092 = vrot.lane.b32.xlu0 %v694, 120
        %v2093 = vpop.permute.xlu0 %2092
        %2094 = vrot.lane.b32.xlu0 %v695, 120
        %v2095 = vpop.permute.xlu0 %2094
        %2096 = vrot.lane.b32.xlu0 %v696, 120
        %v2097 = vpop.permute.xlu0 %2096
        %2098 = vrot.lane.b32.xlu0 %v693, 88
        %v2099 = vpop.permute.xlu0 %2098
        %2100 = vrot.lane.b32.xlu0 %v694, 88
        %v2101 = vpop.permute.xlu0 %2100
        %2102 = vrot.lane.b32.xlu0 %v695, 88
        %v2103 = vpop.permute.xlu0 %2102
        %2104 = vrot.lane.b32.xlu0 %v696, 88
        %v2105 = vpop.permute.xlu0 %2104
        %v2107 = vsel %vm713, %v2091, 0
        %v2110 = vsel %vm713, %v2093, 0
        %v2113 = vsel %vm713, %v2095, 0
        %v2116 = vsel %vm713, %v2097, 0
        %v2119 = vsel %vm713, %v2099, 0
        %v2122 = vsel %vm713, %v2101, 0
        %v2125 = vsel %vm713, %v2103, 0
        %v2128 = vsel %vm713, %v2105, 0
        %2130 = vmatprep.subr.bf16.mxu0 0
        %2131 = vmatpush1.bf16.xpose.msra.mxu0 %v2119
        %2132 = vmatprep.subr.bf16.mxu0 0
        %2133 = vmatpush1.bf16.xpose.msra.mxu0 %v2122
        %2134 = vmatprep.subr.bf16.mxu0 0
        %2135 = vmatpush1.bf16.xpose.msra.mxu0 %v2125
        %2136 = vmatprep.subr.bf16.mxu0 0
        %2137 = vmatpush1.bf16.xpose.msra.mxu0 %v2128
        %2138 = vmatprep.subr.bf16.mxu0 0
        %2139 = vmatpush1.bf16.xpose.msra.mxu0 0
        %2140 = vmatprep.subr.bf16.mxu0 0
        %2141 = vmatpush1.bf16.xpose.msra.mxu0 0
        %2142 = vmatprep.subr.bf16.mxu0 0
        %2143 = vmatpush1.bf16.xpose.msra.mxu0 0
        %2144 = vmatprep.subr.bf16.mxu0 0
        %2145 = vmatpush1.bf16.xpose.msra.mxu0 0
        %2146 = vmatprep.subr.bf16.mxu0 0
        %2147 = vmatpush1.bf16.xpose.msra.mxu0 0
        %2148 = vmatprep.subr.bf16.mxu0 0
        %2149 = vmatpush1.bf16.xpose.msra.mxu0 0
        %2150 = vmatprep.subr.bf16.mxu0 0
        %2151 = vmatpush1.bf16.xpose.msra.mxu0 0
        %2152 = vmatprep.subr.bf16.mxu0 0
        %2153 = vmatpush1.bf16.xpose.msra.mxu0 0
        %2154 = vmatprep.subr.bf16.mxu0 0
        %2155 = vmatpush1.bf16.xpose.msra.mxu0 0
        %2156 = vmatprep.subr.bf16.mxu0 0
        %2157 = vmatpush1.bf16.xpose.msra.mxu0 0
        %2158 = vmatprep.subr.bf16.mxu0 0
        %2159 = vmatpush1.bf16.xpose.msra.mxu0 0
        %2160 = vmatprep.subr.bf16.mxu0 0
        %2161 = vmatpush1.bf16.xpose.msra.mxu0 0
        %2162 = vmatprep.mubr.bf16.mxu0 0
        %2163 = vmatmul.mubr.bf16.gmra.mrb[0].mxu0 %v2107
        %v2164 = vpop.f32.mrb[0].mxu0
        %v2165 = vadd.f32 0.0, %v2164
        %v2166 = vpop.f32.mrb[0].mxu0
        %v2167 = vpop.f32.mrb[0].mxu0
        %v2168 = vadd.f32 0.0, %v2167
        %v2169 = vpop.f32.mrb[0].mxu0
        %2170 = vmatprep.mubr.bf16.mxu0 0
        %2171 = vmatmul.mubr.bf16.gmra.mrb[0].mxu0 %v2110
        %v2172 = vpop.f32.mrb[0].mxu0
        %v2173 = vadd.f32 0.0, %v2172
        %v2174 = vpop.f32.mrb[0].mxu0
        %v2175 = vpop.f32.mrb[0].mxu0
        %v2176 = vadd.f32 0.0, %v2175
        %v2177 = vpop.f32.mrb[0].mxu0
        %2178 = vmatprep.mubr.bf16.mxu0 0
        %2179 = vmatmul.mubr.bf16.gmra.mrb[0].mxu0 %v2113
        %v2180 = vpop.f32.mrb[0].mxu0
        %v2181 = vadd.f32 0.0, %v2180
        %v2182 = vpop.f32.mrb[0].mxu0
        %v2183 = vpop.f32.mrb[0].mxu0
        %v2184 = vadd.f32 0.0, %v2183
        %v2185 = vpop.f32.mrb[0].mxu0
        %2186 = vmatprep.mubr.bf16.mxu0 0
        %2187 = vmatmul.mubr.bf16.gmra.mrb[0].mxu0 %v2116
        %v2188 = vpop.f32.mrb[0].mxu0
        %v2189 = vadd.f32 0.0, %v2188
        %v2190 = vpop.f32.mrb[0].mxu0
        %v2191 = vpop.f32.mrb[0].mxu0
        %v2192 = vadd.f32 0.0, %v2191
        %v2193 = vpop.f32.mrb[0].mxu0
        %2194 = vdwg.mxu0
        %2195 = vrot.lane.b32.xlu0 %v697, 120
        %v2196 = vpop.permute.xlu0 %2195
        %2197 = vrot.lane.b32.xlu0 %v698, 120
        %v2198 = vpop.permute.xlu0 %2197
        %2199 = vrot.lane.b32.xlu0 %v699, 120
        %v2200 = vpop.permute.xlu0 %2199
        %2201 = vrot.lane.b32.xlu0 %v700, 120
        %v2202 = vpop.permute.xlu0 %2201
        %2203 = vrot.lane.b32.xlu0 %v697, 88
        %v2204 = vpop.permute.xlu0 %2203
        %2205 = vrot.lane.b32.xlu0 %v698, 88
        %v2206 = vpop.permute.xlu0 %2205
        %2207 = vrot.lane.b32.xlu0 %v699, 88
        %v2208 = vpop.permute.xlu0 %2207
        %2209 = vrot.lane.b32.xlu0 %v700, 88
        %v2210 = vpop.permute.xlu0 %2209
        %v2212 = vsel %vm713, %v2196, 0
        %v2215 = vsel %vm713, %v2198, 0
        %v2218 = vsel %vm713, %v2200, 0
        %v2221 = vsel %vm713, %v2202, 0
        %v2224 = vsel %vm713, %v2204, 0
        %v2227 = vsel %vm713, %v2206, 0
        %v2230 = vsel %vm713, %v2208, 0
        %v2233 = vsel %vm713, %v2210, 0
        %2235 = vmatprep.subr.bf16.mxu0 0
        %2236 = vmatpush1.bf16.xpose.msra.mxu0 %v2224
        %2237 = vmatprep.subr.bf16.mxu0 0
        %2238 = vmatpush1.bf16.xpose.msra.mxu0 %v2227
        %2239 = vmatprep.subr.bf16.mxu0 0
        %2240 = vmatpush1.bf16.xpose.msra.mxu0 %v2230
        %2241 = vmatprep.subr.bf16.mxu0 0
        %2242 = vmatpush1.bf16.xpose.msra.mxu0 %v2233
        %2243 = vmatprep.subr.bf16.mxu0 0
        %2244 = vmatpush1.bf16.xpose.msra.mxu0 0
        %2245 = vmatprep.subr.bf16.mxu0 0
        %2246 = vmatpush1.bf16.xpose.msra.mxu0 0
        %2247 = vmatprep.subr.bf16.mxu0 0
        %2248 = vmatpush1.bf16.xpose.msra.mxu0 0
        %2249 = vmatprep.subr.bf16.mxu0 0
        %2250 = vmatpush1.bf16.xpose.msra.mxu0 0
        %2251 = vmatprep.subr.bf16.mxu0 0
        %2252 = vmatpush1.bf16.xpose.msra.mxu0 0
        %2253 = vmatprep.subr.bf16.mxu0 0
        %2254 = vmatpush1.bf16.xpose.msra.mxu0 0
        %2255 = vmatprep.subr.bf16.mxu0 0
        %2256 = vmatpush1.bf16.xpose.msra.mxu0 0
        %2257 = vmatprep.subr.bf16.mxu0 0
        %2258 = vmatpush1.bf16.xpose.msra.mxu0 0
        %2259 = vmatprep.subr.bf16.mxu0 0
        %2260 = vmatpush1.bf16.xpose.msra.mxu0 0
        %2261 = vmatprep.subr.bf16.mxu0 0
        %2262 = vmatpush1.bf16.xpose.msra.mxu0 0
        %2263 = vmatprep.subr.bf16.mxu0 0
        %2264 = vmatpush1.bf16.xpose.msra.mxu0 0
        %2265 = vmatprep.subr.bf16.mxu0 0
        %2266 = vmatpush1.bf16.xpose.msra.mxu0 0
        %2267 = vmatprep.mubr.bf16.mxu0 0
        %2268 = vmatmul.mubr.bf16.gmra.mrb[0].mxu0 %v2212
        %v2269 = vpop.f32.mrb[0].mxu0
        %v2270 = vadd.f32 0.0, %v2269
        %v2271 = vpop.f32.mrb[0].mxu0
        %v2272 = vpop.f32.mrb[0].mxu0
        %v2273 = vadd.f32 0.0, %v2272
        %v2274 = vpop.f32.mrb[0].mxu0
        %2275 = vmatprep.mubr.bf16.mxu0 0
        %2276 = vmatmul.mubr.bf16.gmra.mrb[0].mxu0 %v2215
        %v2277 = vpop.f32.mrb[0].mxu0
        %v2278 = vadd.f32 0.0, %v2277
        %v2279 = vpop.f32.mrb[0].mxu0
        %v2280 = vpop.f32.mrb[0].mxu0
        %v2281 = vadd.f32 0.0, %v2280
        %v2282 = vpop.f32.mrb[0].mxu0
        %2283 = vmatprep.mubr.bf16.mxu0 0
        %2284 = vmatmul.mubr.bf16.gmra.mrb[0].mxu0 %v2218
        %v2285 = vpop.f32.mrb[0].mxu0
        %v2286 = vadd.f32 0.0, %v2285
        %v2287 = vpop.f32.mrb[0].mxu0
        %v2288 = vpop.f32.mrb[0].mxu0
        %v2289 = vadd.f32 0.0, %v2288
        %v2290 = vpop.f32.mrb[0].mxu0
        %2291 = vmatprep.mubr.bf16.mxu0 0
        %2292 = vmatmul.mubr.bf16.gmra.mrb[0].mxu0 %v2221
        %v2293 = vpop.f32.mrb[0].mxu0
        %v2294 = vadd.f32 0.0, %v2293
        %v2295 = vpop.f32.mrb[0].mxu0
        %v2296 = vpop.f32.mrb[0].mxu0
        %v2297 = vadd.f32 0.0, %v2296
        %v2298 = vpop.f32.mrb[0].mxu0
        %2299 = vdwg.mxu0
        %v2300 = vadd.f32 %v1955, %v629
        %v2301 = vadd.f32 %v1958, %v630
        %v2302 = vadd.f32 %v1963, %v631
        %v2303 = vadd.f32 %v1966, %v632
        %v2304 = vadd.f32 %v1971, %v633
        %v2305 = vadd.f32 %v1974, %v634
        %v2306 = vadd.f32 %v1979, %v635
        %v2307 = vadd.f32 %v1982, %v636
        %v2308 = vadd.f32 %v2060, %v661
        %v2309 = vadd.f32 %v2063, %v662
        %v2310 = vadd.f32 %v2068, %v663
        %v2311 = vadd.f32 %v2071, %v664
        %v2312 = vadd.f32 %v2076, %v665
        %v2313 = vadd.f32 %v2079, %v666
        %v2314 = vadd.f32 %v2084, %v667
        %v2315 = vadd.f32 %v2087, %v668
        %v2316 = vadd.f32 %v2165, %v629
        %v2317 = vadd.f32 %v2168, %v630
        %v2318 = vadd.f32 %v2173, %v631
        %v2319 = vadd.f32 %v2176, %v632
        %v2320 = vadd.f32 %v2181, %v633
        %v2321 = vadd.f32 %v2184, %v634
        %v2322 = vadd.f32 %v2189, %v635
        %v2323 = vadd.f32 %v2192, %v636
        %v2324 = vadd.f32 %v2270, %v661
        %v2325 = vadd.f32 %v2273, %v662
        %v2326 = vadd.f32 %v2278, %v663
        %v2327 = vadd.f32 %v2281, %v664
        %v2328 = vadd.f32 %v2286, %v665
        %v2329 = vadd.f32 %v2289, %v666
        %v2330 = vadd.f32 %v2294, %v667
        %v2331 = vadd.f32 %v2297, %v668
        %v2332 = vsel %vm1138, %v2300, -inf
        %2333 = vmax.xlane.f32.xlu0 %v2332
        %v2334 = vpop.xlane.xlu0 %2333
        %v2335 = vsel %vm1138, %v2301, -inf
        %2336 = vmax.xlane.f32.xlu0 %v2335
        %v2337 = vpop.xlane.xlu0 %2336
        %v2338 = vsel %vm1138, %v2302, -inf
        %2339 = vmax.xlane.f32.xlu0 %v2338
        %v2340 = vpop.xlane.xlu0 %2339
        %v2341 = vsel %vm1138, %v2303, -inf
        %2342 = vmax.xlane.f32.xlu0 %v2341
        %v2343 = vpop.xlane.xlu0 %2342
        %v2344 = vsel %vm1138, %v2304, -inf
        %2345 = vmax.xlane.f32.xlu0 %v2344
        %v2346 = vpop.xlane.xlu0 %2345
        %v2347 = vsel %vm1138, %v2305, -inf
        %2348 = vmax.xlane.f32.xlu0 %v2347
        %v2349 = vpop.xlane.xlu0 %2348
        %v2350 = vsel %vm1138, %v2306, -inf
        %2351 = vmax.xlane.f32.xlu0 %v2350
        %v2352 = vpop.xlane.xlu0 %2351
        %v2353 = vsel %vm1138, %v2307, -inf
        %2354 = vmax.xlane.f32.xlu0 %v2353
        %v2355 = vpop.xlane.xlu0 %2354
        %v2356 = vsel %vm1138, %v2308, -inf
        %2357 = vmax.xlane.f32.xlu0 %v2356
        %v2358 = vpop.xlane.xlu0 %2357
        %v2359 = vsel %vm1138, %v2309, -inf
        %2360 = vmax.xlane.f32.xlu0 %v2359
        %v2361 = vpop.xlane.xlu0 %2360
        %v2362 = vsel %vm1138, %v2310, -inf
        %2363 = vmax.xlane.f32.xlu0 %v2362
        %v2364 = vpop.xlane.xlu0 %2363
        %v2365 = vsel %vm1138, %v2311, -inf
        %2366 = vmax.xlane.f32.xlu0 %v2365
        %v2367 = vpop.xlane.xlu0 %2366
        %v2368 = vsel %vm1138, %v2312, -inf
        %2369 = vmax.xlane.f32.xlu0 %v2368
        %v2370 = vpop.xlane.xlu0 %2369
        %v2371 = vsel %vm1138, %v2313, -inf
        %2372 = vmax.xlane.f32.xlu0 %v2371
        %v2373 = vpop.xlane.xlu0 %2372
        %v2374 = vsel %vm1138, %v2314, -inf
        %2375 = vmax.xlane.f32.xlu0 %v2374
        %v2376 = vpop.xlane.xlu0 %2375
        %v2377 = vsel %vm1138, %v2315, -inf
        %2378 = vmax.xlane.f32.xlu0 %v2377
        %v2379 = vpop.xlane.xlu0 %2378
        %v2380 = vsel %vm1138, %v2316, -inf
        %2381 = vmax.xlane.f32.xlu0 %v2380
        %v2382 = vpop.xlane.xlu0 %2381
        %v2383 = vsel %vm1138, %v2317, -inf
        %2384 = vmax.xlane.f32.xlu0 %v2383
        %v2385 = vpop.xlane.xlu0 %2384
        %v2386 = vsel %vm1138, %v2318, -inf
        %2387 = vmax.xlane.f32.xlu0 %v2386
        %v2388 = vpop.xlane.xlu0 %2387
        %v2389 = vsel %vm1138, %v2319, -inf
        %2390 = vmax.xlane.f32.xlu0 %v2389
        %v2391 = vpop.xlane.xlu0 %2390
        %v2392 = vsel %vm1138, %v2320, -inf
        %2393 = vmax.xlane.f32.xlu0 %v2392
        %v2394 = vpop.xlane.xlu0 %2393
        %v2395 = vsel %vm1138, %v2321, -inf
        %2396 = vmax.xlane.f32.xlu0 %v2395
        %v2397 = vpop.xlane.xlu0 %2396
        %v2398 = vsel %vm1138, %v2322, -inf
        %2399 = vmax.xlane.f32.xlu0 %v2398
        %v2400 = vpop.xlane.xlu0 %2399
        %v2401 = vsel %vm1138, %v2323, -inf
        %2402 = vmax.xlane.f32.xlu0 %v2401
        %v2403 = vpop.xlane.xlu0 %2402
        %v2404 = vsel %vm1138, %v2324, -inf
        %2405 = vmax.xlane.f32.xlu0 %v2404
        %v2406 = vpop.xlane.xlu0 %2405
        %v2407 = vsel %vm1138, %v2325, -inf
        %2408 = vmax.xlane.f32.xlu0 %v2407
        %v2409 = vpop.xlane.xlu0 %2408
        %v2410 = vsel %vm1138, %v2326, -inf
        %2411 = vmax.xlane.f32.xlu0 %v2410
        %v2412 = vpop.xlane.xlu0 %2411
        %v2413 = vsel %vm1138, %v2327, -inf
        %2414 = vmax.xlane.f32.xlu0 %v2413
        %v2415 = vpop.xlane.xlu0 %2414
        %v2416 = vsel %vm1138, %v2328, -inf
        %2417 = vmax.xlane.f32.xlu0 %v2416
        %v2418 = vpop.xlane.xlu0 %2417
        %v2419 = vsel %vm1138, %v2329, -inf
        %2420 = vmax.xlane.f32.xlu0 %v2419
        %v2421 = vpop.xlane.xlu0 %2420
        %v2422 = vsel %vm1138, %v2330, -inf
        %2423 = vmax.xlane.f32.xlu0 %v2422
        %v2424 = vpop.xlane.xlu0 %2423
        %v2425 = vsel %vm1138, %v2331, -inf
        %2426 = vmax.xlane.f32.xlu0 %v2425
        %v2427 = vpop.xlane.xlu0 %2426
        %v2428 = vsub.f32 %v2300, %v2334
        %v2429 = vsub.f32 %v2301, %v2337
        %v2430 = vsub.f32 %v2302, %v2340
        %v2431 = vsub.f32 %v2303, %v2343
        %v2432 = vsub.f32 %v2304, %v2346
        %v2433 = vsub.f32 %v2305, %v2349
        %v2434 = vsub.f32 %v2306, %v2352
        %v2435 = vsub.f32 %v2307, %v2355
        %v2436 = vsub.f32 %v2308, %v2358
        %v2437 = vsub.f32 %v2309, %v2361
        %v2438 = vsub.f32 %v2310, %v2364
        %v2439 = vsub.f32 %v2311, %v2367
        %v2440 = vsub.f32 %v2312, %v2370
        %v2441 = vsub.f32 %v2313, %v2373
        %v2442 = vsub.f32 %v2314, %v2376
        %v2443 = vsub.f32 %v2315, %v2379
        %v2444 = vsub.f32 %v2316, %v2382
        %v2445 = vsub.f32 %v2317, %v2385
        %v2446 = vsub.f32 %v2318, %v2388
        %v2447 = vsub.f32 %v2319, %v2391
        %v2448 = vsub.f32 %v2320, %v2394
        %v2449 = vsub.f32 %v2321, %v2397
        %v2450 = vsub.f32 %v2322, %v2400
        %v2451 = vsub.f32 %v2323, %v2403
        %v2452 = vsub.f32 %v2324, %v2406
        %v2453 = vsub.f32 %v2325, %v2409
        %v2454 = vsub.f32 %v2326, %v2412
        %v2455 = vsub.f32 %v2327, %v2415
        %v2456 = vsub.f32 %v2328, %v2418
        %v2457 = vsub.f32 %v2329, %v2421
        %v2458 = vsub.f32 %v2330, %v2424
        %v2459 = vsub.f32 %v2331, %v2427
        %v2460 = vmul.f32 %v2428, 1.442695
        %v2461 = vpow.pop %v2460
        %v2462 = vmul.f32 %v2429, 1.442695
        %v2463 = vpow.pop %v2462
        %v2464 = vmul.f32 %v2430, 1.442695
        %v2465 = vpow.pop %v2464
        %v2466 = vmul.f32 %v2431, 1.442695
        %v2467 = vpow.pop %v2466
        %v2468 = vmul.f32 %v2432, 1.442695
        %v2469 = vpow.pop %v2468
        %v2470 = vmul.f32 %v2433, 1.442695
        %v2471 = vpow.pop %v2470
        %v2472 = vmul.f32 %v2434, 1.442695
        %v2473 = vpow.pop %v2472
        %v2474 = vmul.f32 %v2435, 1.442695
        %v2475 = vpow.pop %v2474
        %v2476 = vmul.f32 %v2436, 1.442695
        %v2477 = vpow.pop %v2476
        %v2478 = vmul.f32 %v2437, 1.442695
        %v2479 = vpow.pop %v2478
        %v2480 = vmul.f32 %v2438, 1.442695
        %v2481 = vpow.pop %v2480
        %v2482 = vmul.f32 %v2439, 1.442695
        %v2483 = vpow.pop %v2482
        %v2484 = vmul.f32 %v2440, 1.442695
        %v2485 = vpow.pop %v2484
        %v2486 = vmul.f32 %v2441, 1.442695
        %v2487 = vpow.pop %v2486
        %v2488 = vmul.f32 %v2442, 1.442695
        %v2489 = vpow.pop %v2488
        %v2490 = vmul.f32 %v2443, 1.442695
        %v2491 = vpow.pop %v2490
        %v2492 = vmul.f32 %v2444, 1.442695
        %v2493 = vpow.pop %v2492
        %v2494 = vmul.f32 %v2445, 1.442695
        %v2495 = vpow.pop %v2494
        %v2496 = vmul.f32 %v2446, 1.442695
        %v2497 = vpow.pop %v2496
        %v2498 = vmul.f32 %v2447, 1.442695
        %v2499 = vpow.pop %v2498
        %v2500 = vmul.f32 %v2448, 1.442695
        %v2501 = vpow.pop %v2500
        %v2502 = vmul.f32 %v2449, 1.442695
        %v2503 = vpow.pop %v2502
        %v2504 = vmul.f32 %v2450, 1.442695
        %v2505 = vpow.pop %v2504
        %v2506 = vmul.f32 %v2451, 1.442695
        %v2507 = vpow.pop %v2506
        %v2508 = vmul.f32 %v2452, 1.442695
        %v2509 = vpow.pop %v2508
        %v2510 = vmul.f32 %v2453, 1.442695
        %v2511 = vpow.pop %v2510
        %v2512 = vmul.f32 %v2454, 1.442695
        %v2513 = vpow.pop %v2512
        %v2514 = vmul.f32 %v2455, 1.442695
        %v2515 = vpow.pop %v2514
        %v2516 = vmul.f32 %v2456, 1.442695
        %v2517 = vpow.pop %v2516
        %v2518 = vmul.f32 %v2457, 1.442695
        %v2519 = vpow.pop %v2518
        %v2520 = vmul.f32 %v2458, 1.442695
        %v2521 = vpow.pop %v2520
        %v2522 = vmul.f32 %v2459, 1.442695
        %v2523 = vpow.pop %v2522
        %v2524 = vsel %vm1138, %v2461, 0.0
        %2525 = vadd.xlane.f32.xlu0 %v2524
        %v2526 = vpop.xlane.xlu0 %2525
        %v2527 = vsel %vm1138, %v2463, 0.0
        %2528 = vadd.xlane.f32.xlu0 %v2527
        %v2529 = vpop.xlane.xlu0 %2528
        %v2530 = vsel %vm1138, %v2465, 0.0
        %2531 = vadd.xlane.f32.xlu0 %v2530
        %v2532 = vpop.xlane.xlu0 %2531
        %v2533 = vsel %vm1138, %v2467, 0.0
        %2534 = vadd.xlane.f32.xlu0 %v2533
        %v2535 = vpop.xlane.xlu0 %2534
        %v2536 = vsel %vm1138, %v2469, 0.0
        %2537 = vadd.xlane.f32.xlu0 %v2536
        %v2538 = vpop.xlane.xlu0 %2537
        %v2539 = vsel %vm1138, %v2471, 0.0
        %2540 = vadd.xlane.f32.xlu0 %v2539
        %v2541 = vpop.xlane.xlu0 %2540
        %v2542 = vsel %vm1138, %v2473, 0.0
        %2543 = vadd.xlane.f32.xlu0 %v2542
        %v2544 = vpop.xlane.xlu0 %2543
        %v2545 = vsel %vm1138, %v2475, 0.0
        %2546 = vadd.xlane.f32.xlu0 %v2545
        %v2547 = vpop.xlane.xlu0 %2546
        %v2548 = vsel %vm1138, %v2477, 0.0
        %2549 = vadd.xlane.f32.xlu0 %v2548
        %v2550 = vpop.xlane.xlu0 %2549
        %v2551 = vsel %vm1138, %v2479, 0.0
        %2552 = vadd.xlane.f32.xlu0 %v2551
        %v2553 = vpop.xlane.xlu0 %2552
        %v2554 = vsel %vm1138, %v2481, 0.0
        %2555 = vadd.xlane.f32.xlu0 %v2554
        %v2556 = vpop.xlane.xlu0 %2555
        %v2557 = vsel %vm1138, %v2483, 0.0
        %2558 = vadd.xlane.f32.xlu0 %v2557
        %v2559 = vpop.xlane.xlu0 %2558
        %v2560 = vsel %vm1138, %v2485, 0.0
        %2561 = vadd.xlane.f32.xlu0 %v2560
        %v2562 = vpop.xlane.xlu0 %2561
        %v2563 = vsel %vm1138, %v2487, 0.0
        %2564 = vadd.xlane.f32.xlu0 %v2563
        %v2565 = vpop.xlane.xlu0 %2564
        %v2566 = vsel %vm1138, %v2489, 0.0
        %2567 = vadd.xlane.f32.xlu0 %v2566
        %v2568 = vpop.xlane.xlu0 %2567
        %v2569 = vsel %vm1138, %v2491, 0.0
        %2570 = vadd.xlane.f32.xlu0 %v2569
        %v2571 = vpop.xlane.xlu0 %2570
        %v2572 = vsel %vm1138, %v2493, 0.0
        %2573 = vadd.xlane.f32.xlu0 %v2572
        %v2574 = vpop.xlane.xlu0 %2573
        %v2575 = vsel %vm1138, %v2495, 0.0
        %2576 = vadd.xlane.f32.xlu0 %v2575
        %v2577 = vpop.xlane.xlu0 %2576
        %v2578 = vsel %vm1138, %v2497, 0.0
        %2579 = vadd.xlane.f32.xlu0 %v2578
        %v2580 = vpop.xlane.xlu0 %2579
        %v2581 = vsel %vm1138, %v2499, 0.0
        %2582 = vadd.xlane.f32.xlu0 %v2581
        %v2583 = vpop.xlane.xlu0 %2582
        %v2584 = vsel %vm1138, %v2501, 0.0
        %2585 = vadd.xlane.f32.xlu0 %v2584
        %v2586 = vpop.xlane.xlu0 %2585
        %v2587 = vsel %vm1138, %v2503, 0.0
        %2588 = vadd.xlane.f32.xlu0 %v2587
        %v2589 = vpop.xlane.xlu0 %2588
        %v2590 = vsel %vm1138, %v2505, 0.0
        %2591 = vadd.xlane.f32.xlu0 %v2590
        %v2592 = vpop.xlane.xlu0 %2591
        %v2593 = vsel %vm1138, %v2507, 0.0
        %2594 = vadd.xlane.f32.xlu0 %v2593
        %v2595 = vpop.xlane.xlu0 %2594
        %v2596 = vsel %vm1138, %v2509, 0.0
        %2597 = vadd.xlane.f32.xlu0 %v2596
        %v2598 = vpop.xlane.xlu0 %2597
        %v2599 = vsel %vm1138, %v2511, 0.0
        %2600 = vadd.xlane.f32.xlu0 %v2599
        %v2601 = vpop.xlane.xlu0 %2600
        %v2602 = vsel %vm1138, %v2513, 0.0
        %2603 = vadd.xlane.f32.xlu0 %v2602
        %v2604 = vpop.xlane.xlu0 %2603
        %v2605 = vsel %vm1138, %v2515, 0.0
        %2606 = vadd.xlane.f32.xlu0 %v2605
        %v2607 = vpop.xlane.xlu0 %2606
        %v2608 = vsel %vm1138, %v2517, 0.0
        %2609 = vadd.xlane.f32.xlu0 %v2608
        %v2610 = vpop.xlane.xlu0 %2609
        %v2611 = vsel %vm1138, %v2519, 0.0
        %2612 = vadd.xlane.f32.xlu0 %v2611
        %v2613 = vpop.xlane.xlu0 %2612
        %v2614 = vsel %vm1138, %v2521, 0.0
        %2615 = vadd.xlane.f32.xlu0 %v2614
        %v2616 = vpop.xlane.xlu0 %2615
        %v2617 = vsel %vm1138, %v2523, 0.0
        %2618 = vadd.xlane.f32.xlu0 %v2617
        %v2619 = vpop.xlane.xlu0 %2618
        %v2620 = vrcp.pop %v2526
        %v2621 = vrcp.pop %v2529
        %v2622 = vrcp.pop %v2532
        %v2623 = vrcp.pop %v2535
        %v2624 = vrcp.pop %v2538
        %v2625 = vrcp.pop %v2541
        %v2626 = vrcp.pop %v2544
        %v2627 = vrcp.pop %v2547
        %v2628 = vrcp.pop %v2550
        %v2629 = vrcp.pop %v2553
        %v2630 = vrcp.pop %v2556
        %v2631 = vrcp.pop %v2559
        %v2632 = vrcp.pop %v2562
        %v2633 = vrcp.pop %v2565
        %v2634 = vrcp.pop %v2568
        %v2635 = vrcp.pop %v2571
        %v2636 = vrcp.pop %v2574
        %v2637 = vrcp.pop %v2577
        %v2638 = vrcp.pop %v2580
        %v2639 = vrcp.pop %v2583
        %v2640 = vrcp.pop %v2586
        %v2641 = vrcp.pop %v2589
        %v2642 = vrcp.pop %v2592
        %v2643 = vrcp.pop %v2595
        %v2644 = vrcp.pop %v2598
        %v2645 = vrcp.pop %v2601
        %v2646 = vrcp.pop %v2604
        %v2647 = vrcp.pop %v2607
        %v2648 = vrcp.pop %v2610
        %v2649 = vrcp.pop %v2613
        %v2650 = vrcp.pop %v2616
        %v2651 = vrcp.pop %v2619
        %v2652 = vmul.f32 %v2461, %v2620
        %v2653 = vmul.f32 %v2463, %v2621
        %v2654 = vmul.f32 %v2465, %v2622
        %v2655 = vmul.f32 %v2467, %v2623
        %v2656 = vmul.f32 %v2469, %v2624
        %v2657 = vmul.f32 %v2471, %v2625
        %v2658 = vmul.f32 %v2473, %v2626
        %v2659 = vmul.f32 %v2475, %v2627
        %v2660 = vmul.f32 %v2477, %v2628
        %v2661 = vmul.f32 %v2479, %v2629
        %v2662 = vmul.f32 %v2481, %v2630
        %v2663 = vmul.f32 %v2483, %v2631
        %v2664 = vmul.f32 %v2485, %v2632
        %v2665 = vmul.f32 %v2487, %v2633
        %v2666 = vmul.f32 %v2489, %v2634
        %v2667 = vmul.f32 %v2491, %v2635
        %v2668 = vmul.f32 %v2493, %v2636
        %v2669 = vmul.f32 %v2495, %v2637
        %v2670 = vmul.f32 %v2497, %v2638
        %v2671 = vmul.f32 %v2499, %v2639
        %v2672 = vmul.f32 %v2501, %v2640
        %v2673 = vmul.f32 %v2503, %v2641
        %v2674 = vmul.f32 %v2505, %v2642
        %v2675 = vmul.f32 %v2507, %v2643
        %v2676 = vmul.f32 %v2509, %v2644
        %v2677 = vmul.f32 %v2511, %v2645
        %v2678 = vmul.f32 %v2513, %v2646
        %v2679 = vmul.f32 %v2515, %v2647
        %v2680 = vmul.f32 %v2517, %v2648
        %v2681 = vmul.f32 %v2519, %v2649
        %v2682 = vmul.f32 %v2521, %v2650
        %v2683 = vmul.f32 %v2523, %v2651
        %v2684 = vpack.c.bf16 %v2653, %v2652
        %v2685 = vpack.c.bf16 %v2655, %v2654
        %v2686 = vpack.c.bf16 %v2657, %v2656
        %v2687 = vpack.c.bf16 %v2659, %v2658
        %v2688 = vpack.c.bf16 %v2661, %v2660
        %v2689 = vpack.c.bf16 %v2663, %v2662
        %v2690 = vpack.c.bf16 %v2665, %v2664
        %v2691 = vpack.c.bf16 %v2667, %v2666
        %v2692 = vpack.c.bf16 %v2669, %v2668
        %v2693 = vpack.c.bf16 %v2671, %v2670
        %v2694 = vpack.c.bf16 %v2673, %v2672
        %v2695 = vpack.c.bf16 %v2675, %v2674
        %v2696 = vpack.c.bf16 %v2677, %v2676
        %v2697 = vpack.c.bf16 %v2679, %v2678
        %v2698 = vpack.c.bf16 %v2681, %v2680
        %v2699 = vpack.c.bf16 %v2683, %v2682
        %2700 = vrot.lane.b32.xlu0 %v685, 56
        %v2701 = vpop.permute.xlu0 %2700
        %2702 = vrot.lane.b32.xlu0 %v686, 56
        %v2703 = vpop.permute.xlu0 %2702
        %2704 = vrot.lane.b32.xlu0 %v687, 56
        %v2705 = vpop.permute.xlu0 %2704
        %2706 = vrot.lane.b32.xlu0 %v688, 56
        %v2707 = vpop.permute.xlu0 %2706
        %v2713 = vsel %vm1138, %v2684, 0
        %v2716 = vsel %vm1138, %v2685, 0
        %v2719 = vsel %vm1138, %v2686, 0
        %v2722 = vsel %vm1138, %v2687, 0
        %2724 = vmatprep.subr.bf16.mxu0 0
        %2725 = vmatpush1.bf16.msra.mxu0 %v2701
        %2726 = vmatprep.subr.bf16.mxu0 0
        %2727 = vmatpush1.bf16.msra.mxu0 %v2703
        %2728 = vmatprep.subr.bf16.mxu0 0
        %2729 = vmatpush1.bf16.msra.mxu0 %v2705
        %2730 = vmatprep.subr.bf16.mxu0 0
        %2731 = vmatpush1.bf16.msra.mxu0 %v2707
        %2732 = vmatprep.subr.bf16.mxu0 0
        %2733 = vmatpush1.bf16.msra.mxu0 0
        %2734 = vmatprep.subr.bf16.mxu0 0
        %2735 = vmatpush1.bf16.msra.mxu0 0
        %2736 = vmatprep.subr.bf16.mxu0 0
        %2737 = vmatpush1.bf16.msra.mxu0 0
        %2738 = vmatprep.subr.bf16.mxu0 0
        %2739 = vmatpush1.bf16.msra.mxu0 0
        %2740 = vmatprep.subr.bf16.mxu0 0
        %2741 = vmatpush1.bf16.msra.mxu0 0
        %2742 = vmatprep.subr.bf16.mxu0 0
        %2743 = vmatpush1.bf16.msra.mxu0 0
        %2744 = vmatprep.subr.bf16.mxu0 0
        %2745 = vmatpush1.bf16.msra.mxu0 0
        %2746 = vmatprep.subr.bf16.mxu0 0
        %2747 = vmatpush1.bf16.msra.mxu0 0
        %2748 = vmatprep.subr.bf16.mxu0 0
        %2749 = vmatpush1.bf16.msra.mxu0 0
        %2750 = vmatprep.subr.bf16.mxu0 0
        %2751 = vmatpush1.bf16.msra.mxu0 0
        %2752 = vmatprep.subr.bf16.mxu0 0
        %2753 = vmatpush1.bf16.msra.mxu0 0
        %2754 = vmatprep.subr.bf16.mxu0 0
        %2755 = vmatpush1.bf16.msra.mxu0 0
        %2756 = vmatprep.mubr.bf16.mxu0 0
        %2757 = vmatmul.mubr.bf16.gmra.mrb[0].mxu0 %v2713
        %v2758 = vpop.f32.mrb[0].mxu0
        %v2759 = vadd.f32 0.0, %v2758
        %v2760 = vpop.f32.mrb[0].mxu0
        %v2761 = vpop.f32.mrb[0].mxu0
        %v2762 = vadd.f32 0.0, %v2761
        %v2763 = vpop.f32.mrb[0].mxu0
        %2764 = vmatprep.mubr.bf16.mxu0 0
        %2765 = vmatmul.mubr.bf16.gmra.mrb[0].mxu0 %v2716
        %v2766 = vpop.f32.mrb[0].mxu0
        %v2767 = vadd.f32 0.0, %v2766
        %v2768 = vpop.f32.mrb[0].mxu0
        %v2769 = vpop.f32.mrb[0].mxu0
        %v2770 = vadd.f32 0.0, %v2769
        %v2771 = vpop.f32.mrb[0].mxu0
        %2772 = vmatprep.mubr.bf16.mxu0 0
        %2773 = vmatmul.mubr.bf16.gmra.mrb[0].mxu0 %v2719
        %v2774 = vpop.f32.mrb[0].mxu0
        %v2775 = vadd.f32 0.0, %v2774
        %v2776 = vpop.f32.mrb[0].mxu0
        %v2777 = vpop.f32.mrb[0].mxu0
        %v2778 = vadd.f32 0.0, %v2777
        %v2779 = vpop.f32.mrb[0].mxu0
        %2780 = vmatprep.mubr.bf16.mxu0 0
        %2781 = vmatmul.mubr.bf16.gmra.mrb[0].mxu0 %v2722
        %v2782 = vpop.f32.mrb[0].mxu0
        %v2783 = vadd.f32 0.0, %v2782
        %v2784 = vpop.f32.mrb[0].mxu0
        %v2785 = vpop.f32.mrb[0].mxu0
        %v2786 = vadd.f32 0.0, %v2785
        %v2787 = vpop.f32.mrb[0].mxu0
        %2788 = vdwg.mxu0
        %2789 = vrot.lane.b32.xlu0 %v689, 56
        %v2790 = vpop.permute.xlu0 %2789
        %2791 = vrot.lane.b32.xlu0 %v690, 56
        %v2792 = vpop.permute.xlu0 %2791
        %2793 = vrot.lane.b32.xlu0 %v691, 56
        %v2794 = vpop.permute.xlu0 %2793
        %2795 = vrot.lane.b32.xlu0 %v692, 56
        %v2796 = vpop.permute.xlu0 %2795
        %v2802 = vsel %vm1138, %v2688, 0
        %v2805 = vsel %vm1138, %v2689, 0
        %v2808 = vsel %vm1138, %v2690, 0
        %v2811 = vsel %vm1138, %v2691, 0
        %2813 = vmatprep.subr.bf16.mxu0 0
        %2814 = vmatpush1.bf16.msra.mxu0 %v2790
        %2815 = vmatprep.subr.bf16.mxu0 0
        %2816 = vmatpush1.bf16.msra.mxu0 %v2792
        %2817 = vmatprep.subr.bf16.mxu0 0
        %2818 = vmatpush1.bf16.msra.mxu0 %v2794
        %2819 = vmatprep.subr.bf16.mxu0 0
        %2820 = vmatpush1.bf16.msra.mxu0 %v2796
        %2821 = vmatprep.subr.bf16.mxu0 0
        %2822 = vmatpush1.bf16.msra.mxu0 0
        %2823 = vmatprep.subr.bf16.mxu0 0
        %2824 = vmatpush1.bf16.msra.mxu0 0
        %2825 = vmatprep.subr.bf16.mxu0 0
        %2826 = vmatpush1.bf16.msra.mxu0 0
        %2827 = vmatprep.subr.bf16.mxu0 0
        %2828 = vmatpush1.bf16.msra.mxu0 0
        %2829 = vmatprep.subr.bf16.mxu0 0
        %2830 = vmatpush1.bf16.msra.mxu0 0
        %2831 = vmatprep.subr.bf16.mxu0 0
        %2832 = vmatpush1.bf16.msra.mxu0 0
        %2833 = vmatprep.subr.bf16.mxu0 0
        %2834 = vmatpush1.bf16.msra.mxu0 0
        %2835 = vmatprep.subr.bf16.mxu0 0
        %2836 = vmatpush1.bf16.msra.mxu0 0
        %2837 = vmatprep.subr.bf16.mxu0 0
        %2838 = vmatpush1.bf16.msra.mxu0 0
        %2839 = vmatprep.subr.bf16.mxu0 0
        %2840 = vmatpush1.bf16.msra.mxu0 0
        %2841 = vmatprep.subr.bf16.mxu0 0
        %2842 = vmatpush1.bf16.msra.mxu0 0
        %2843 = vmatprep.subr.bf16.mxu0 0
        %2844 = vmatpush1.bf16.msra.mxu0 0
        %2845 = vmatprep.mubr.bf16.mxu0 0
        %2846 = vmatmul.mubr.bf16.gmra.mrb[0].mxu0 %v2802
        %v2847 = vpop.f32.mrb[0].mxu0
        %v2848 = vadd.f32 0.0, %v2847
        %v2849 = vpop.f32.mrb[0].mxu0
        %v2850 = vpop.f32.mrb[0].mxu0
        %v2851 = vadd.f32 0.0, %v2850
        %v2852 = vpop.f32.mrb[0].mxu0
        %2853 = vmatprep.mubr.bf16.mxu0 0
        %2854 = vmatmul.mubr.bf16.gmra.mrb[0].mxu0 %v2805
        %v2855 = vpop.f32.mrb[0].mxu0
        %v2856 = vadd.f32 0.0, %v2855
        %v2857 = vpop.f32.mrb[0].mxu0
        %v2858 = vpop.f32.mrb[0].mxu0
        %v2859 = vadd.f32 0.0, %v2858
        %v2860 = vpop.f32.mrb[0].mxu0
        %2861 = vmatprep.mubr.bf16.mxu0 0
        %2862 = vmatmul.mubr.bf16.gmra.mrb[0].mxu0 %v2808
        %v2863 = vpop.f32.mrb[0].mxu0
        %v2864 = vadd.f32 0.0, %v2863
        %v2865 = vpop.f32.mrb[0].mxu0
        %v2866 = vpop.f32.mrb[0].mxu0
        %v2867 = vadd.f32 0.0, %v2866
        %v2868 = vpop.f32.mrb[0].mxu0
        %2869 = vmatprep.mubr.bf16.mxu0 0
        %2870 = vmatmul.mubr.bf16.gmra.mrb[0].mxu0 %v2811
        %v2871 = vpop.f32.mrb[0].mxu0
        %v2872 = vadd.f32 0.0, %v2871
        %v2873 = vpop.f32.mrb[0].mxu0
        %v2874 = vpop.f32.mrb[0].mxu0
        %v2875 = vadd.f32 0.0, %v2874
        %v2876 = vpop.f32.mrb[0].mxu0
        %2877 = vdwg.mxu0
        %2878 = vrot.lane.b32.xlu0 %v693, 56
        %v2879 = vpop.permute.xlu0 %2878
        %2880 = vrot.lane.b32.xlu0 %v694, 56
        %v2881 = vpop.permute.xlu0 %2880
        %2882 = vrot.lane.b32.xlu0 %v695, 56
        %v2883 = vpop.permute.xlu0 %2882
        %2884 = vrot.lane.b32.xlu0 %v696, 56
        %v2885 = vpop.permute.xlu0 %2884
        %v2891 = vsel %vm1138, %v2692, 0
        %v2894 = vsel %vm1138, %v2693, 0
        %v2897 = vsel %vm1138, %v2694, 0
        %v2900 = vsel %vm1138, %v2695, 0
        %2902 = vmatprep.subr.bf16.mxu0 0
        %2903 = vmatpush1.bf16.msra.mxu0 %v2879
        %2904 = vmatprep.subr.bf16.mxu0 0
        %2905 = vmatpush1.bf16.msra.mxu0 %v2881
        %2906 = vmatprep.subr.bf16.mxu0 0
        %2907 = vmatpush1.bf16.msra.mxu0 %v2883
        %2908 = vmatprep.subr.bf16.mxu0 0
        %2909 = vmatpush1.bf16.msra.mxu0 %v2885
        %2910 = vmatprep.subr.bf16.mxu0 0
        %2911 = vmatpush1.bf16.msra.mxu0 0
        %2912 = vmatprep.subr.bf16.mxu0 0
        %2913 = vmatpush1.bf16.msra.mxu0 0
        %2914 = vmatprep.subr.bf16.mxu0 0
        %2915 = vmatpush1.bf16.msra.mxu0 0
        %2916 = vmatprep.subr.bf16.mxu0 0
        %2917 = vmatpush1.bf16.msra.mxu0 0
        %2918 = vmatprep.subr.bf16.mxu0 0
        %2919 = vmatpush1.bf16.msra.mxu0 0
        %2920 = vmatprep.subr.bf16.mxu0 0
        %2921 = vmatpush1.bf16.msra.mxu0 0
        %2922 = vmatprep.subr.bf16.mxu0 0
        %2923 = vmatpush1.bf16.msra.mxu0 0
        %2924 = vmatprep.subr.bf16.mxu0 0
        %2925 = vmatpush1.bf16.msra.mxu0 0
        %2926 = vmatprep.subr.bf16.mxu0 0
        %2927 = vmatpush1.bf16.msra.mxu0 0
        %2928 = vmatprep.subr.bf16.mxu0 0
        %2929 = vmatpush1.bf16.msra.mxu0 0
        %2930 = vmatprep.subr.bf16.mxu0 0
        %2931 = vmatpush1.bf16.msra.mxu0 0
        %2932 = vmatprep.subr.bf16.mxu0 0
        %2933 = vmatpush1.bf16.msra.mxu0 0
        %2934 = vmatprep.mubr.bf16.mxu0 0
        %2935 = vmatmul.mubr.bf16.gmra.mrb[0].mxu0 %v2891
        %v2936 = vpop.f32.mrb[0].mxu0
        %v2937 = vadd.f32 0.0, %v2936
        %v2938 = vpop.f32.mrb[0].mxu0
        %v2939 = vpop.f32.mrb[0].mxu0
        %v2940 = vadd.f32 0.0, %v2939
        %v2941 = vpop.f32.mrb[0].mxu0
        %2942 = vmatprep.mubr.bf16.mxu0 0
        %2943 = vmatmul.mubr.bf16.gmra.mrb[0].mxu0 %v2894
        %v2944 = vpop.f32.mrb[0].mxu0
        %v2945 = vadd.f32 0.0, %v2944
        %v2946 = vpop.f32.mrb[0].mxu0
        %v2947 = vpop.f32.mrb[0].mxu0
        %v2948 = vadd.f32 0.0, %v2947
        %v2949 = vpop.f32.mrb[0].mxu0
        %2950 = vmatprep.mubr.bf16.mxu0 0
        %2951 = vmatmul.mubr.bf16.gmra.mrb[0].mxu0 %v2897
        %v2952 = vpop.f32.mrb[0].mxu0
        %v2953 = vadd.f32 0.0, %v2952
        %v2954 = vpop.f32.mrb[0].mxu0
        %v2955 = vpop.f32.mrb[0].mxu0
        %v2956 = vadd.f32 0.0, %v2955
        %v2957 = vpop.f32.mrb[0].mxu0
        %2958 = vmatprep.mubr.bf16.mxu0 0
        %2959 = vmatmul.mubr.bf16.gmra.mrb[0].mxu0 %v2900
        %v2960 = vpop.f32.mrb[0].mxu0
        %v2961 = vadd.f32 0.0, %v2960
        %v2962 = vpop.f32.mrb[0].mxu0
        %v2963 = vpop.f32.mrb[0].mxu0
        %v2964 = vadd.f32 0.0, %v2963
        %v2965 = vpop.f32.mrb[0].mxu0
        %2966 = vdwg.mxu0
        %2967 = vrot.lane.b32.xlu0 %v697, 56
        %v2968 = vpop.permute.xlu0 %2967
        %2969 = vrot.lane.b32.xlu0 %v698, 56
        %v2970 = vpop.permute.xlu0 %2969
        %2971 = vrot.lane.b32.xlu0 %v699, 56
        %v2972 = vpop.permute.xlu0 %2971
        %2973 = vrot.lane.b32.xlu0 %v700, 56
        %v2974 = vpop.permute.xlu0 %2973
        %v2980 = vsel %vm1138, %v2696, 0
        %v2983 = vsel %vm1138, %v2697, 0
        %v2986 = vsel %vm1138, %v2698, 0
        %v2989 = vsel %vm1138, %v2699, 0
        %2991 = vmatprep.subr.bf16.mxu0 0
        %2992 = vmatpush1.bf16.msra.mxu0 %v2968
        %2993 = vmatprep.subr.bf16.mxu0 0
        %2994 = vmatpush1.bf16.msra.mxu0 %v2970
        %2995 = vmatprep.subr.bf16.mxu0 0
        %2996 = vmatpush1.bf16.msra.mxu0 %v2972
        %2997 = vmatprep.subr.bf16.mxu0 0
        %2998 = vmatpush1.bf16.msra.mxu0 %v2974
        %2999 = vmatprep.subr.bf16.mxu0 0
        %3000 = vmatpush1.bf16.msra.mxu0 0
        %3001 = vmatprep.subr.bf16.mxu0 0
        %3002 = vmatpush1.bf16.msra.mxu0 0
        %3003 = vmatprep.subr.bf16.mxu0 0
        %3004 = vmatpush1.bf16.msra.mxu0 0
        %3005 = vmatprep.subr.bf16.mxu0 0
        %3006 = vmatpush1.bf16.msra.mxu0 0
        %3007 = vmatprep.subr.bf16.mxu0 0
        %3008 = vmatpush1.bf16.msra.mxu0 0
        %3009 = vmatprep.subr.bf16.mxu0 0
        %3010 = vmatpush1.bf16.msra.mxu0 0
        %3011 = vmatprep.subr.bf16.mxu0 0
        %3012 = vmatpush1.bf16.msra.mxu0 0
        %3013 = vmatprep.subr.bf16.mxu0 0
        %3014 = vmatpush1.bf16.msra.mxu0 0
        %3015 = vmatprep.subr.bf16.mxu0 0
        %3016 = vmatpush1.bf16.msra.mxu0 0
        %3017 = vmatprep.subr.bf16.mxu0 0
        %3018 = vmatpush1.bf16.msra.mxu0 0
        %3019 = vmatprep.subr.bf16.mxu0 0
        %3020 = vmatpush1.bf16.msra.mxu0 0
        %3021 = vmatprep.subr.bf16.mxu0 0
        %3022 = vmatpush1.bf16.msra.mxu0 0
        %3023 = vmatprep.mubr.bf16.mxu0 0
        %3024 = vmatmul.mubr.bf16.gmra.mrb[0].mxu0 %v2980
        %v3025 = vpop.f32.mrb[0].mxu0
        %v3026 = vadd.f32 0.0, %v3025
        %v3027 = vpop.f32.mrb[0].mxu0
        %v3028 = vpop.f32.mrb[0].mxu0
        %v3029 = vadd.f32 0.0, %v3028
        %v3030 = vpop.f32.mrb[0].mxu0
        %3031 = vmatprep.mubr.bf16.mxu0 0
        %3032 = vmatmul.mubr.bf16.gmra.mrb[0].mxu0 %v2983
        %v3033 = vpop.f32.mrb[0].mxu0
        %v3034 = vadd.f32 0.0, %v3033
        %v3035 = vpop.f32.mrb[0].mxu0
        %v3036 = vpop.f32.mrb[0].mxu0
        %v3037 = vadd.f32 0.0, %v3036
        %v3038 = vpop.f32.mrb[0].mxu0
        %3039 = vmatprep.mubr.bf16.mxu0 0
        %3040 = vmatmul.mubr.bf16.gmra.mrb[0].mxu0 %v2986
        %v3041 = vpop.f32.mrb[0].mxu0
        %v3042 = vadd.f32 0.0, %v3041
        %v3043 = vpop.f32.mrb[0].mxu0
        %v3044 = vpop.f32.mrb[0].mxu0
        %v3045 = vadd.f32 0.0, %v3044
        %v3046 = vpop.f32.mrb[0].mxu0
        %3047 = vmatprep.mubr.bf16.mxu0 0
        %3048 = vmatmul.mubr.bf16.gmra.mrb[0].mxu0 %v2989
        %v3049 = vpop.f32.mrb[0].mxu0
        %v3050 = vadd.f32 0.0, %v3049
        %v3051 = vpop.f32.mrb[0].mxu0
        %v3052 = vpop.f32.mrb[0].mxu0
        %v3053 = vadd.f32 0.0, %v3052
        %v3054 = vpop.f32.mrb[0].mxu0
        %3055 = vdwg.mxu0
        %v3056 = vpack.c.bf16 %v2762, %v2759
        %v3057 = vpack.c.bf16 %v2770, %v2767
        %v3058 = vpack.c.bf16 %v2778, %v2775
        %v3059 = vpack.c.bf16 %v2786, %v2783
        %v3060 = vpack.c.bf16 %v2851, %v2848
        %v3061 = vpack.c.bf16 %v2859, %v2856
        %v3062 = vpack.c.bf16 %v2867, %v2864
        %v3063 = vpack.c.bf16 %v2875, %v2872
        %v3064 = vpack.c.bf16 %v2940, %v2937
        %v3065 = vpack.c.bf16 %v2948, %v2945
        %v3066 = vpack.c.bf16 %v2956, %v2953
        %v3067 = vpack.c.bf16 %v2964, %v2961
        %v3068 = vpack.c.bf16 %v3029, %v3026
        %v3069 = vpack.c.bf16 %v3037, %v3034
        %v3070 = vpack.c.bf16 %v3045, %v3042
        %v3071 = vpack.c.bf16 %v3053, %v3050
        %s3072 = scalar_lea.vmem %s3, 4
        %v3073 = vld [vmem:[%s3072] sm:$0xf]
        %v3075 = vsel %vm713, %v3056, 0
        %v3078 = vsel %vm713, %v3057, 0
        %v3081 = vsel %vm713, %v3058, 0
        %v3084 = vsel %vm713, %v3059, 0
        %v3087 = vsel %vm713, %v3060, 0
        %v3090 = vsel %vm713, %v3061, 0
        %v3093 = vsel %vm713, %v3062, 0
        %v3096 = vsel %vm713, %v3063, 0
        %v3099 = vsel %vm713, %v3064, 0
        %v3102 = vsel %vm713, %v3065, 0
        %v3105 = vsel %vm713, %v3066, 0
        %v3108 = vsel %vm713, %v3067, 0
        %v3111 = vsel %vm713, %v3068, 0
        %v3114 = vsel %vm713, %v3069, 0
        %v3117 = vsel %vm713, %v3070, 0
        %v3120 = vsel %vm713, %v3071, 0
        %vm3122 = vcmask 1043456
        %v3124 = vsel %vm3122, %v3073, 0
        %3126 = vmatprep.subr.bf16.mxu0 0
        %3127 = vmatpush1.bf16.msra.mxu0 %v3124
        %3128 = vmatprep.subr.bf16.mxu0 0
        %3129 = vmatpush1.bf16.msra.mxu0 0
        %3130 = vmatprep.subr.bf16.mxu0 0
        %3131 = vmatpush1.bf16.msra.mxu0 0
        %3132 = vmatprep.subr.bf16.mxu0 0
        %3133 = vmatpush1.bf16.msra.mxu0 0
        %3134 = vmatprep.subr.bf16.mxu0 0
        %3135 = vmatpush1.bf16.msra.mxu0 0
        %3136 = vmatprep.subr.bf16.mxu0 0
        %3137 = vmatpush1.bf16.msra.mxu0 0
        %3138 = vmatprep.subr.bf16.mxu0 0
        %3139 = vmatpush1.bf16.msra.mxu0 0
        %3140 = vmatprep.subr.bf16.mxu0 0
        %3141 = vmatpush1.bf16.msra.mxu0 0
        %3142 = vmatprep.subr.bf16.mxu0 0
        %3143 = vmatpush1.bf16.msra.mxu0 0
        %3144 = vmatprep.subr.bf16.mxu0 0
        %3145 = vmatpush1.bf16.msra.mxu0 0
        %3146 = vmatprep.subr.bf16.mxu0 0
        %3147 = vmatpush1.bf16.msra.mxu0 0
        %3148 = vmatprep.subr.bf16.mxu0 0
        %3149 = vmatpush1.bf16.msra.mxu0 0
        %3150 = vmatprep.subr.bf16.mxu0 0
        %3151 = vmatpush1.bf16.msra.mxu0 0
        %3152 = vmatprep.subr.bf16.mxu0 0
        %3153 = vmatpush1.bf16.msra.mxu0 0
        %3154 = vmatprep.subr.bf16.mxu0 0
        %3155 = vmatpush1.bf16.msra.mxu0 0
        %3156 = vmatprep.subr.bf16.mxu0 0
        %3157 = vmatpush1.bf16.msra.mxu0 0
        %3158 = vmatprep.mubr.bf16.mxu0 0
        %3159 = vmatmul.mubr.bf16.gmra.mrb[0].mxu0 %v3075
        %v3160 = vpop.f32.mrb[0].mxu0
        %v3161 = vadd.f32 0.0, %v3160
        %v3162 = vpop.f32.mrb[0].mxu0
        %v3163 = vpop.f32.mrb[0].mxu0
        %v3164 = vadd.f32 0.0, %v3163
        %v3165 = vpop.f32.mrb[0].mxu0
        %3166 = vmatprep.mubr.bf16.mxu0 0
        %3167 = vmatmul.mubr.bf16.gmra.mrb[0].mxu0 %v3078
        %v3168 = vpop.f32.mrb[0].mxu0
        %v3169 = vadd.f32 0.0, %v3168
        %v3170 = vpop.f32.mrb[0].mxu0
        %v3171 = vpop.f32.mrb[0].mxu0
        %v3172 = vadd.f32 0.0, %v3171
        %v3173 = vpop.f32.mrb[0].mxu0
        %3174 = vmatprep.mubr.bf16.mxu0 0
        %3175 = vmatmul.mubr.bf16.gmra.mrb[0].mxu0 %v3081
        %v3176 = vpop.f32.mrb[0].mxu0
        %v3177 = vadd.f32 0.0, %v3176
        %v3178 = vpop.f32.mrb[0].mxu0
        %v3179 = vpop.f32.mrb[0].mxu0
        %v3180 = vadd.f32 0.0, %v3179
        %v3181 = vpop.f32.mrb[0].mxu0
        %3182 = vmatprep.mubr.bf16.mxu0 0
        %3183 = vmatmul.mubr.bf16.gmra.mrb[0].mxu0 %v3084
        %v3184 = vpop.f32.mrb[0].mxu0
        %v3185 = vadd.f32 0.0, %v3184
        %v3186 = vpop.f32.mrb[0].mxu0
        %v3187 = vpop.f32.mrb[0].mxu0
        %v3188 = vadd.f32 0.0, %v3187
        %v3189 = vpop.f32.mrb[0].mxu0
        %3190 = vmatprep.mubr.bf16.mxu0 0
        %3191 = vmatmul.mubr.bf16.gmra.mrb[0].mxu0 %v3087
        %v3192 = vpop.f32.mrb[0].mxu0
        %v3193 = vadd.f32 0.0, %v3192
        %v3194 = vpop.f32.mrb[0].mxu0
        %v3195 = vpop.f32.mrb[0].mxu0
        %v3196 = vadd.f32 0.0, %v3195
        %v3197 = vpop.f32.mrb[0].mxu0
        %3198 = vmatprep.mubr.bf16.mxu0 0
        %3199 = vmatmul.mubr.bf16.gmra.mrb[0].mxu0 %v3090
        %v3200 = vpop.f32.mrb[0].mxu0
        %v3201 = vadd.f32 0.0, %v3200
        %v3202 = vpop.f32.mrb[0].mxu0
        %v3203 = vpop.f32.mrb[0].mxu0
        %v3204 = vadd.f32 0.0, %v3203
        %v3205 = vpop.f32.mrb[0].mxu0
        %3206 = vmatprep.mubr.bf16.mxu0 0
        %3207 = vmatmul.mubr.bf16.gmra.mrb[0].mxu0 %v3093
        %v3208 = vpop.f32.mrb[0].mxu0
        %v3209 = vadd.f32 0.0, %v3208
        %v3210 = vpop.f32.mrb[0].mxu0
        %v3211 = vpop.f32.mrb[0].mxu0
        %v3212 = vadd.f32 0.0, %v3211
        %v3213 = vpop.f32.mrb[0].mxu0
        %3214 = vmatprep.mubr.bf16.mxu0 0
        %3215 = vmatmul.mubr.bf16.gmra.mrb[0].mxu0 %v3096
        %v3216 = vpop.f32.mrb[0].mxu0
        %v3217 = vadd.f32 0.0, %v3216
        %v3218 = vpop.f32.mrb[0].mxu0
        %v3219 = vpop.f32.mrb[0].mxu0
        %v3220 = vadd.f32 0.0, %v3219
        %v3221 = vpop.f32.mrb[0].mxu0
        %3222 = vmatprep.mubr.bf16.mxu0 0
        %3223 = vmatmul.mubr.bf16.gmra.mrb[0].mxu0 %v3099
        %v3224 = vpop.f32.mrb[0].mxu0
        %v3225 = vadd.f32 0.0, %v3224
        %v3226 = vpop.f32.mrb[0].mxu0
        %v3227 = vpop.f32.mrb[0].mxu0
        %v3228 = vadd.f32 0.0, %v3227
        %v3229 = vpop.f32.mrb[0].mxu0
        %3230 = vmatprep.mubr.bf16.mxu0 0
        %3231 = vmatmul.mubr.bf16.gmra.mrb[0].mxu0 %v3102
        %v3232 = vpop.f32.mrb[0].mxu0
        %v3233 = vadd.f32 0.0, %v3232
        %v3234 = vpop.f32.mrb[0].mxu0
        %v3235 = vpop.f32.mrb[0].mxu0
        %v3236 = vadd.f32 0.0, %v3235
        %v3237 = vpop.f32.mrb[0].mxu0
        %3238 = vmatprep.mubr.bf16.mxu0 0
        %3239 = vmatmul.mubr.bf16.gmra.mrb[0].mxu0 %v3105
        %v3240 = vpop.f32.mrb[0].mxu0
        %v3241 = vadd.f32 0.0, %v3240
        %v3242 = vpop.f32.mrb[0].mxu0
        %v3243 = vpop.f32.mrb[0].mxu0
        %v3244 = vadd.f32 0.0, %v3243
        %v3245 = vpop.f32.mrb[0].mxu0
        %3246 = vmatprep.mubr.bf16.mxu0 0
        %3247 = vmatmul.mubr.bf16.gmra.mrb[0].mxu0 %v3108
        %v3248 = vpop.f32.mrb[0].mxu0
        %v3249 = vadd.f32 0.0, %v3248
        %v3250 = vpop.f32.mrb[0].mxu0
        %v3251 = vpop.f32.mrb[0].mxu0
        %v3252 = vadd.f32 0.0, %v3251
        %v3253 = vpop.f32.mrb[0].mxu0
        %3254 = vmatprep.mubr.bf16.mxu0 0
        %3255 = vmatmul.mubr.bf16.gmra.mrb[0].mxu0 %v3111
        %v3256 = vpop.f32.mrb[0].mxu0
        %v3257 = vadd.f32 0.0, %v3256
        %v3258 = vpop.f32.mrb[0].mxu0
        %v3259 = vpop.f32.mrb[0].mxu0
        %v3260 = vadd.f32 0.0, %v3259
        %v3261 = vpop.f32.mrb[0].mxu0
        %3262 = vmatprep.mubr.bf16.mxu0 0
        %3263 = vmatmul.mubr.bf16.gmra.mrb[0].mxu0 %v3114
        %v3264 = vpop.f32.mrb[0].mxu0
        %v3265 = vadd.f32 0.0, %v3264
        %v3266 = vpop.f32.mrb[0].mxu0
        %v3267 = vpop.f32.mrb[0].mxu0
        %v3268 = vadd.f32 0.0, %v3267
        %v3269 = vpop.f32.mrb[0].mxu0
        %3270 = vmatprep.mubr.bf16.mxu0 0
        %3271 = vmatmul.mubr.bf16.gmra.mrb[0].mxu0 %v3117
        %v3272 = vpop.f32.mrb[0].mxu0
        %v3273 = vadd.f32 0.0, %v3272
        %v3274 = vpop.f32.mrb[0].mxu0
        %v3275 = vpop.f32.mrb[0].mxu0
        %v3276 = vadd.f32 0.0, %v3275
        %v3277 = vpop.f32.mrb[0].mxu0
        %3278 = vmatprep.mubr.bf16.mxu0 0
        %3279 = vmatmul.mubr.bf16.gmra.mrb[0].mxu0 %v3120
        %v3280 = vpop.f32.mrb[0].mxu0
        %v3281 = vadd.f32 0.0, %v3280
        %v3282 = vpop.f32.mrb[0].mxu0
        %v3283 = vpop.f32.mrb[0].mxu0
        %v3284 = vadd.f32 0.0, %v3283
        %v3285 = vpop.f32.mrb[0].mxu0
        %3286 = vdwg.mxu0
        %v3288 = vsel %vm713, %v1863, 0
        %v3291 = vsel %vm713, %v1864, 0
        %v3294 = vsel %vm713, %v1865, 0
        %v3297 = vsel %vm713, %v1866, 0
        %v3300 = vsel %vm713, %v1867, 0
        %v3303 = vsel %vm713, %v1868, 0
        %v3306 = vsel %vm713, %v1869, 0
        %v3309 = vsel %vm713, %v1870, 0
        %v3312 = vsel %vm713, %v1871, 0
        %v3315 = vsel %vm713, %v1872, 0
        %v3318 = vsel %vm713, %v1873, 0
        %v3321 = vsel %vm713, %v1874, 0
        %v3324 = vsel %vm713, %v1875, 0
        %v3327 = vsel %vm713, %v1876, 0
        %v3330 = vsel %vm713, %v1877, 0
        %v3333 = vsel %vm713, %v1878, 0
        %v3336 = vsel %vm3122, %v1879, 0
        %3338 = vmatprep.subr.bf16.mxu0 0
        %3339 = vmatpush1.bf16.msra.mxu0 %v3336
        %3340 = vmatprep.subr.bf16.mxu0 0
        %3341 = vmatpush1.bf16.msra.mxu0 0
        %3342 = vmatprep.subr.bf16.mxu0 0
        %3343 = vmatpush1.bf16.msra.mxu0 0
        %3344 = vmatprep.subr.bf16.mxu0 0
        %3345 = vmatpush1.bf16.msra.mxu0 0
        %3346 = vmatprep.subr.bf16.mxu0 0
        %3347 = vmatpush1.bf16.msra.mxu0 0
        %3348 = vmatprep.subr.bf16.mxu0 0
        %3349 = vmatpush1.bf16.msra.mxu0 0
        %3350 = vmatprep.subr.bf16.mxu0 0
        %3351 = vmatpush1.bf16.msra.mxu0 0
        %3352 = vmatprep.subr.bf16.mxu0 0
        %3353 = vmatpush1.bf16.msra.mxu0 0
        %3354 = vmatprep.subr.bf16.mxu0 0
        %3355 = vmatpush1.bf16.msra.mxu0 0
        %3356 = vmatprep.subr.bf16.mxu0 0
        %3357 = vmatpush1.bf16.msra.mxu0 0
        %3358 = vmatprep.subr.bf16.mxu0 0
        %3359 = vmatpush1.bf16.msra.mxu0 0
        %3360 = vmatprep.subr.bf16.mxu0 0
        %3361 = vmatpush1.bf16.msra.mxu0 0
        %3362 = vmatprep.subr.bf16.mxu0 0
        %3363 = vmatpush1.bf16.msra.mxu0 0
        %3364 = vmatprep.subr.bf16.mxu0 0
        %3365 = vmatpush1.bf16.msra.mxu0 0
        %3366 = vmatprep.subr.bf16.mxu0 0
        %3367 = vmatpush1.bf16.msra.mxu0 0
        %3368 = vmatprep.subr.bf16.mxu0 0
        %3369 = vmatpush1.bf16.msra.mxu0 0
        %3370 = vmatprep.mubr.bf16.mxu0 0
        %3371 = vmatmul.mubr.bf16.gmra.mrb[0].mxu0 %v3288
        %v3372 = vpop.f32.mrb[0].mxu0
        %v3373 = vadd.f32 %v3161, %v3372
        %v3374 = vpop.f32.mrb[0].mxu0
        %v3375 = vpop.f32.mrb[0].mxu0
        %v3376 = vadd.f32 %v3164, %v3375
        %v3377 = vpop.f32.mrb[0].mxu0
        %3378 = vmatprep.mubr.bf16.mxu0 0
        %3379 = vmatmul.mubr.bf16.gmra.mrb[0].mxu0 %v3291
        %v3380 = vpop.f32.mrb[0].mxu0
        %v3381 = vadd.f32 %v3169, %v3380
        %v3382 = vpop.f32.mrb[0].mxu0
        %v3383 = vpop.f32.mrb[0].mxu0
        %v3384 = vadd.f32 %v3172, %v3383
        %v3385 = vpop.f32.mrb[0].mxu0
        %3386 = vmatprep.mubr.bf16.mxu0 0
        %3387 = vmatmul.mubr.bf16.gmra.mrb[0].mxu0 %v3294
        %v3388 = vpop.f32.mrb[0].mxu0
        %v3389 = vadd.f32 %v3177, %v3388
        %v3390 = vpop.f32.mrb[0].mxu0
        %v3391 = vpop.f32.mrb[0].mxu0
        %v3392 = vadd.f32 %v3180, %v3391
        %v3393 = vpop.f32.mrb[0].mxu0
        %3394 = vmatprep.mubr.bf16.mxu0 0
        %3395 = vmatmul.mubr.bf16.gmra.mrb[0].mxu0 %v3297
        %v3396 = vpop.f32.mrb[0].mxu0
        %v3397 = vadd.f32 %v3185, %v3396
        %v3398 = vpop.f32.mrb[0].mxu0
        %v3399 = vpop.f32.mrb[0].mxu0
        %v3400 = vadd.f32 %v3188, %v3399
        %v3401 = vpop.f32.mrb[0].mxu0
        %3402 = vmatprep.mubr.bf16.mxu0 0
        %3403 = vmatmul.mubr.bf16.gmra.mrb[0].mxu0 %v3300
        %v3404 = vpop.f32.mrb[0].mxu0
        %v3405 = vadd.f32 %v3193, %v3404
        %v3406 = vpop.f32.mrb[0].mxu0
        %v3407 = vpop.f32.mrb[0].mxu0
        %v3408 = vadd.f32 %v3196, %v3407
        %v3409 = vpop.f32.mrb[0].mxu0
        %3410 = vmatprep.mubr.bf16.mxu0 0
        %3411 = vmatmul.mubr.bf16.gmra.mrb[0].mxu0 %v3303
        %v3412 = vpop.f32.mrb[0].mxu0
        %v3413 = vadd.f32 %v3201, %v3412
        %v3414 = vpop.f32.mrb[0].mxu0
        %v3415 = vpop.f32.mrb[0].mxu0
        %v3416 = vadd.f32 %v3204, %v3415
        %v3417 = vpop.f32.mrb[0].mxu0
        %3418 = vmatprep.mubr.bf16.mxu0 0
        %3419 = vmatmul.mubr.bf16.gmra.mrb[0].mxu0 %v3306
        %v3420 = vpop.f32.mrb[0].mxu0
        %v3421 = vadd.f32 %v3209, %v3420
        %v3422 = vpop.f32.mrb[0].mxu0
        %v3423 = vpop.f32.mrb[0].mxu0
        %v3424 = vadd.f32 %v3212, %v3423
        %v3425 = vpop.f32.mrb[0].mxu0
        %3426 = vmatprep.mubr.bf16.mxu0 0
        %3427 = vmatmul.mubr.bf16.gmra.mrb[0].mxu0 %v3309
        %v3428 = vpop.f32.mrb[0].mxu0
        %v3429 = vadd.f32 %v3217, %v3428
        %v3430 = vpop.f32.mrb[0].mxu0
        %v3431 = vpop.f32.mrb[0].mxu0
        %v3432 = vadd.f32 %v3220, %v3431
        %v3433 = vpop.f32.mrb[0].mxu0
        %3434 = vmatprep.mubr.bf16.mxu0 0
        %3435 = vmatmul.mubr.bf16.gmra.mrb[0].mxu0 %v3312
        %v3436 = vpop.f32.mrb[0].mxu0
        %v3437 = vadd.f32 %v3225, %v3436
        %v3438 = vpop.f32.mrb[0].mxu0
        %v3439 = vpop.f32.mrb[0].mxu0
        %v3440 = vadd.f32 %v3228, %v3439
        %v3441 = vpop.f32.mrb[0].mxu0
        %3442 = vmatprep.mubr.bf16.mxu0 0
        %3443 = vmatmul.mubr.bf16.gmra.mrb[0].mxu0 %v3315
        %v3444 = vpop.f32.mrb[0].mxu0
        %v3445 = vadd.f32 %v3233, %v3444
        %v3446 = vpop.f32.mrb[0].mxu0
        %v3447 = vpop.f32.mrb[0].mxu0
        %v3448 = vadd.f32 %v3236, %v3447
        %v3449 = vpop.f32.mrb[0].mxu0
        %3450 = vmatprep.mubr.bf16.mxu0 0
        %3451 = vmatmul.mubr.bf16.gmra.mrb[0].mxu0 %v3318
        %v3452 = vpop.f32.mrb[0].mxu0
        %v3453 = vadd.f32 %v3241, %v3452
        %v3454 = vpop.f32.mrb[0].mxu0
        %v3455 = vpop.f32.mrb[0].mxu0
        %v3456 = vadd.f32 %v3244, %v3455
        %v3457 = vpop.f32.mrb[0].mxu0
        %3458 = vmatprep.mubr.bf16.mxu0 0
        %3459 = vmatmul.mubr.bf16.gmra.mrb[0].mxu0 %v3321
        %v3460 = vpop.f32.mrb[0].mxu0
        %v3461 = vadd.f32 %v3249, %v3460
        %v3462 = vpop.f32.mrb[0].mxu0
        %v3463 = vpop.f32.mrb[0].mxu0
        %v3464 = vadd.f32 %v3252, %v3463
        %v3465 = vpop.f32.mrb[0].mxu0
        %3466 = vmatprep.mubr.bf16.mxu0 0
        %3467 = vmatmul.mubr.bf16.gmra.mrb[0].mxu0 %v3324
        %v3468 = vpop.f32.mrb[0].mxu0
        %v3469 = vadd.f32 %v3257, %v3468
        %v3470 = vpop.f32.mrb[0].mxu0
        %v3471 = vpop.f32.mrb[0].mxu0
        %v3472 = vadd.f32 %v3260, %v3471
        %v3473 = vpop.f32.mrb[0].mxu0
        %3474 = vmatprep.mubr.bf16.mxu0 0
        %3475 = vmatmul.mubr.bf16.gmra.mrb[0].mxu0 %v3327
        %v3476 = vpop.f32.mrb[0].mxu0
        %v3477 = vadd.f32 %v3265, %v3476
        %v3478 = vpop.f32.mrb[0].mxu0
        %v3479 = vpop.f32.mrb[0].mxu0
        %v3480 = vadd.f32 %v3268, %v3479
        %v3481 = vpop.f32.mrb[0].mxu0
        %3482 = vmatprep.mubr.bf16.mxu0 0
        %3483 = vmatmul.mubr.bf16.gmra.mrb[0].mxu0 %v3330
        %v3484 = vpop.f32.mrb[0].mxu0
        %v3485 = vadd.f32 %v3273, %v3484
        %v3486 = vpop.f32.mrb[0].mxu0
        %v3487 = vpop.f32.mrb[0].mxu0
        %v3488 = vadd.f32 %v3276, %v3487
        %v3489 = vpop.f32.mrb[0].mxu0
        %3490 = vmatprep.mubr.bf16.mxu0 0
        %3491 = vmatmul.mubr.bf16.gmra.mrb[0].mxu0 %v3333
        %v3492 = vpop.f32.mrb[0].mxu0
        %v3493 = vadd.f32 %v3281, %v3492
        %v3494 = vpop.f32.mrb[0].mxu0
        %v3495 = vpop.f32.mrb[0].mxu0
        %v3496 = vadd.f32 %v3284, %v3495
        %v3497 = vpop.f32.mrb[0].mxu0
        %3498 = vdwg.mxu0
        %3499 = vrot.lane.b32.xlu0 %v685, 112
        %v3500 = vpop.permute.xlu0 %3499
        %3501 = vrot.lane.b32.xlu0 %v686, 112
        %v3502 = vpop.permute.xlu0 %3501
        %3503 = vrot.lane.b32.xlu0 %v687, 112
        %v3504 = vpop.permute.xlu0 %3503
        %3505 = vrot.lane.b32.xlu0 %v688, 112
        %v3506 = vpop.permute.xlu0 %3505
        %3507 = vrot.lane.b32.xlu0 %v685, 80
        %v3508 = vpop.permute.xlu0 %3507
        %3509 = vrot.lane.b32.xlu0 %v686, 80
        %v3510 = vpop.permute.xlu0 %3509
        %3511 = vrot.lane.b32.xlu0 %v687, 80
        %v3512 = vpop.permute.xlu0 %3511
        %3513 = vrot.lane.b32.xlu0 %v688, 80
        %v3514 = vpop.permute.xlu0 %3513
        %v3516 = vsel %vm713, %v3500, 0
        %v3519 = vsel %vm713, %v3502, 0
        %v3522 = vsel %vm713, %v3504, 0
        %v3525 = vsel %vm713, %v3506, 0
        %v3528 = vsel %vm713, %v3508, 0
        %v3531 = vsel %vm713, %v3510, 0
        %v3534 = vsel %vm713, %v3512, 0
        %v3537 = vsel %vm713, %v3514, 0
        %3539 = vmatprep.subr.bf16.mxu0 0
        %3540 = vmatpush1.bf16.xpose.msra.mxu0 %v3528
        %3541 = vmatprep.subr.bf16.mxu0 0
        %3542 = vmatpush1.bf16.xpose.msra.mxu0 %v3531
        %3543 = vmatprep.subr.bf16.mxu0 0
        %3544 = vmatpush1.bf16.xpose.msra.mxu0 %v3534
        %3545 = vmatprep.subr.bf16.mxu0 0
        %3546 = vmatpush1.bf16.xpose.msra.mxu0 %v3537
        %3547 = vmatprep.subr.bf16.mxu0 0
        %3548 = vmatpush1.bf16.xpose.msra.mxu0 0
        %3549 = vmatprep.subr.bf16.mxu0 0
        %3550 = vmatpush1.bf16.xpose.msra.mxu0 0
        %3551 = vmatprep.subr.bf16.mxu0 0
        %3552 = vmatpush1.bf16.xpose.msra.mxu0 0
        %3553 = vmatprep.subr.bf16.mxu0 0
        %3554 = vmatpush1.bf16.xpose.msra.mxu0 0
        %3555 = vmatprep.subr.bf16.mxu0 0
        %3556 = vmatpush1.bf16.xpose.msra.mxu0 0
        %3557 = vmatprep.subr.bf16.mxu0 0
        %3558 = vmatpush1.bf16.xpose.msra.mxu0 0
        %3559 = vmatprep.subr.bf16.mxu0 0
        %3560 = vmatpush1.bf16.xpose.msra.mxu0 0
        %3561 = vmatprep.subr.bf16.mxu0 0
        %3562 = vmatpush1.bf16.xpose.msra.mxu0 0
        %3563 = vmatprep.subr.bf16.mxu0 0
        %3564 = vmatpush1.bf16.xpose.msra.mxu0 0
        %3565 = vmatprep.subr.bf16.mxu0 0
        %3566 = vmatpush1.bf16.xpose.msra.mxu0 0
        %3567 = vmatprep.subr.bf16.mxu0 0
        %3568 = vmatpush1.bf16.xpose.msra.mxu0 0
        %3569 = vmatprep.subr.bf16.mxu0 0
        %3570 = vmatpush1.bf16.xpose.msra.mxu0 0
        %3571 = vmatprep.mubr.bf16.mxu0 0
        %3572 = vmatmul.mubr.bf16.gmra.mrb[0].mxu0 %v3516
        %v3573 = vpop.f32.mrb[0].mxu0
        %v3574 = vadd.f32 0.0, %v3573
        %v3575 = vpop.f32.mrb[0].mxu0
        %v3576 = vpop.f32.mrb[0].mxu0
        %v3577 = vadd.f32 0.0, %v3576
        %v3578 = vpop.f32.mrb[0].mxu0
        %3579 = vmatprep.mubr.bf16.mxu0 0
        %3580 = vmatmul.mubr.bf16.gmra.mrb[0].mxu0 %v3519
        %v3581 = vpop.f32.mrb[0].mxu0
        %v3582 = vadd.f32 0.0, %v3581
        %v3583 = vpop.f32.mrb[0].mxu0
        %v3584 = vpop.f32.mrb[0].mxu0
        %v3585 = vadd.f32 0.0, %v3584
        %v3586 = vpop.f32.mrb[0].mxu0
        %3587 = vmatprep.mubr.bf16.mxu0 0
        %3588 = vmatmul.mubr.bf16.gmra.mrb[0].mxu0 %v3522
        %v3589 = vpop.f32.mrb[0].mxu0
        %v3590 = vadd.f32 0.0, %v3589
        %v3591 = vpop.f32.mrb[0].mxu0
        %v3592 = vpop.f32.mrb[0].mxu0
        %v3593 = vadd.f32 0.0, %v3592
        %v3594 = vpop.f32.mrb[0].mxu0
        %3595 = vmatprep.mubr.bf16.mxu0 0
        %3596 = vmatmul.mubr.bf16.gmra.mrb[0].mxu0 %v3525
        %v3597 = vpop.f32.mrb[0].mxu0
        %v3598 = vadd.f32 0.0, %v3597
        %v3599 = vpop.f32.mrb[0].mxu0
        %v3600 = vpop.f32.mrb[0].mxu0
        %v3601 = vadd.f32 0.0, %v3600
        %v3602 = vpop.f32.mrb[0].mxu0
        %3603 = vdwg.mxu0
        %3604 = vrot.lane.b32.xlu0 %v689, 112
        %v3605 = vpop.permute.xlu0 %3604
        %3606 = vrot.lane.b32.xlu0 %v690, 112
        %v3607 = vpop.permute.xlu0 %3606
        %3608 = vrot.lane.b32.xlu0 %v691, 112
        %v3609 = vpop.permute.xlu0 %3608
        %3610 = vrot.lane.b32.xlu0 %v692, 112
        %v3611 = vpop.permute.xlu0 %3610
        %3612 = vrot.lane.b32.xlu0 %v689, 80
        %v3613 = vpop.permute.xlu0 %3612
        %3614 = vrot.lane.b32.xlu0 %v690, 80
        %v3615 = vpop.permute.xlu0 %3614
        %3616 = vrot.lane.b32.xlu0 %v691, 80
        %v3617 = vpop.permute.xlu0 %3616
        %3618 = vrot.lane.b32.xlu0 %v692, 80
        %v3619 = vpop.permute.xlu0 %3618
        %v3621 = vsel %vm713, %v3605, 0
        %v3624 = vsel %vm713, %v3607, 0
        %v3627 = vsel %vm713, %v3609, 0
        %v3630 = vsel %vm713, %v3611, 0
        %v3633 = vsel %vm713, %v3613, 0
        %v3636 = vsel %vm713, %v3615, 0
        %v3639 = vsel %vm713, %v3617, 0
        %v3642 = vsel %vm713, %v3619, 0
        %3644 = vmatprep.subr.bf16.mxu0 0
        %3645 = vmatpush1.bf16.xpose.msra.mxu0 %v3633
        %3646 = vmatprep.subr.bf16.mxu0 0
        %3647 = vmatpush1.bf16.xpose.msra.mxu0 %v3636
        %3648 = vmatprep.subr.bf16.mxu0 0
        %3649 = vmatpush1.bf16.xpose.msra.mxu0 %v3639
        %3650 = vmatprep.subr.bf16.mxu0 0
        %3651 = vmatpush1.bf16.xpose.msra.mxu0 %v3642
        %3652 = vmatprep.subr.bf16.mxu0 0
        %3653 = vmatpush1.bf16.xpose.msra.mxu0 0
        %3654 = vmatprep.subr.bf16.mxu0 0
        %3655 = vmatpush1.bf16.xpose.msra.mxu0 0
        %3656 = vmatprep.subr.bf16.mxu0 0
        %3657 = vmatpush1.bf16.xpose.msra.mxu0 0
        %3658 = vmatprep.subr.bf16.mxu0 0
        %3659 = vmatpush1.bf16.xpose.msra.mxu0 0
        %3660 = vmatprep.subr.bf16.mxu0 0
        %3661 = vmatpush1.bf16.xpose.msra.mxu0 0
        %3662 = vmatprep.subr.bf16.mxu0 0
        %3663 = vmatpush1.bf16.xpose.msra.mxu0 0
        %3664 = vmatprep.subr.bf16.mxu0 0
        %3665 = vmatpush1.bf16.xpose.msra.mxu0 0
        %3666 = vmatprep.subr.bf16.mxu0 0
        %3667 = vmatpush1.bf16.xpose.msra.mxu0 0
        %3668 = vmatprep.subr.bf16.mxu0 0
        %3669 = vmatpush1.bf16.xpose.msra.mxu0 0
        %3670 = vmatprep.subr.bf16.mxu0 0
        %3671 = vmatpush1.bf16.xpose.msra.mxu0 0
        %3672 = vmatprep.subr.bf16.mxu0 0
        %3673 = vmatpush1.bf16.xpose.msra.mxu0 0
        %3674 = vmatprep.subr.bf16.mxu0 0
        %3675 = vmatpush1.bf16.xpose.msra.mxu0 0
        %3676 = vmatprep.mubr.bf16.mxu0 0
        %3677 = vmatmul.mubr.bf16.gmra.mrb[0].mxu0 %v3621
        %v3678 = vpop.f32.mrb[0].mxu0
        %v3679 = vadd.f32 0.0, %v3678
        %v3680 = vpop.f32.mrb[0].mxu0
        %v3681 = vpop.f32.mrb[0].mxu0
        %v3682 = vadd.f32 0.0, %v3681
        %v3683 = vpop.f32.mrb[0].mxu0
        %3684 = vmatprep.mubr.bf16.mxu0 0
        %3685 = vmatmul.mubr.bf16.gmra.mrb[0].mxu0 %v3624
        %v3686 = vpop.f32.mrb[0].mxu0
        %v3687 = vadd.f32 0.0, %v3686
        %v3688 = vpop.f32.mrb[0].mxu0
        %v3689 = vpop.f32.mrb[0].mxu0
        %v3690 = vadd.f32 0.0, %v3689
        %v3691 = vpop.f32.mrb[0].mxu0
        %3692 = vmatprep.mubr.bf16.mxu0 0
        %3693 = vmatmul.mubr.bf16.gmra.mrb[0].mxu0 %v3627
        %v3694 = vpop.f32.mrb[0].mxu0
        %v3695 = vadd.f32 0.0, %v3694
        %v3696 = vpop.f32.mrb[0].mxu0
        %v3697 = vpop.f32.mrb[0].mxu0
        %v3698 = vadd.f32 0.0, %v3697
        %v3699 = vpop.f32.mrb[0].mxu0
        %3700 = vmatprep.mubr.bf16.mxu0 0
        %3701 = vmatmul.mubr.bf16.gmra.mrb[0].mxu0 %v3630
        %v3702 = vpop.f32.mrb[0].mxu0
        %v3703 = vadd.f32 0.0, %v3702
        %v3704 = vpop.f32.mrb[0].mxu0
        %v3705 = vpop.f32.mrb[0].mxu0
        %v3706 = vadd.f32 0.0, %v3705
        %v3707 = vpop.f32.mrb[0].mxu0
        %3708 = vdwg.mxu0
        %3709 = vrot.lane.b32.xlu0 %v693, 112
        %v3710 = vpop.permute.xlu0 %3709
        %3711 = vrot.lane.b32.xlu0 %v694, 112
        %v3712 = vpop.permute.xlu0 %3711
        %3713 = vrot.lane.b32.xlu0 %v695, 112
        %v3714 = vpop.permute.xlu0 %3713
        %3715 = vrot.lane.b32.xlu0 %v696, 112
        %v3716 = vpop.permute.xlu0 %3715
        %3717 = vrot.lane.b32.xlu0 %v693, 80
        %v3718 = vpop.permute.xlu0 %3717
        %3719 = vrot.lane.b32.xlu0 %v694, 80
        %v3720 = vpop.permute.xlu0 %3719
        %3721 = vrot.lane.b32.xlu0 %v695, 80
        %v3722 = vpop.permute.xlu0 %3721
        %3723 = vrot.lane.b32.xlu0 %v696, 80
        %v3724 = vpop.permute.xlu0 %3723
        %v3726 = vsel %vm713, %v3710, 0
        %v3729 = vsel %vm713, %v3712, 0
        %v3732 = vsel %vm713, %v3714, 0
        %v3735 = vsel %vm713, %v3716, 0
        %v3738 = vsel %vm713, %v3718, 0
        %v3741 = vsel %vm713, %v3720, 0
        %v3744 = vsel %vm713, %v3722, 0
        %v3747 = vsel %vm713, %v3724, 0
        %3749 = vmatprep.subr.bf16.mxu0 0
        %3750 = vmatpush1.bf16.xpose.msra.mxu0 %v3738
        %3751 = vmatprep.subr.bf16.mxu0 0
        %3752 = vmatpush1.bf16.xpose.msra.mxu0 %v3741
        %3753 = vmatprep.subr.bf16.mxu0 0
        %3754 = vmatpush1.bf16.xpose.msra.mxu0 %v3744
        %3755 = vmatprep.subr.bf16.mxu0 0
        %3756 = vmatpush1.bf16.xpose.msra.mxu0 %v3747
        %3757 = vmatprep.subr.bf16.mxu0 0
        %3758 = vmatpush1.bf16.xpose.msra.mxu0 0
        %3759 = vmatprep.subr.bf16.mxu0 0
        %3760 = vmatpush1.bf16.xpose.msra.mxu0 0
        %3761 = vmatprep.subr.bf16.mxu0 0
        %3762 = vmatpush1.bf16.xpose.msra.mxu0 0
        %3763 = vmatprep.subr.bf16.mxu0 0
        %3764 = vmatpush1.bf16.xpose.msra.mxu0 0
        %3765 = vmatprep.subr.bf16.mxu0 0
        %3766 = vmatpush1.bf16.xpose.msra.mxu0 0
        %3767 = vmatprep.subr.bf16.mxu0 0
        %3768 = vmatpush1.bf16.xpose.msra.mxu0 0
        %3769 = vmatprep.subr.bf16.mxu0 0
        %3770 = vmatpush1.bf16.xpose.msra.mxu0 0
        %3771 = vmatprep.subr.bf16.mxu0 0
        %3772 = vmatpush1.bf16.xpose.msra.mxu0 0
        %3773 = vmatprep.subr.bf16.mxu0 0
        %3774 = vmatpush1.bf16.xpose.msra.mxu0 0
        %3775 = vmatprep.subr.bf16.mxu0 0
        %3776 = vmatpush1.bf16.xpose.msra.mxu0 0
        %3777 = vmatprep.subr.bf16.mxu0 0
        %3778 = vmatpush1.bf16.xpose.msra.mxu0 0
        %3779 = vmatprep.subr.bf16.mxu0 0
        %3780 = vmatpush1.bf16.xpose.msra.mxu0 0
        %3781 = vmatprep.mubr.bf16.mxu0 0
        %3782 = vmatmul.mubr.bf16.gmra.mrb[0].mxu0 %v3726
        %v3783 = vpop.f32.mrb[0].mxu0
        %v3784 = vadd.f32 0.0, %v3783
        %v3785 = vpop.f32.mrb[0].mxu0
        %v3786 = vpop.f32.mrb[0].mxu0
        %v3787 = vadd.f32 0.0, %v3786
        %v3788 = vpop.f32.mrb[0].mxu0
        %3789 = vmatprep.mubr.bf16.mxu0 0
        %3790 = vmatmul.mubr.bf16.gmra.mrb[0].mxu0 %v3729
        %v3791 = vpop.f32.mrb[0].mxu0
        %v3792 = vadd.f32 0.0, %v3791
        %v3793 = vpop.f32.mrb[0].mxu0
        %v3794 = vpop.f32.mrb[0].mxu0
        %v3795 = vadd.f32 0.0, %v3794
        %v3796 = vpop.f32.mrb[0].mxu0
        %3797 = vmatprep.mubr.bf16.mxu0 0
        %3798 = vmatmul.mubr.bf16.gmra.mrb[0].mxu0 %v3732
        %v3799 = vpop.f32.mrb[0].mxu0
        %v3800 = vadd.f32 0.0, %v3799
        %v3801 = vpop.f32.mrb[0].mxu0
        %v3802 = vpop.f32.mrb[0].mxu0
        %v3803 = vadd.f32 0.0, %v3802
        %v3804 = vpop.f32.mrb[0].mxu0
        %3805 = vmatprep.mubr.bf16.mxu0 0
        %3806 = vmatmul.mubr.bf16.gmra.mrb[0].mxu0 %v3735
        %v3807 = vpop.f32.mrb[0].mxu0
        %v3808 = vadd.f32 0.0, %v3807
        %v3809 = vpop.f32.mrb[0].mxu0
        %v3810 = vpop.f32.mrb[0].mxu0
        %v3811 = vadd.f32 0.0, %v3810
        %v3812 = vpop.f32.mrb[0].mxu0
        %3813 = vdwg.mxu0
        %3814 = vrot.lane.b32.xlu0 %v697, 112
        %v3815 = vpop.permute.xlu0 %3814
        %3816 = vrot.lane.b32.xlu0 %v698, 112
        %v3817 = vpop.permute.xlu0 %3816
        %3818 = vrot.lane.b32.xlu0 %v699, 112
        %v3819 = vpop.permute.xlu0 %3818
        %3820 = vrot.lane.b32.xlu0 %v700, 112
        %v3821 = vpop.permute.xlu0 %3820
        %3822 = vrot.lane.b32.xlu0 %v697, 80
        %v3823 = vpop.permute.xlu0 %3822
        %3824 = vrot.lane.b32.xlu0 %v698, 80
        %v3825 = vpop.permute.xlu0 %3824
        %3826 = vrot.lane.b32.xlu0 %v699, 80
        %v3827 = vpop.permute.xlu0 %3826
        %3828 = vrot.lane.b32.xlu0 %v700, 80
        %v3829 = vpop.permute.xlu0 %3828
        %v3831 = vsel %vm713, %v3815, 0
        %v3834 = vsel %vm713, %v3817, 0
        %v3837 = vsel %vm713, %v3819, 0
        %v3840 = vsel %vm713, %v3821, 0
        %v3843 = vsel %vm713, %v3823, 0
        %v3846 = vsel %vm713, %v3825, 0
        %v3849 = vsel %vm713, %v3827, 0
        %v3852 = vsel %vm713, %v3829, 0
        %3854 = vmatprep.subr.bf16.mxu0 0
        %3855 = vmatpush1.bf16.xpose.msra.mxu0 %v3843
        %3856 = vmatprep.subr.bf16.mxu0 0
        %3857 = vmatpush1.bf16.xpose.msra.mxu0 %v3846
        %3858 = vmatprep.subr.bf16.mxu0 0
        %3859 = vmatpush1.bf16.xpose.msra.mxu0 %v3849
        %3860 = vmatprep.subr.bf16.mxu0 0
        %3861 = vmatpush1.bf16.xpose.msra.mxu0 %v3852
        %3862 = vmatprep.subr.bf16.mxu0 0
        %3863 = vmatpush1.bf16.xpose.msra.mxu0 0
        %3864 = vmatprep.subr.bf16.mxu0 0
        %3865 = vmatpush1.bf16.xpose.msra.mxu0 0
        %3866 = vmatprep.subr.bf16.mxu0 0
        %3867 = vmatpush1.bf16.xpose.msra.mxu0 0
        %3868 = vmatprep.subr.bf16.mxu0 0
        %3869 = vmatpush1.bf16.xpose.msra.mxu0 0
        %3870 = vmatprep.subr.bf16.mxu0 0
        %3871 = vmatpush1.bf16.xpose.msra.mxu0 0
        %3872 = vmatprep.subr.bf16.mxu0 0
        %3873 = vmatpush1.bf16.xpose.msra.mxu0 0
        %3874 = vmatprep.subr.bf16.mxu0 0
        %3875 = vmatpush1.bf16.xpose.msra.mxu0 0
        %3876 = vmatprep.subr.bf16.mxu0 0
        %3877 = vmatpush1.bf16.xpose.msra.mxu0 0
        %3878 = vmatprep.subr.bf16.mxu0 0
        %3879 = vmatpush1.bf16.xpose.msra.mxu0 0
        %3880 = vmatprep.subr.bf16.mxu0 0
        %3881 = vmatpush1.bf16.xpose.msra.mxu0 0
        %3882 = vmatprep.subr.bf16.mxu0 0
        %3883 = vmatpush1.bf16.xpose.msra.mxu0 0
        %3884 = vmatprep.subr.bf16.mxu0 0
        %3885 = vmatpush1.bf16.xpose.msra.mxu0 0
        %3886 = vmatprep.mubr.bf16.mxu0 0
        %3887 = vmatmul.mubr.bf16.gmra.mrb[0].mxu0 %v3831
        %v3888 = vpop.f32.mrb[0].mxu0
        %v3889 = vadd.f32 0.0, %v3888
        %v3890 = vpop.f32.mrb[0].mxu0
        %v3891 = vpop.f32.mrb[0].mxu0
        %v3892 = vadd.f32 0.0, %v3891
        %v3893 = vpop.f32.mrb[0].mxu0
        %3894 = vmatprep.mubr.bf16.mxu0 0
        %3895 = vmatmul.mubr.bf16.gmra.mrb[0].mxu0 %v3834
        %v3896 = vpop.f32.mrb[0].mxu0
        %v3897 = vadd.f32 0.0, %v3896
        %v3898 = vpop.f32.mrb[0].mxu0
        %v3899 = vpop.f32.mrb[0].mxu0
        %v3900 = vadd.f32 0.0, %v3899
        %v3901 = vpop.f32.mrb[0].mxu0
        %3902 = vmatprep.mubr.bf16.mxu0 0
        %3903 = vmatmul.mubr.bf16.gmra.mrb[0].mxu0 %v3837
        %v3904 = vpop.f32.mrb[0].mxu0
        %v3905 = vadd.f32 0.0, %v3904
        %v3906 = vpop.f32.mrb[0].mxu0
        %v3907 = vpop.f32.mrb[0].mxu0
        %v3908 = vadd.f32 0.0, %v3907
        %v3909 = vpop.f32.mrb[0].mxu0
        %3910 = vmatprep.mubr.bf16.mxu0 0
        %3911 = vmatmul.mubr.bf16.gmra.mrb[0].mxu0 %v3840
        %v3912 = vpop.f32.mrb[0].mxu0
        %v3913 = vadd.f32 0.0, %v3912
        %v3914 = vpop.f32.mrb[0].mxu0
        %v3915 = vpop.f32.mrb[0].mxu0
        %v3916 = vadd.f32 0.0, %v3915
        %v3917 = vpop.f32.mrb[0].mxu0
        %3918 = vdwg.mxu0
        %v3919 = vadd.f32 %v3574, %v637
        %v3920 = vadd.f32 %v3577, %v638
        %v3921 = vadd.f32 %v3582, %v639
        %v3922 = vadd.f32 %v3585, %v640
        %v3923 = vadd.f32 %v3590, %v641
        %v3924 = vadd.f32 %v3593, %v642
        %v3925 = vadd.f32 %v3598, %v643
        %v3926 = vadd.f32 %v3601, %v644
        %v3927 = vadd.f32 %v3679, %v669
        %v3928 = vadd.f32 %v3682, %v670
        %v3929 = vadd.f32 %v3687, %v671
        %v3930 = vadd.f32 %v3690, %v672
        %v3931 = vadd.f32 %v3695, %v673
        %v3932 = vadd.f32 %v3698, %v674
        %v3933 = vadd.f32 %v3703, %v675
        %v3934 = vadd.f32 %v3706, %v676
        %v3935 = vadd.f32 %v3784, %v637
        %v3936 = vadd.f32 %v3787, %v638
        %v3937 = vadd.f32 %v3792, %v639
        %v3938 = vadd.f32 %v3795, %v640
        %v3939 = vadd.f32 %v3800, %v641
        %v3940 = vadd.f32 %v3803, %v642
        %v3941 = vadd.f32 %v3808, %v643
        %v3942 = vadd.f32 %v3811, %v644
        %v3943 = vadd.f32 %v3889, %v669
        %v3944 = vadd.f32 %v3892, %v670
        %v3945 = vadd.f32 %v3897, %v671
        %v3946 = vadd.f32 %v3900, %v672
        %v3947 = vadd.f32 %v3905, %v673
        %v3948 = vadd.f32 %v3908, %v674
        %v3949 = vadd.f32 %v3913, %v675
        %v3950 = vadd.f32 %v3916, %v676
        %v3951 = vsel %vm1138, %v3919, -inf
        %3952 = vmax.xlane.f32.xlu0 %v3951
        %v3953 = vpop.xlane.xlu0 %3952
        %v3954 = vsel %vm1138, %v3920, -inf
        %3955 = vmax.xlane.f32.xlu0 %v3954
        %v3956 = vpop.xlane.xlu0 %3955
        %v3957 = vsel %vm1138, %v3921, -inf
        %3958 = vmax.xlane.f32.xlu0 %v3957
        %v3959 = vpop.xlane.xlu0 %3958
        %v3960 = vsel %vm1138, %v3922, -inf
        %3961 = vmax.xlane.f32.xlu0 %v3960
        %v3962 = vpop.xlane.xlu0 %3961
        %v3963 = vsel %vm1138, %v3923, -inf
        %3964 = vmax.xlane.f32.xlu0 %v3963
        %v3965 = vpop.xlane.xlu0 %3964
        %v3966 = vsel %vm1138, %v3924, -inf
        %3967 = vmax.xlane.f32.xlu0 %v3966
        %v3968 = vpop.xlane.xlu0 %3967
        %v3969 = vsel %vm1138, %v3925, -inf
        %3970 = vmax.xlane.f32.xlu0 %v3969
        %v3971 = vpop.xlane.xlu0 %3970
        %v3972 = vsel %vm1138, %v3926, -inf
        %3973 = vmax.xlane.f32.xlu0 %v3972
        %v3974 = vpop.xlane.xlu0 %3973
        %v3975 = vsel %vm1138, %v3927, -inf
        %3976 = vmax.xlane.f32.xlu0 %v3975
        %v3977 = vpop.xlane.xlu0 %3976
        %v3978 = vsel %vm1138, %v3928, -inf
        %3979 = vmax.xlane.f32.xlu0 %v3978
        %v3980 = vpop.xlane.xlu0 %3979
        %v3981 = vsel %vm1138, %v3929, -inf
        %3982 = vmax.xlane.f32.xlu0 %v3981
        %v3983 = vpop.xlane.xlu0 %3982
        %v3984 = vsel %vm1138, %v3930, -inf
        %3985 = vmax.xlane.f32.xlu0 %v3984
        %v3986 = vpop.xlane.xlu0 %3985
        %v3987 = vsel %vm1138, %v3931, -inf
        %3988 = vmax.xlane.f32.xlu0 %v3987
        %v3989 = vpop.xlane.xlu0 %3988
        %v3990 = vsel %vm1138, %v3932, -inf
        %3991 = vmax.xlane.f32.xlu0 %v3990
        %v3992 = vpop.xlane.xlu0 %3991
        %v3993 = vsel %vm1138, %v3933, -inf
        %3994 = vmax.xlane.f32.xlu0 %v3993
        %v3995 = vpop.xlane.xlu0 %3994
        %v3996 = vsel %vm1138, %v3934, -inf
        %3997 = vmax.xlane.f32.xlu0 %v3996
        %v3998 = vpop.xlane.xlu0 %3997
        %v3999 = vsel %vm1138, %v3935, -inf
        %4000 = vmax.xlane.f32.xlu0 %v3999
        %v4001 = vpop.xlane.xlu0 %4000
        %v4002 = vsel %vm1138, %v3936, -inf
        %4003 = vmax.xlane.f32.xlu0 %v4002
        %v4004 = vpop.xlane.xlu0 %4003
        %v4005 = vsel %vm1138, %v3937, -inf
        %4006 = vmax.xlane.f32.xlu0 %v4005
        %v4007 = vpop.xlane.xlu0 %4006
        %v4008 = vsel %vm1138, %v3938, -inf
        %4009 = vmax.xlane.f32.xlu0 %v4008
        %v4010 = vpop.xlane.xlu0 %4009
        %v4011 = vsel %vm1138, %v3939, -inf
        %4012 = vmax.xlane.f32.xlu0 %v4011
        %v4013 = vpop.xlane.xlu0 %4012
        %v4014 = vsel %vm1138, %v3940, -inf
        %4015 = vmax.xlane.f32.xlu0 %v4014
        %v4016 = vpop.xlane.xlu0 %4015
        %v4017 = vsel %vm1138, %v3941, -inf
        %4018 = vmax.xlane.f32.xlu0 %v4017
        %v4019 = vpop.xlane.xlu0 %4018
        %v4020 = vsel %vm1138, %v3942, -inf
        %4021 = vmax.xlane.f32.xlu0 %v4020
        %v4022 = vpop.xlane.xlu0 %4021
        %v4023 = vsel %vm1138, %v3943, -inf
        %4024 = vmax.xlane.f32.xlu0 %v4023
        %v4025 = vpop.xlane.xlu0 %4024
        %v4026 = vsel %vm1138, %v3944, -inf
        %4027 = vmax.xlane.f32.xlu0 %v4026
        %v4028 = vpop.xlane.xlu0 %4027
        %v4029 = vsel %vm1138, %v3945, -inf
        %4030 = vmax.xlane.f32.xlu0 %v4029
        %v4031 = vpop.xlane.xlu0 %4030
        %v4032 = vsel %vm1138, %v3946, -inf
        %4033 = vmax.xlane.f32.xlu0 %v4032
        %v4034 = vpop.xlane.xlu0 %4033
        %v4035 = vsel %vm1138, %v3947, -inf
        %4036 = vmax.xlane.f32.xlu0 %v4035
        %v4037 = vpop.xlane.xlu0 %4036
        %v4038 = vsel %vm1138, %v3948, -inf
        %4039 = vmax.xlane.f32.xlu0 %v4038
        %v4040 = vpop.xlane.xlu0 %4039
        %v4041 = vsel %vm1138, %v3949, -inf
        %4042 = vmax.xlane.f32.xlu0 %v4041
        %v4043 = vpop.xlane.xlu0 %4042
        %v4044 = vsel %vm1138, %v3950, -inf
        %4045 = vmax.xlane.f32.xlu0 %v4044
        %v4046 = vpop.xlane.xlu0 %4045
        %v4047 = vsub.f32 %v3919, %v3953
        %v4048 = vsub.f32 %v3920, %v3956
        %v4049 = vsub.f32 %v3921, %v3959
        %v4050 = vsub.f32 %v3922, %v3962
        %v4051 = vsub.f32 %v3923, %v3965
        %v4052 = vsub.f32 %v3924, %v3968
        %v4053 = vsub.f32 %v3925, %v3971
        %v4054 = vsub.f32 %v3926, %v3974
        %v4055 = vsub.f32 %v3927, %v3977
        %v4056 = vsub.f32 %v3928, %v3980
        %v4057 = vsub.f32 %v3929, %v3983
        %v4058 = vsub.f32 %v3930, %v3986
        %v4059 = vsub.f32 %v3931, %v3989
        %v4060 = vsub.f32 %v3932, %v3992
        %v4061 = vsub.f32 %v3933, %v3995
        %v4062 = vsub.f32 %v3934, %v3998
        %v4063 = vsub.f32 %v3935, %v4001
        %v4064 = vsub.f32 %v3936, %v4004
        %v4065 = vsub.f32 %v3937, %v4007
        %v4066 = vsub.f32 %v3938, %v4010
        %v4067 = vsub.f32 %v3939, %v4013
        %v4068 = vsub.f32 %v3940, %v4016
        %v4069 = vsub.f32 %v3941, %v4019
        %v4070 = vsub.f32 %v3942, %v4022
        %v4071 = vsub.f32 %v3943, %v4025
        %v4072 = vsub.f32 %v3944, %v4028
        %v4073 = vsub.f32 %v3945, %v4031
        %v4074 = vsub.f32 %v3946, %v4034
        %v4075 = vsub.f32 %v3947, %v4037
        %v4076 = vsub.f32 %v3948, %v4040
        %v4077 = vsub.f32 %v3949, %v4043
        %v4078 = vsub.f32 %v3950, %v4046
        %v4079 = vmul.f32 %v4047, 1.442695
        %v4080 = vpow.pop %v4079
        %v4081 = vmul.f32 %v4048, 1.442695
        %v4082 = vpow.pop %v4081
        %v4083 = vmul.f32 %v4049, 1.442695
        %v4084 = vpow.pop %v4083
        %v4085 = vmul.f32 %v4050, 1.442695
        %v4086 = vpow.pop %v4085
        %v4087 = vmul.f32 %v4051, 1.442695
        %v4088 = vpow.pop %v4087
        %v4089 = vmul.f32 %v4052, 1.442695
        %v4090 = vpow.pop %v4089
        %v4091 = vmul.f32 %v4053, 1.442695
        %v4092 = vpow.pop %v4091
        %v4093 = vmul.f32 %v4054, 1.442695
        %v4094 = vpow.pop %v4093
        %v4095 = vmul.f32 %v4055, 1.442695
        %v4096 = vpow.pop %v4095
        %v4097 = vmul.f32 %v4056, 1.442695
        %v4098 = vpow.pop %v4097
        %v4099 = vmul.f32 %v4057, 1.442695
        %v4100 = vpow.pop %v4099
        %v4101 = vmul.f32 %v4058, 1.442695
        %v4102 = vpow.pop %v4101
        %v4103 = vmul.f32 %v4059, 1.442695
        %v4104 = vpow.pop %v4103
        %v4105 = vmul.f32 %v4060, 1.442695
        %v4106 = vpow.pop %v4105
        %v4107 = vmul.f32 %v4061, 1.442695
        %v4108 = vpow.pop %v4107
        %v4109 = vmul.f32 %v4062, 1.442695
        %v4110 = vpow.pop %v4109
        %v4111 = vmul.f32 %v4063, 1.442695
        %v4112 = vpow.pop %v4111
        %v4113 = vmul.f32 %v4064, 1.442695
        %v4114 = vpow.pop %v4113
        %v4115 = vmul.f32 %v4065, 1.442695
        %v4116 = vpow.pop %v4115
        %v4117 = vmul.f32 %v4066, 1.442695
        %v4118 = vpow.pop %v4117
        %v4119 = vmul.f32 %v4067, 1.442695
        %v4120 = vpow.pop %v4119
        %v4121 = vmul.f32 %v4068, 1.442695
        %v4122 = vpow.pop %v4121
        %v4123 = vmul.f32 %v4069, 1.442695
        %v4124 = vpow.pop %v4123
        %v4125 = vmul.f32 %v4070, 1.442695
        %v4126 = vpow.pop %v4125
        %v4127 = vmul.f32 %v4071, 1.442695
        %v4128 = vpow.pop %v4127
        %v4129 = vmul.f32 %v4072, 1.442695
        %v4130 = vpow.pop %v4129
        %v4131 = vmul.f32 %v4073, 1.442695
        %v4132 = vpow.pop %v4131
        %v4133 = vmul.f32 %v4074, 1.442695
        %v4134 = vpow.pop %v4133
        %v4135 = vmul.f32 %v4075, 1.442695
        %v4136 = vpow.pop %v4135
        %v4137 = vmul.f32 %v4076, 1.442695
        %v4138 = vpow.pop %v4137
        %v4139 = vmul.f32 %v4077, 1.442695
        %v4140 = vpow.pop %v4139
        %v4141 = vmul.f32 %v4078, 1.442695
        %v4142 = vpow.pop %v4141
        %v4143 = vsel %vm1138, %v4080, 0.0
        %4144 = vadd.xlane.f32.xlu0 %v4143
        %v4145 = vpop.xlane.xlu0 %4144
        %v4146 = vsel %vm1138, %v4082, 0.0
        %4147 = vadd.xlane.f32.xlu0 %v4146
        %v4148 = vpop.xlane.xlu0 %4147
        %v4149 = vsel %vm1138, %v4084, 0.0
        %4150 = vadd.xlane.f32.xlu0 %v4149
        %v4151 = vpop.xlane.xlu0 %4150
        %v4152 = vsel %vm1138, %v4086, 0.0
        %4153 = vadd.xlane.f32.xlu0 %v4152
        %v4154 = vpop.xlane.xlu0 %4153
        %v4155 = vsel %vm1138, %v4088, 0.0
        %4156 = vadd.xlane.f32.xlu0 %v4155
        %v4157 = vpop.xlane.xlu0 %4156
        %v4158 = vsel %vm1138, %v4090, 0.0
        %4159 = vadd.xlane.f32.xlu0 %v4158
        %v4160 = vpop.xlane.xlu0 %4159
        %v4161 = vsel %vm1138, %v4092, 0.0
        %4162 = vadd.xlane.f32.xlu0 %v4161
        %v4163 = vpop.xlane.xlu0 %4162
        %v4164 = vsel %vm1138, %v4094, 0.0
        %4165 = vadd.xlane.f32.xlu0 %v4164
        %v4166 = vpop.xlane.xlu0 %4165
        %v4167 = vsel %vm1138, %v4096, 0.0
        %4168 = vadd.xlane.f32.xlu0 %v4167
        %v4169 = vpop.xlane.xlu0 %4168
        %v4170 = vsel %vm1138, %v4098, 0.0
        %4171 = vadd.xlane.f32.xlu0 %v4170
        %v4172 = vpop.xlane.xlu0 %4171
        %v4173 = vsel %vm1138, %v4100, 0.0
        %4174 = vadd.xlane.f32.xlu0 %v4173
        %v4175 = vpop.xlane.xlu0 %4174
        %v4176 = vsel %vm1138, %v4102, 0.0
        %4177 = vadd.xlane.f32.xlu0 %v4176
        %v4178 = vpop.xlane.xlu0 %4177
        %v4179 = vsel %vm1138, %v4104, 0.0
        %4180 = vadd.xlane.f32.xlu0 %v4179
        %v4181 = vpop.xlane.xlu0 %4180
        %v4182 = vsel %vm1138, %v4106, 0.0
        %4183 = vadd.xlane.f32.xlu0 %v4182
        %v4184 = vpop.xlane.xlu0 %4183
        %v4185 = vsel %vm1138, %v4108, 0.0
        %4186 = vadd.xlane.f32.xlu0 %v4185
        %v4187 = vpop.xlane.xlu0 %4186
        %v4188 = vsel %vm1138, %v4110, 0.0
        %4189 = vadd.xlane.f32.xlu0 %v4188
        %v4190 = vpop.xlane.xlu0 %4189
        %v4191 = vsel %vm1138, %v4112, 0.0
        %4192 = vadd.xlane.f32.xlu0 %v4191
        %v4193 = vpop.xlane.xlu0 %4192
        %v4194 = vsel %vm1138, %v4114, 0.0
        %4195 = vadd.xlane.f32.xlu0 %v4194
        %v4196 = vpop.xlane.xlu0 %4195
        %v4197 = vsel %vm1138, %v4116, 0.0
        %4198 = vadd.xlane.f32.xlu0 %v4197
        %v4199 = vpop.xlane.xlu0 %4198
        %v4200 = vsel %vm1138, %v4118, 0.0
        %4201 = vadd.xlane.f32.xlu0 %v4200
        %v4202 = vpop.xlane.xlu0 %4201
        %v4203 = vsel %vm1138, %v4120, 0.0
        %4204 = vadd.xlane.f32.xlu0 %v4203
        %v4205 = vpop.xlane.xlu0 %4204
        %v4206 = vsel %vm1138, %v4122, 0.0
        %4207 = vadd.xlane.f32.xlu0 %v4206
        %v4208 = vpop.xlane.xlu0 %4207
        %v4209 = vsel %vm1138, %v4124, 0.0
        %4210 = vadd.xlane.f32.xlu0 %v4209
        %v4211 = vpop.xlane.xlu0 %4210
        %v4212 = vsel %vm1138, %v4126, 0.0
        %4213 = vadd.xlane.f32.xlu0 %v4212
        %v4214 = vpop.xlane.xlu0 %4213
        %v4215 = vsel %vm1138, %v4128, 0.0
        %4216 = vadd.xlane.f32.xlu0 %v4215
        %v4217 = vpop.xlane.xlu0 %4216
        %v4218 = vsel %vm1138, %v4130, 0.0
        %4219 = vadd.xlane.f32.xlu0 %v4218
        %v4220 = vpop.xlane.xlu0 %4219
        %v4221 = vsel %vm1138, %v4132, 0.0
        %4222 = vadd.xlane.f32.xlu0 %v4221
        %v4223 = vpop.xlane.xlu0 %4222
        %v4224 = vsel %vm1138, %v4134, 0.0
        %4225 = vadd.xlane.f32.xlu0 %v4224
        %v4226 = vpop.xlane.xlu0 %4225
        %v4227 = vsel %vm1138, %v4136, 0.0
        %4228 = vadd.xlane.f32.xlu0 %v4227
        %v4229 = vpop.xlane.xlu0 %4228
        %v4230 = vsel %vm1138, %v4138, 0.0
        %4231 = vadd.xlane.f32.xlu0 %v4230
        %v4232 = vpop.xlane.xlu0 %4231
        %v4233 = vsel %vm1138, %v4140, 0.0
        %4234 = vadd.xlane.f32.xlu0 %v4233
        %v4235 = vpop.xlane.xlu0 %4234
        %v4236 = vsel %vm1138, %v4142, 0.0
        %4237 = vadd.xlane.f32.xlu0 %v4236
        %v4238 = vpop.xlane.xlu0 %4237
        %v4239 = vrcp.pop %v4145
        %v4240 = vrcp.pop %v4148
        %v4241 = vrcp.pop %v4151
        %v4242 = vrcp.pop %v4154
        %v4243 = vrcp.pop %v4157
        %v4244 = vrcp.pop %v4160
        %v4245 = vrcp.pop %v4163
        %v4246 = vrcp.pop %v4166
        %v4247 = vrcp.pop %v4169
        %v4248 = vrcp.pop %v4172
        %v4249 = vrcp.pop %v4175
        %v4250 = vrcp.pop %v4178
        %v4251 = vrcp.pop %v4181
        %v4252 = vrcp.pop %v4184
        %v4253 = vrcp.pop %v4187
        %v4254 = vrcp.pop %v4190
        %v4255 = vrcp.pop %v4193
        %v4256 = vrcp.pop %v4196
        %v4257 = vrcp.pop %v4199
        %v4258 = vrcp.pop %v4202
        %v4259 = vrcp.pop %v4205
        %v4260 = vrcp.pop %v4208
        %v4261 = vrcp.pop %v4211
        %v4262 = vrcp.pop %v4214
        %v4263 = vrcp.pop %v4217
        %v4264 = vrcp.pop %v4220
        %v4265 = vrcp.pop %v4223
        %v4266 = vrcp.pop %v4226
        %v4267 = vrcp.pop %v4229
        %v4268 = vrcp.pop %v4232
        %v4269 = vrcp.pop %v4235
        %v4270 = vrcp.pop %v4238
        %v4271 = vmul.f32 %v4080, %v4239
        %v4272 = vmul.f32 %v4082, %v4240
        %v4273 = vmul.f32 %v4084, %v4241
        %v4274 = vmul.f32 %v4086, %v4242
        %v4275 = vmul.f32 %v4088, %v4243
        %v4276 = vmul.f32 %v4090, %v4244
        %v4277 = vmul.f32 %v4092, %v4245
        %v4278 = vmul.f32 %v4094, %v4246
        %v4279 = vmul.f32 %v4096, %v4247
        %v4280 = vmul.f32 %v4098, %v4248
        %v4281 = vmul.f32 %v4100, %v4249
        %v4282 = vmul.f32 %v4102, %v4250
        %v4283 = vmul.f32 %v4104, %v4251
        %v4284 = vmul.f32 %v4106, %v4252
        %v4285 = vmul.f32 %v4108, %v4253
        %v4286 = vmul.f32 %v4110, %v4254
        %v4287 = vmul.f32 %v4112, %v4255
        %v4288 = vmul.f32 %v4114, %v4256
        %v4289 = vmul.f32 %v4116, %v4257
        %v4290 = vmul.f32 %v4118, %v4258
        %v4291 = vmul.f32 %v4120, %v4259
        %v4292 = vmul.f32 %v4122, %v4260
        %v4293 = vmul.f32 %v4124, %v4261
        %v4294 = vmul.f32 %v4126, %v4262
        %v4295 = vmul.f32 %v4128, %v4263
        %v4296 = vmul.f32 %v4130, %v4264
        %v4297 = vmul.f32 %v4132, %v4265
        %v4298 = vmul.f32 %v4134, %v4266
        %v4299 = vmul.f32 %v4136, %v4267
        %v4300 = vmul.f32 %v4138, %v4268
        %v4301 = vmul.f32 %v4140, %v4269
        %v4302 = vmul.f32 %v4142, %v4270
        %v4303 = vpack.c.bf16 %v4272, %v4271
        %v4304 = vpack.c.bf16 %v4274, %v4273
        %v4305 = vpack.c.bf16 %v4276, %v4275
        %v4306 = vpack.c.bf16 %v4278, %v4277
        %v4307 = vpack.c.bf16 %v4280, %v4279
        %v4308 = vpack.c.bf16 %v4282, %v4281
        %v4309 = vpack.c.bf16 %v4284, %v4283
        %v4310 = vpack.c.bf16 %v4286, %v4285
        %v4311 = vpack.c.bf16 %v4288, %v4287
        %v4312 = vpack.c.bf16 %v4290, %v4289
        %v4313 = vpack.c.bf16 %v4292, %v4291
        %v4314 = vpack.c.bf16 %v4294, %v4293
        %v4315 = vpack.c.bf16 %v4296, %v4295
        %v4316 = vpack.c.bf16 %v4298, %v4297
        %v4317 = vpack.c.bf16 %v4300, %v4299
        %v4318 = vpack.c.bf16 %v4302, %v4301
        %4319 = vrot.lane.b32.xlu0 %v685, 48
        %v4320 = vpop.permute.xlu0 %4319
        %4321 = vrot.lane.b32.xlu0 %v686, 48
        %v4322 = vpop.permute.xlu0 %4321
        %4323 = vrot.lane.b32.xlu0 %v687, 48
        %v4324 = vpop.permute.xlu0 %4323
        %4325 = vrot.lane.b32.xlu0 %v688, 48
        %v4326 = vpop.permute.xlu0 %4325
        %v4332 = vsel %vm1138, %v4303, 0
        %v4335 = vsel %vm1138, %v4304, 0
        %v4338 = vsel %vm1138, %v4305, 0
        %v4341 = vsel %vm1138, %v4306, 0
        %4343 = vmatprep.subr.bf16.mxu0 0
        %4344 = vmatpush1.bf16.msra.mxu0 %v4320
        %4345 = vmatprep.subr.bf16.mxu0 0
        %4346 = vmatpush1.bf16.msra.mxu0 %v4322
        %4347 = vmatprep.subr.bf16.mxu0 0
        %4348 = vmatpush1.bf16.msra.mxu0 %v4324
        %4349 = vmatprep.subr.bf16.mxu0 0
        %4350 = vmatpush1.bf16.msra.mxu0 %v4326
        %4351 = vmatprep.subr.bf16.mxu0 0
        %4352 = vmatpush1.bf16.msra.mxu0 0
        %4353 = vmatprep.subr.bf16.mxu0 0
        %4354 = vmatpush1.bf16.msra.mxu0 0
        %4355 = vmatprep.subr.bf16.mxu0 0
        %4356 = vmatpush1.bf16.msra.mxu0 0
        %4357 = vmatprep.subr.bf16.mxu0 0
        %4358 = vmatpush1.bf16.msra.mxu0 0
        %4359 = vmatprep.subr.bf16.mxu0 0
        %4360 = vmatpush1.bf16.msra.mxu0 0
        %4361 = vmatprep.subr.bf16.mxu0 0
        %4362 = vmatpush1.bf16.msra.mxu0 0
        %4363 = vmatprep.subr.bf16.mxu0 0
        %4364 = vmatpush1.bf16.msra.mxu0 0
        %4365 = vmatprep.subr.bf16.mxu0 0
        %4366 = vmatpush1.bf16.msra.mxu0 0
        %4367 = vmatprep.subr.bf16.mxu0 0
        %4368 = vmatpush1.bf16.msra.mxu0 0
        %4369 = vmatprep.subr.bf16.mxu0 0
        %4370 = vmatpush1.bf16.msra.mxu0 0
        %4371 = vmatprep.subr.bf16.mxu0 0
        %4372 = vmatpush1.bf16.msra.mxu0 0
        %4373 = vmatprep.subr.bf16.mxu0 0
        %4374 = vmatpush1.bf16.msra.mxu0 0
        %4375 = vmatprep.mubr.bf16.mxu0 0
        %4376 = vmatmul.mubr.bf16.gmra.mrb[0].mxu0 %v4332
        %v4377 = vpop.f32.mrb[0].mxu0
        %v4378 = vadd.f32 0.0, %v4377
        %v4379 = vpop.f32.mrb[0].mxu0
        %v4380 = vpop.f32.mrb[0].mxu0
        %v4381 = vadd.f32 0.0, %v4380
        %v4382 = vpop.f32.mrb[0].mxu0
        %4383 = vmatprep.mubr.bf16.mxu0 0
        %4384 = vmatmul.mubr.bf16.gmra.mrb[0].mxu0 %v4335
        %v4385 = vpop.f32.mrb[0].mxu0
        %v4386 = vadd.f32 0.0, %v4385
        %v4387 = vpop.f32.mrb[0].mxu0
        %v4388 = vpop.f32.mrb[0].mxu0
        %v4389 = vadd.f32 0.0, %v4388
        %v4390 = vpop.f32.mrb[0].mxu0
        %4391 = vmatprep.mubr.bf16.mxu0 0
        %4392 = vmatmul.mubr.bf16.gmra.mrb[0].mxu0 %v4338
        %v4393 = vpop.f32.mrb[0].mxu0
        %v4394 = vadd.f32 0.0, %v4393
        %v4395 = vpop.f32.mrb[0].mxu0
        %v4396 = vpop.f32.mrb[0].mxu0
        %v4397 = vadd.f32 0.0, %v4396
        %v4398 = vpop.f32.mrb[0].mxu0
        %4399 = vmatprep.mubr.bf16.mxu0 0
        %4400 = vmatmul.mubr.bf16.gmra.mrb[0].mxu0 %v4341
        %v4401 = vpop.f32.mrb[0].mxu0
        %v4402 = vadd.f32 0.0, %v4401
        %v4403 = vpop.f32.mrb[0].mxu0
        %v4404 = vpop.f32.mrb[0].mxu0
        %v4405 = vadd.f32 0.0, %v4404
        %v4406 = vpop.f32.mrb[0].mxu0
        %4407 = vdwg.mxu0
        %4408 = vrot.lane.b32.xlu0 %v689, 48
        %v4409 = vpop.permute.xlu0 %4408
        %4410 = vrot.lane.b32.xlu0 %v690, 48
        %v4411 = vpop.permute.xlu0 %4410
        %4412 = vrot.lane.b32.xlu0 %v691, 48
        %v4413 = vpop.permute.xlu0 %4412
        %4414 = vrot.lane.b32.xlu0 %v692, 48
        %v4415 = vpop.permute.xlu0 %4414
        %v4421 = vsel %vm1138, %v4307, 0
        %v4424 = vsel %vm1138, %v4308, 0
        %v4427 = vsel %vm1138, %v4309, 0
        %v4430 = vsel %vm1138, %v4310, 0
        %4432 = vmatprep.subr.bf16.mxu0 0
        %4433 = vmatpush1.bf16.msra.mxu0 %v4409
        %4434 = vmatprep.subr.bf16.mxu0 0
        %4435 = vmatpush1.bf16.msra.mxu0 %v4411
        %4436 = vmatprep.subr.bf16.mxu0 0
        %4437 = vmatpush1.bf16.msra.mxu0 %v4413
        %4438 = vmatprep.subr.bf16.mxu0 0
        %4439 = vmatpush1.bf16.msra.mxu0 %v4415
        %4440 = vmatprep.subr.bf16.mxu0 0
        %4441 = vmatpush1.bf16.msra.mxu0 0
        %4442 = vmatprep.subr.bf16.mxu0 0
        %4443 = vmatpush1.bf16.msra.mxu0 0
        %4444 = vmatprep.subr.bf16.mxu0 0
        %4445 = vmatpush1.bf16.msra.mxu0 0
        %4446 = vmatprep.subr.bf16.mxu0 0
        %4447 = vmatpush1.bf16.msra.mxu0 0
        %4448 = vmatprep.subr.bf16.mxu0 0
        %4449 = vmatpush1.bf16.msra.mxu0 0
        %4450 = vmatprep.subr.bf16.mxu0 0
        %4451 = vmatpush1.bf16.msra.mxu0 0
        %4452 = vmatprep.subr.bf16.mxu0 0
        %4453 = vmatpush1.bf16.msra.mxu0 0
        %4454 = vmatprep.subr.bf16.mxu0 0
        %4455 = vmatpush1.bf16.msra.mxu0 0
        %4456 = vmatprep.subr.bf16.mxu0 0
        %4457 = vmatpush1.bf16.msra.mxu0 0
        %4458 = vmatprep.subr.bf16.mxu0 0
        %4459 = vmatpush1.bf16.msra.mxu0 0
        %4460 = vmatprep.subr.bf16.mxu0 0
        %4461 = vmatpush1.bf16.msra.mxu0 0
        %4462 = vmatprep.subr.bf16.mxu0 0
        %4463 = vmatpush1.bf16.msra.mxu0 0
        %4464 = vmatprep.mubr.bf16.mxu0 0
        %4465 = vmatmul.mubr.bf16.gmra.mrb[0].mxu0 %v4421
        %v4466 = vpop.f32.mrb[0].mxu0
        %v4467 = vadd.f32 0.0, %v4466
        %v4468 = vpop.f32.mrb[0].mxu0
        %v4469 = vpop.f32.mrb[0].mxu0
        %v4470 = vadd.f32 0.0, %v4469
        %v4471 = vpop.f32.mrb[0].mxu0
        %4472 = vmatprep.mubr.bf16.mxu0 0
        %4473 = vmatmul.mubr.bf16.gmra.mrb[0].mxu0 %v4424
        %v4474 = vpop.f32.mrb[0].mxu0
        %v4475 = vadd.f32 0.0, %v4474
        %v4476 = vpop.f32.mrb[0].mxu0
        %v4477 = vpop.f32.mrb[0].mxu0
        %v4478 = vadd.f32 0.0, %v4477
        %v4479 = vpop.f32.mrb[0].mxu0
        %4480 = vmatprep.mubr.bf16.mxu0 0
        %4481 = vmatmul.mubr.bf16.gmra.mrb[0].mxu0 %v4427
        %v4482 = vpop.f32.mrb[0].mxu0
        %v4483 = vadd.f32 0.0, %v4482
        %v4484 = vpop.f32.mrb[0].mxu0
        %v4485 = vpop.f32.mrb[0].mxu0
        %v4486 = vadd.f32 0.0, %v4485
        %v4487 = vpop.f32.mrb[0].mxu0
        %4488 = vmatprep.mubr.bf16.mxu0 0
        %4489 = vmatmul.mubr.bf16.gmra.mrb[0].mxu0 %v4430
        %v4490 = vpop.f32.mrb[0].mxu0
        %v4491 = vadd.f32 0.0, %v4490
        %v4492 = vpop.f32.mrb[0].mxu0
        %v4493 = vpop.f32.mrb[0].mxu0
        %v4494 = vadd.f32 0.0, %v4493
        %v4495 = vpop.f32.mrb[0].mxu0
        %4496 = vdwg.mxu0
        %4497 = vrot.lane.b32.xlu0 %v693, 48
        %v4498 = vpop.permute.xlu0 %4497
        %4499 = vrot.lane.b32.xlu0 %v694, 48
        %v4500 = vpop.permute.xlu0 %4499
        %4501 = vrot.lane.b32.xlu0 %v695, 48
        %v4502 = vpop.permute.xlu0 %4501
        %4503 = vrot.lane.b32.xlu0 %v696, 48
        %v4504 = vpop.permute.xlu0 %4503
        %v4510 = vsel %vm1138, %v4311, 0
        %v4513 = vsel %vm1138, %v4312, 0
        %v4516 = vsel %vm1138, %v4313, 0
        %v4519 = vsel %vm1138, %v4314, 0
        %4521 = vmatprep.subr.bf16.mxu0 0
        %4522 = vmatpush1.bf16.msra.mxu0 %v4498
        %4523 = vmatprep.subr.bf16.mxu0 0
        %4524 = vmatpush1.bf16.msra.mxu0 %v4500
        %4525 = vmatprep.subr.bf16.mxu0 0
        %4526 = vmatpush1.bf16.msra.mxu0 %v4502
        %4527 = vmatprep.subr.bf16.mxu0 0
        %4528 = vmatpush1.bf16.msra.mxu0 %v4504
        %4529 = vmatprep.subr.bf16.mxu0 0
        %4530 = vmatpush1.bf16.msra.mxu0 0
        %4531 = vmatprep.subr.bf16.mxu0 0
        %4532 = vmatpush1.bf16.msra.mxu0 0
        %4533 = vmatprep.subr.bf16.mxu0 0
        %4534 = vmatpush1.bf16.msra.mxu0 0
        %4535 = vmatprep.subr.bf16.mxu0 0
        %4536 = vmatpush1.bf16.msra.mxu0 0
        %4537 = vmatprep.subr.bf16.mxu0 0
        %4538 = vmatpush1.bf16.msra.mxu0 0
        %4539 = vmatprep.subr.bf16.mxu0 0
        %4540 = vmatpush1.bf16.msra.mxu0 0
        %4541 = vmatprep.subr.bf16.mxu0 0
        %4542 = vmatpush1.bf16.msra.mxu0 0
        %4543 = vmatprep.subr.bf16.mxu0 0
        %4544 = vmatpush1.bf16.msra.mxu0 0
        %4545 = vmatprep.subr.bf16.mxu0 0
        %4546 = vmatpush1.bf16.msra.mxu0 0
        %4547 = vmatprep.subr.bf16.mxu0 0
        %4548 = vmatpush1.bf16.msra.mxu0 0
        %4549 = vmatprep.subr.bf16.mxu0 0
        %4550 = vmatpush1.bf16.msra.mxu0 0
        %4551 = vmatprep.subr.bf16.mxu0 0
        %4552 = vmatpush1.bf16.msra.mxu0 0
        %4553 = vmatprep.mubr.bf16.mxu0 0
        %4554 = vmatmul.mubr.bf16.gmra.mrb[0].mxu0 %v4510
        %v4555 = vpop.f32.mrb[0].mxu0
        %v4556 = vadd.f32 0.0, %v4555
        %v4557 = vpop.f32.mrb[0].mxu0
        %v4558 = vpop.f32.mrb[0].mxu0
        %v4559 = vadd.f32 0.0, %v4558
        %v4560 = vpop.f32.mrb[0].mxu0
        %4561 = vmatprep.mubr.bf16.mxu0 0
        %4562 = vmatmul.mubr.bf16.gmra.mrb[0].mxu0 %v4513
        %v4563 = vpop.f32.mrb[0].mxu0
        %v4564 = vadd.f32 0.0, %v4563
        %v4565 = vpop.f32.mrb[0].mxu0
        %v4566 = vpop.f32.mrb[0].mxu0
        %v4567 = vadd.f32 0.0, %v4566
        %v4568 = vpop.f32.mrb[0].mxu0
        %4569 = vmatprep.mubr.bf16.mxu0 0
        %4570 = vmatmul.mubr.bf16.gmra.mrb[0].mxu0 %v4516
        %v4571 = vpop.f32.mrb[0].mxu0
        %v4572 = vadd.f32 0.0, %v4571
        %v4573 = vpop.f32.mrb[0].mxu0
        %v4574 = vpop.f32.mrb[0].mxu0
        %v4575 = vadd.f32 0.0, %v4574
        %v4576 = vpop.f32.mrb[0].mxu0
        %4577 = vmatprep.mubr.bf16.mxu0 0
        %4578 = vmatmul.mubr.bf16.gmra.mrb[0].mxu0 %v4519
        %v4579 = vpop.f32.mrb[0].mxu0
        %v4580 = vadd.f32 0.0, %v4579
        %v4581 = vpop.f32.mrb[0].mxu0
        %v4582 = vpop.f32.mrb[0].mxu0
        %v4583 = vadd.f32 0.0, %v4582
        %v4584 = vpop.f32.mrb[0].mxu0
        %4585 = vdwg.mxu0
        %4586 = vrot.lane.b32.xlu0 %v697, 48
        %v4587 = vpop.permute.xlu0 %4586
        %4588 = vrot.lane.b32.xlu0 %v698, 48
        %v4589 = vpop.permute.xlu0 %4588
        %4590 = vrot.lane.b32.xlu0 %v699, 48
        %v4591 = vpop.permute.xlu0 %4590
        %4592 = vrot.lane.b32.xlu0 %v700, 48
        %v4593 = vpop.permute.xlu0 %4592
        %v4599 = vsel %vm1138, %v4315, 0
        %v4602 = vsel %vm1138, %v4316, 0
        %v4605 = vsel %vm1138, %v4317, 0
        %v4608 = vsel %vm1138, %v4318, 0
        %4610 = vmatprep.subr.bf16.mxu0 0
        %4611 = vmatpush1.bf16.msra.mxu0 %v4587
        %4612 = vmatprep.subr.bf16.mxu0 0
        %4613 = vmatpush1.bf16.msra.mxu0 %v4589
        %4614 = vmatprep.subr.bf16.mxu0 0
        %4615 = vmatpush1.bf16.msra.mxu0 %v4591
        %4616 = vmatprep.subr.bf16.mxu0 0
        %4617 = vmatpush1.bf16.msra.mxu0 %v4593
        %4618 = vmatprep.subr.bf16.mxu0 0
        %4619 = vmatpush1.bf16.msra.mxu0 0
        %4620 = vmatprep.subr.bf16.mxu0 0
        %4621 = vmatpush1.bf16.msra.mxu0 0
        %4622 = vmatprep.subr.bf16.mxu0 0
        %4623 = vmatpush1.bf16.msra.mxu0 0
        %4624 = vmatprep.subr.bf16.mxu0 0
        %4625 = vmatpush1.bf16.msra.mxu0 0
        %4626 = vmatprep.subr.bf16.mxu0 0
        %4627 = vmatpush1.bf16.msra.mxu0 0
        %4628 = vmatprep.subr.bf16.mxu0 0
        %4629 = vmatpush1.bf16.msra.mxu0 0
        %4630 = vmatprep.subr.bf16.mxu0 0
        %4631 = vmatpush1.bf16.msra.mxu0 0
        %4632 = vmatprep.subr.bf16.mxu0 0
        %4633 = vmatpush1.bf16.msra.mxu0 0
        %4634 = vmatprep.subr.bf16.mxu0 0
        %4635 = vmatpush1.bf16.msra.mxu0 0
        %4636 = vmatprep.subr.bf16.mxu0 0
        %4637 = vmatpush1.bf16.msra.mxu0 0
        %4638 = vmatprep.subr.bf16.mxu0 0
        %4639 = vmatpush1.bf16.msra.mxu0 0
        %4640 = vmatprep.subr.bf16.mxu0 0
        %4641 = vmatpush1.bf16.msra.mxu0 0
        %4642 = vmatprep.mubr.bf16.mxu0 0
        %4643 = vmatmul.mubr.bf16.gmra.mrb[0].mxu0 %v4599
        %v4644 = vpop.f32.mrb[0].mxu0
        %v4645 = vadd.f32 0.0, %v4644
        %v4646 = vpop.f32.mrb[0].mxu0
        %v4647 = vpop.f32.mrb[0].mxu0
        %v4648 = vadd.f32 0.0, %v4647
        %v4649 = vpop.f32.mrb[0].mxu0
        %4650 = vmatprep.mubr.bf16.mxu0 0
        %4651 = vmatmul.mubr.bf16.gmra.mrb[0].mxu0 %v4602
        %v4652 = vpop.f32.mrb[0].mxu0
        %v4653 = vadd.f32 0.0, %v4652
        %v4654 = vpop.f32.mrb[0].mxu0
        %v4655 = vpop.f32.mrb[0].mxu0
        %v4656 = vadd.f32 0.0, %v4655
        %v4657 = vpop.f32.mrb[0].mxu0
        %4658 = vmatprep.mubr.bf16.mxu0 0
        %4659 = vmatmul.mubr.bf16.gmra.mrb[0].mxu0 %v4605
        %v4660 = vpop.f32.mrb[0].mxu0
        %v4661 = vadd.f32 0.0, %v4660
        %v4662 = vpop.f32.mrb[0].mxu0
        %v4663 = vpop.f32.mrb[0].mxu0
        %v4664 = vadd.f32 0.0, %v4663
        %v4665 = vpop.f32.mrb[0].mxu0
        %4666 = vmatprep.mubr.bf16.mxu0 0
        %4667 = vmatmul.mubr.bf16.gmra.mrb[0].mxu0 %v4608
        %v4668 = vpop.f32.mrb[0].mxu0
        %v4669 = vadd.f32 0.0, %v4668
        %v4670 = vpop.f32.mrb[0].mxu0
        %v4671 = vpop.f32.mrb[0].mxu0
        %v4672 = vadd.f32 0.0, %v4671
        %v4673 = vpop.f32.mrb[0].mxu0
        %4674 = vdwg.mxu0
        %v4675 = vpack.c.bf16 %v4381, %v4378
        %v4676 = vpack.c.bf16 %v4389, %v4386
        %v4677 = vpack.c.bf16 %v4397, %v4394
        %v4678 = vpack.c.bf16 %v4405, %v4402
        %v4679 = vpack.c.bf16 %v4470, %v4467
        %v4680 = vpack.c.bf16 %v4478, %v4475
        %v4681 = vpack.c.bf16 %v4486, %v4483
        %v4682 = vpack.c.bf16 %v4494, %v4491
        %v4683 = vpack.c.bf16 %v4559, %v4556
        %v4684 = vpack.c.bf16 %v4567, %v4564
        %v4685 = vpack.c.bf16 %v4575, %v4572
        %v4686 = vpack.c.bf16 %v4583, %v4580
        %v4687 = vpack.c.bf16 %v4648, %v4645
        %v4688 = vpack.c.bf16 %v4656, %v4653
        %v4689 = vpack.c.bf16 %v4664, %v4661
        %v4690 = vpack.c.bf16 %v4672, %v4669
        %s4691 = scalar_lea.vmem %s3, 8
        %v4692 = vld [vmem:[%s4691] sm:$0xf]
        %v4694 = vsel %vm713, %v4675, 0
        %v4697 = vsel %vm713, %v4676, 0
        %v4700 = vsel %vm713, %v4677, 0
        %v4703 = vsel %vm713, %v4678, 0
        %v4706 = vsel %vm713, %v4679, 0
        %v4709 = vsel %vm713, %v4680, 0
        %v4712 = vsel %vm713, %v4681, 0
        %v4715 = vsel %vm713, %v4682, 0
        %v4718 = vsel %vm713, %v4683, 0
        %v4721 = vsel %vm713, %v4684, 0
        %v4724 = vsel %vm713, %v4685, 0
        %v4727 = vsel %vm713, %v4686, 0
        %v4730 = vsel %vm713, %v4687, 0
        %v4733 = vsel %vm713, %v4688, 0
        %v4736 = vsel %vm713, %v4689, 0
        %v4739 = vsel %vm713, %v4690, 0
        %v4742 = vsel %vm3122, %v4692, 0
        %4744 = vmatprep.subr.bf16.mxu0 0
        %4745 = vmatpush1.bf16.msra.mxu0 %v4742
        %4746 = vmatprep.subr.bf16.mxu0 0
        %4747 = vmatpush1.bf16.msra.mxu0 0
        %4748 = vmatprep.subr.bf16.mxu0 0
        %4749 = vmatpush1.bf16.msra.mxu0 0
        %4750 = vmatprep.subr.bf16.mxu0 0
        %4751 = vmatpush1.bf16.msra.mxu0 0
        %4752 = vmatprep.subr.bf16.mxu0 0
        %4753 = vmatpush1.bf16.msra.mxu0 0
        %4754 = vmatprep.subr.bf16.mxu0 0
        %4755 = vmatpush1.bf16.msra.mxu0 0
        %4756 = vmatprep.subr.bf16.mxu0 0
        %4757 = vmatpush1.bf16.msra.mxu0 0
        %4758 = vmatprep.subr.bf16.mxu0 0
        %4759 = vmatpush1.bf16.msra.mxu0 0
        %4760 = vmatprep.subr.bf16.mxu0 0
        %4761 = vmatpush1.bf16.msra.mxu0 0
        %4762 = vmatprep.subr.bf16.mxu0 0
        %4763 = vmatpush1.bf16.msra.mxu0 0
        %4764 = vmatprep.subr.bf16.mxu0 0
        %4765 = vmatpush1.bf16.msra.mxu0 0
        %4766 = vmatprep.subr.bf16.mxu0 0
        %4767 = vmatpush1.bf16.msra.mxu0 0
        %4768 = vmatprep.subr.bf16.mxu0 0
        %4769 = vmatpush1.bf16.msra.mxu0 0
        %4770 = vmatprep.subr.bf16.mxu0 0
        %4771 = vmatpush1.bf16.msra.mxu0 0
        %4772 = vmatprep.subr.bf16.mxu0 0
        %4773 = vmatpush1.bf16.msra.mxu0 0
        %4774 = vmatprep.subr.bf16.mxu0 0
        %4775 = vmatpush1.bf16.msra.mxu0 0
        %4776 = vmatprep.mubr.bf16.mxu0 0
        %4777 = vmatmul.mubr.bf16.gmra.mrb[0].mxu0 %v4694
        %v4778 = vpop.f32.mrb[0].mxu0
        %v4779 = vadd.f32 0.0, %v4778
        %v4780 = vpop.f32.mrb[0].mxu0
        %v4781 = vpop.f32.mrb[0].mxu0
        %v4782 = vadd.f32 0.0, %v4781
        %v4783 = vpop.f32.mrb[0].mxu0
        %4784 = vmatprep.mubr.bf16.mxu0 0
        %4785 = vmatmul.mubr.bf16.gmra.mrb[0].mxu0 %v4697
        %v4786 = vpop.f32.mrb[0].mxu0
        %v4787 = vadd.f32 0.0, %v4786
        %v4788 = vpop.f32.mrb[0].mxu0
        %v4789 = vpop.f32.mrb[0].mxu0
        %v4790 = vadd.f32 0.0, %v4789
        %v4791 = vpop.f32.mrb[0].mxu0
        %4792 = vmatprep.mubr.bf16.mxu0 0
        %4793 = vmatmul.mubr.bf16.gmra.mrb[0].mxu0 %v4700
        %v4794 = vpop.f32.mrb[0].mxu0
        %v4795 = vadd.f32 0.0, %v4794
        %v4796 = vpop.f32.mrb[0].mxu0
        %v4797 = vpop.f32.mrb[0].mxu0
        %v4798 = vadd.f32 0.0, %v4797
        %v4799 = vpop.f32.mrb[0].mxu0
        %4800 = vmatprep.mubr.bf16.mxu0 0
        %4801 = vmatmul.mubr.bf16.gmra.mrb[0].mxu0 %v4703
        %v4802 = vpop.f32.mrb[0].mxu0
        %v4803 = vadd.f32 0.0, %v4802
        %v4804 = vpop.f32.mrb[0].mxu0
        %v4805 = vpop.f32.mrb[0].mxu0
        %v4806 = vadd.f32 0.0, %v4805
        %v4807 = vpop.f32.mrb[0].mxu0
        %4808 = vmatprep.mubr.bf16.mxu0 0
        %4809 = vmatmul.mubr.bf16.gmra.mrb[0].mxu0 %v4706
        %v4810 = vpop.f32.mrb[0].mxu0
        %v4811 = vadd.f32 0.0, %v4810
        %v4812 = vpop.f32.mrb[0].mxu0
        %v4813 = vpop.f32.mrb[0].mxu0
        %v4814 = vadd.f32 0.0, %v4813
        %v4815 = vpop.f32.mrb[0].mxu0
        %4816 = vmatprep.mubr.bf16.mxu0 0
        %4817 = vmatmul.mubr.bf16.gmra.mrb[0].mxu0 %v4709
        %v4818 = vpop.f32.mrb[0].mxu0
        %v4819 = vadd.f32 0.0, %v4818
        %v4820 = vpop.f32.mrb[0].mxu0
        %v4821 = vpop.f32.mrb[0].mxu0
        %v4822 = vadd.f32 0.0, %v4821
        %v4823 = vpop.f32.mrb[0].mxu0
        %4824 = vmatprep.mubr.bf16.mxu0 0
        %4825 = vmatmul.mubr.bf16.gmra.mrb[0].mxu0 %v4712
        %v4826 = vpop.f32.mrb[0].mxu0
        %v4827 = vadd.f32 0.0, %v4826
        %v4828 = vpop.f32.mrb[0].mxu0
        %v4829 = vpop.f32.mrb[0].mxu0
        %v4830 = vadd.f32 0.0, %v4829
        %v4831 = vpop.f32.mrb[0].mxu0
        %4832 = vmatprep.mubr.bf16.mxu0 0
        %4833 = vmatmul.mubr.bf16.gmra.mrb[0].mxu0 %v4715
        %v4834 = vpop.f32.mrb[0].mxu0
        %v4835 = vadd.f32 0.0, %v4834
        %v4836 = vpop.f32.mrb[0].mxu0
        %v4837 = vpop.f32.mrb[0].mxu0
        %v4838 = vadd.f32 0.0, %v4837
        %v4839 = vpop.f32.mrb[0].mxu0
        %4840 = vmatprep.mubr.bf16.mxu0 0
        %4841 = vmatmul.mubr.bf16.gmra.mrb[0].mxu0 %v4718
        %v4842 = vpop.f32.mrb[0].mxu0
        %v4843 = vadd.f32 0.0, %v4842
        %v4844 = vpop.f32.mrb[0].mxu0
        %v4845 = vpop.f32.mrb[0].mxu0
        %v4846 = vadd.f32 0.0, %v4845
        %v4847 = vpop.f32.mrb[0].mxu0
        %4848 = vmatprep.mubr.bf16.mxu0 0
        %4849 = vmatmul.mubr.bf16.gmra.mrb[0].mxu0 %v4721
        %v4850 = vpop.f32.mrb[0].mxu0
        %v4851 = vadd.f32 0.0, %v4850
        %v4852 = vpop.f32.mrb[0].mxu0
        %v4853 = vpop.f32.mrb[0].mxu0
        %v4854 = vadd.f32 0.0, %v4853
        %v4855 = vpop.f32.mrb[0].mxu0
        %4856 = vmatprep.mubr.bf16.mxu0 0
        %4857 = vmatmul.mubr.bf16.gmra.mrb[0].mxu0 %v4724
        %v4858 = vpop.f32.mrb[0].mxu0
        %v4859 = vadd.f32 0.0, %v4858
        %v4860 = vpop.f32.mrb[0].mxu0
        %v4861 = vpop.f32.mrb[0].mxu0
        %v4862 = vadd.f32 0.0, %v4861
        %v4863 = vpop.f32.mrb[0].mxu0
        %4864 = vmatprep.mubr.bf16.mxu0 0
        %4865 = vmatmul.mubr.bf16.gmra.mrb[0].mxu0 %v4727
        %v4866 = vpop.f32.mrb[0].mxu0
        %v4867 = vadd.f32 0.0, %v4866
        %v4868 = vpop.f32.mrb[0].mxu0
        %v4869 = vpop.f32.mrb[0].mxu0
        %v4870 = vadd.f32 0.0, %v4869
        %v4871 = vpop.f32.mrb[0].mxu0
        %4872 = vmatprep.mubr.bf16.mxu0 0
        %4873 = vmatmul.mubr.bf16.gmra.mrb[0].mxu0 %v4730
        %v4874 = vpop.f32.mrb[0].mxu0
        %v4875 = vadd.f32 0.0, %v4874
        %v4876 = vpop.f32.mrb[0].mxu0
        %v4877 = vpop.f32.mrb[0].mxu0
        %v4878 = vadd.f32 0.0, %v4877
        %v4879 = vpop.f32.mrb[0].mxu0
        %4880 = vmatprep.mubr.bf16.mxu0 0
        %4881 = vmatmul.mubr.bf16.gmra.mrb[0].mxu0 %v4733
        %v4882 = vpop.f32.mrb[0].mxu0
        %v4883 = vadd.f32 0.0, %v4882
        %v4884 = vpop.f32.mrb[0].mxu0
        %v4885 = vpop.f32.mrb[0].mxu0
        %v4886 = vadd.f32 0.0, %v4885
        %v4887 = vpop.f32.mrb[0].mxu0
        %4888 = vmatprep.mubr.bf16.mxu0 0
        %4889 = vmatmul.mubr.bf16.gmra.mrb[0].mxu0 %v4736
        %v4890 = vpop.f32.mrb[0].mxu0
        %v4891 = vadd.f32 0.0, %v4890
        %v4892 = vpop.f32.mrb[0].mxu0
        %v4893 = vpop.f32.mrb[0].mxu0
        %v4894 = vadd.f32 0.0, %v4893
        %v4895 = vpop.f32.mrb[0].mxu0
        %4896 = vmatprep.mubr.bf16.mxu0 0
        %4897 = vmatmul.mubr.bf16.gmra.mrb[0].mxu0 %v4739
        %v4898 = vpop.f32.mrb[0].mxu0
        %v4899 = vadd.f32 0.0, %v4898
        %v4900 = vpop.f32.mrb[0].mxu0
        %v4901 = vpop.f32.mrb[0].mxu0
        %v4902 = vadd.f32 0.0, %v4901
        %v4903 = vpop.f32.mrb[0].mxu0
        %4904 = vdwg.mxu0
        %v4905 = vadd.f32 %v3373, %v4779
        %v4906 = vadd.f32 %v3376, %v4782
        %v4907 = vadd.f32 %v3381, %v4787
        %v4908 = vadd.f32 %v3384, %v4790
        %v4909 = vadd.f32 %v3389, %v4795
        %v4910 = vadd.f32 %v3392, %v4798
        %v4911 = vadd.f32 %v3397, %v4803
        %v4912 = vadd.f32 %v3400, %v4806
        %v4913 = vadd.f32 %v3405, %v4811
        %v4914 = vadd.f32 %v3408, %v4814
        %v4915 = vadd.f32 %v3413, %v4819
        %v4916 = vadd.f32 %v3416, %v4822
        %v4917 = vadd.f32 %v3421, %v4827
        %v4918 = vadd.f32 %v3424, %v4830
        %v4919 = vadd.f32 %v3429, %v4835
        %v4920 = vadd.f32 %v3432, %v4838
        %v4921 = vadd.f32 %v3437, %v4843
        %v4922 = vadd.f32 %v3440, %v4846
        %v4923 = vadd.f32 %v3445, %v4851
        %v4924 = vadd.f32 %v3448, %v4854
        %v4925 = vadd.f32 %v3453, %v4859
        %v4926 = vadd.f32 %v3456, %v4862
        %v4927 = vadd.f32 %v3461, %v4867
        %v4928 = vadd.f32 %v3464, %v4870
        %v4929 = vadd.f32 %v3469, %v4875
        %v4930 = vadd.f32 %v3472, %v4878
        %v4931 = vadd.f32 %v3477, %v4883
        %v4932 = vadd.f32 %v3480, %v4886
        %v4933 = vadd.f32 %v3485, %v4891
        %v4934 = vadd.f32 %v3488, %v4894
        %v4935 = vadd.f32 %v3493, %v4899
        %v4936 = vadd.f32 %v3496, %v4902
        %4937 = vrot.lane.b32.xlu0 %v685, 104
        %v4938 = vpop.permute.xlu0 %4937
        %4939 = vrot.lane.b32.xlu0 %v686, 104
        %v4940 = vpop.permute.xlu0 %4939
        %4941 = vrot.lane.b32.xlu0 %v687, 104
        %v4942 = vpop.permute.xlu0 %4941
        %4943 = vrot.lane.b32.xlu0 %v688, 104
        %v4944 = vpop.permute.xlu0 %4943
        %4945 = vrot.lane.b32.xlu0 %v685, 72
        %v4946 = vpop.permute.xlu0 %4945
        %4947 = vrot.lane.b32.xlu0 %v686, 72
        %v4948 = vpop.permute.xlu0 %4947
        %4949 = vrot.lane.b32.xlu0 %v687, 72
        %v4950 = vpop.permute.xlu0 %4949
        %4951 = vrot.lane.b32.xlu0 %v688, 72
        %v4952 = vpop.permute.xlu0 %4951
        %v4954 = vsel %vm713, %v4938, 0
        %v4957 = vsel %vm713, %v4940, 0
        %v4960 = vsel %vm713, %v4942, 0
        %v4963 = vsel %vm713, %v4944, 0
        %v4966 = vsel %vm713, %v4946, 0
        %v4969 = vsel %vm713, %v4948, 0
        %v4972 = vsel %vm713, %v4950, 0
        %v4975 = vsel %vm713, %v4952, 0
        %4977 = vmatprep.subr.bf16.mxu0 0
        %4978 = vmatpush1.bf16.xpose.msra.mxu0 %v4966
        %4979 = vmatprep.subr.bf16.mxu0 0
        %4980 = vmatpush1.bf16.xpose.msra.mxu0 %v4969
        %4981 = vmatprep.subr.bf16.mxu0 0
        %4982 = vmatpush1.bf16.xpose.msra.mxu0 %v4972
        %4983 = vmatprep.subr.bf16.mxu0 0
        %4984 = vmatpush1.bf16.xpose.msra.mxu0 %v4975
        %4985 = vmatprep.subr.bf16.mxu0 0
        %4986 = vmatpush1.bf16.xpose.msra.mxu0 0
        %4987 = vmatprep.subr.bf16.mxu0 0
        %4988 = vmatpush1.bf16.xpose.msra.mxu0 0
        %4989 = vmatprep.subr.bf16.mxu0 0
        %4990 = vmatpush1.bf16.xpose.msra.mxu0 0
        %4991 = vmatprep.subr.bf16.mxu0 0
        %4992 = vmatpush1.bf16.xpose.msra.mxu0 0
        %4993 = vmatprep.subr.bf16.mxu0 0
        %4994 = vmatpush1.bf16.xpose.msra.mxu0 0
        %4995 = vmatprep.subr.bf16.mxu0 0
        %4996 = vmatpush1.bf16.xpose.msra.mxu0 0
        %4997 = vmatprep.subr.bf16.mxu0 0
        %4998 = vmatpush1.bf16.xpose.msra.mxu0 0
        %4999 = vmatprep.subr.bf16.mxu0 0
        %5000 = vmatpush1.bf16.xpose.msra.mxu0 0
        %5001 = vmatprep.subr.bf16.mxu0 0
        %5002 = vmatpush1.bf16.xpose.msra.mxu0 0
        %5003 = vmatprep.subr.bf16.mxu0 0
        %5004 = vmatpush1.bf16.xpose.msra.mxu0 0
        %5005 = vmatprep.subr.bf16.mxu0 0
        %5006 = vmatpush1.bf16.xpose.msra.mxu0 0
        %5007 = vmatprep.subr.bf16.mxu0 0
        %5008 = vmatpush1.bf16.xpose.msra.mxu0 0
        %5009 = vmatprep.mubr.bf16.mxu0 0
        %5010 = vmatmul.mubr.bf16.gmra.mrb[0].mxu0 %v4954
        %v5011 = vpop.f32.mrb[0].mxu0
        %v5012 = vadd.f32 0.0, %v5011
        %v5013 = vpop.f32.mrb[0].mxu0
        %v5014 = vpop.f32.mrb[0].mxu0
        %v5015 = vadd.f32 0.0, %v5014
        %v5016 = vpop.f32.mrb[0].mxu0
        %5017 = vmatprep.mubr.bf16.mxu0 0
        %5018 = vmatmul.mubr.bf16.gmra.mrb[0].mxu0 %v4957
        %v5019 = vpop.f32.mrb[0].mxu0
        %v5020 = vadd.f32 0.0, %v5019
        %v5021 = vpop.f32.mrb[0].mxu0
        %v5022 = vpop.f32.mrb[0].mxu0
        %v5023 = vadd.f32 0.0, %v5022
        %v5024 = vpop.f32.mrb[0].mxu0
        %5025 = vmatprep.mubr.bf16.mxu0 0
        %5026 = vmatmul.mubr.bf16.gmra.mrb[0].mxu0 %v4960
        %v5027 = vpop.f32.mrb[0].mxu0
        %v5028 = vadd.f32 0.0, %v5027
        %v5029 = vpop.f32.mrb[0].mxu0
        %v5030 = vpop.f32.mrb[0].mxu0
        %v5031 = vadd.f32 0.0, %v5030
        %v5032 = vpop.f32.mrb[0].mxu0
        %5033 = vmatprep.mubr.bf16.mxu0 0
        %5034 = vmatmul.mubr.bf16.gmra.mrb[0].mxu0 %v4963
        %v5035 = vpop.f32.mrb[0].mxu0
        %v5036 = vadd.f32 0.0, %v5035
        %v5037 = vpop.f32.mrb[0].mxu0
        %v5038 = vpop.f32.mrb[0].mxu0
        %v5039 = vadd.f32 0.0, %v5038
        %v5040 = vpop.f32.mrb[0].mxu0
        %5041 = vdwg.mxu0
        %5042 = vrot.lane.b32.xlu0 %v689, 104
        %v5043 = vpop.permute.xlu0 %5042
        %5044 = vrot.lane.b32.xlu0 %v690, 104
        %v5045 = vpop.permute.xlu0 %5044
        %5046 = vrot.lane.b32.xlu0 %v691, 104
        %v5047 = vpop.permute.xlu0 %5046
        %5048 = vrot.lane.b32.xlu0 %v692, 104
        %v5049 = vpop.permute.xlu0 %5048
        %5050 = vrot.lane.b32.xlu0 %v689, 72
        %v5051 = vpop.permute.xlu0 %5050
        %5052 = vrot.lane.b32.xlu0 %v690, 72
        %v5053 = vpop.permute.xlu0 %5052
        %5054 = vrot.lane.b32.xlu0 %v691, 72
        %v5055 = vpop.permute.xlu0 %5054
        %5056 = vrot.lane.b32.xlu0 %v692, 72
        %v5057 = vpop.permute.xlu0 %5056
        %v5059 = vsel %vm713, %v5043, 0
        %v5062 = vsel %vm713, %v5045, 0
        %v5065 = vsel %vm713, %v5047, 0
        %v5068 = vsel %vm713, %v5049, 0
        %v5071 = vsel %vm713, %v5051, 0
        %v5074 = vsel %vm713, %v5053, 0
        %v5077 = vsel %vm713, %v5055, 0
        %v5080 = vsel %vm713, %v5057, 0
        %5082 = vmatprep.subr.bf16.mxu0 0
        %5083 = vmatpush1.bf16.xpose.msra.mxu0 %v5071
        %5084 = vmatprep.subr.bf16.mxu0 0
        %5085 = vmatpush1.bf16.xpose.msra.mxu0 %v5074
        %5086 = vmatprep.subr.bf16.mxu0 0
        %5087 = vmatpush1.bf16.xpose.msra.mxu0 %v5077
        %5088 = vmatprep.subr.bf16.mxu0 0
        %5089 = vmatpush1.bf16.xpose.msra.mxu0 %v5080
        %5090 = vmatprep.subr.bf16.mxu0 0
        %5091 = vmatpush1.bf16.xpose.msra.mxu0 0
        %5092 = vmatprep.subr.bf16.mxu0 0
        %5093 = vmatpush1.bf16.xpose.msra.mxu0 0
        %5094 = vmatprep.subr.bf16.mxu0 0
        %5095 = vmatpush1.bf16.xpose.msra.mxu0 0
        %5096 = vmatprep.subr.bf16.mxu0 0
        %5097 = vmatpush1.bf16.xpose.msra.mxu0 0
        %5098 = vmatprep.subr.bf16.mxu0 0
        %5099 = vmatpush1.bf16.xpose.msra.mxu0 0
        %5100 = vmatprep.subr.bf16.mxu0 0
        %5101 = vmatpush1.bf16.xpose.msra.mxu0 0
        %5102 = vmatprep.subr.bf16.mxu0 0
        %5103 = vmatpush1.bf16.xpose.msra.mxu0 0
        %5104 = vmatprep.subr.bf16.mxu0 0
        %5105 = vmatpush1.bf16.xpose.msra.mxu0 0
        %5106 = vmatprep.subr.bf16.mxu0 0
        %5107 = vmatpush1.bf16.xpose.msra.mxu0 0
        %5108 = vmatprep.subr.bf16.mxu0 0
        %5109 = vmatpush1.bf16.xpose.msra.mxu0 0
        %5110 = vmatprep.subr.bf16.mxu0 0
        %5111 = vmatpush1.bf16.xpose.msra.mxu0 0
        %5112 = vmatprep.subr.bf16.mxu0 0
        %5113 = vmatpush1.bf16.xpose.msra.mxu0 0
        %5114 = vmatprep.mubr.bf16.mxu0 0
        %5115 = vmatmul.mubr.bf16.gmra.mrb[0].mxu0 %v5059
        %v5116 = vpop.f32.mrb[0].mxu0
        %v5117 = vadd.f32 0.0, %v5116
        %v5118 = vpop.f32.mrb[0].mxu0
        %v5119 = vpop.f32.mrb[0].mxu0
        %v5120 = vadd.f32 0.0, %v5119
        %v5121 = vpop.f32.mrb[0].mxu0
        %5122 = vmatprep.mubr.bf16.mxu0 0
        %5123 = vmatmul.mubr.bf16.gmra.mrb[0].mxu0 %v5062
        %v5124 = vpop.f32.mrb[0].mxu0
        %v5125 = vadd.f32 0.0, %v5124
        %v5126 = vpop.f32.mrb[0].mxu0
        %v5127 = vpop.f32.mrb[0].mxu0
        %v5128 = vadd.f32 0.0, %v5127
        %v5129 = vpop.f32.mrb[0].mxu0
        %5130 = vmatprep.mubr.bf16.mxu0 0
        %5131 = vmatmul.mubr.bf16.gmra.mrb[0].mxu0 %v5065
        %v5132 = vpop.f32.mrb[0].mxu0
        %v5133 = vadd.f32 0.0, %v5132
        %v5134 = vpop.f32.mrb[0].mxu0
        %v5135 = vpop.f32.mrb[0].mxu0
        %v5136 = vadd.f32 0.0, %v5135
        %v5137 = vpop.f32.mrb[0].mxu0
        %5138 = vmatprep.mubr.bf16.mxu0 0
        %5139 = vmatmul.mubr.bf16.gmra.mrb[0].mxu0 %v5068
        %v5140 = vpop.f32.mrb[0].mxu0
        %v5141 = vadd.f32 0.0, %v5140
        %v5142 = vpop.f32.mrb[0].mxu0
        %v5143 = vpop.f32.mrb[0].mxu0
        %v5144 = vadd.f32 0.0, %v5143
        %v5145 = vpop.f32.mrb[0].mxu0
        %5146 = vdwg.mxu0
        %5147 = vrot.lane.b32.xlu0 %v693, 104
        %v5148 = vpop.permute.xlu0 %5147
        %5149 = vrot.lane.b32.xlu0 %v694, 104
        %v5150 = vpop.permute.xlu0 %5149
        %5151 = vrot.lane.b32.xlu0 %v695, 104
        %v5152 = vpop.permute.xlu0 %5151
        %5153 = vrot.lane.b32.xlu0 %v696, 104
        %v5154 = vpop.permute.xlu0 %5153
        %5155 = vrot.lane.b32.xlu0 %v693, 72
        %v5156 = vpop.permute.xlu0 %5155
        %5157 = vrot.lane.b32.xlu0 %v694, 72
        %v5158 = vpop.permute.xlu0 %5157
        %5159 = vrot.lane.b32.xlu0 %v695, 72
        %v5160 = vpop.permute.xlu0 %5159
        %5161 = vrot.lane.b32.xlu0 %v696, 72
        %v5162 = vpop.permute.xlu0 %5161
        %v5164 = vsel %vm713, %v5148, 0
        %v5167 = vsel %vm713, %v5150, 0
        %v5170 = vsel %vm713, %v5152, 0
        %v5173 = vsel %vm713, %v5154, 0
        %v5176 = vsel %vm713, %v5156, 0
        %v5179 = vsel %vm713, %v5158, 0
        %v5182 = vsel %vm713, %v5160, 0
        %v5185 = vsel %vm713, %v5162, 0
        %5187 = vmatprep.subr.bf16.mxu0 0
        %5188 = vmatpush1.bf16.xpose.msra.mxu0 %v5176
        %5189 = vmatprep.subr.bf16.mxu0 0
        %5190 = vmatpush1.bf16.xpose.msra.mxu0 %v5179
        %5191 = vmatprep.subr.bf16.mxu0 0
        %5192 = vmatpush1.bf16.xpose.msra.mxu0 %v5182
        %5193 = vmatprep.subr.bf16.mxu0 0
        %5194 = vmatpush1.bf16.xpose.msra.mxu0 %v5185
        %5195 = vmatprep.subr.bf16.mxu0 0
        %5196 = vmatpush1.bf16.xpose.msra.mxu0 0
        %5197 = vmatprep.subr.bf16.mxu0 0
        %5198 = vmatpush1.bf16.xpose.msra.mxu0 0
        %5199 = vmatprep.subr.bf16.mxu0 0
        %5200 = vmatpush1.bf16.xpose.msra.mxu0 0
        %5201 = vmatprep.subr.bf16.mxu0 0
        %5202 = vmatpush1.bf16.xpose.msra.mxu0 0
        %5203 = vmatprep.subr.bf16.mxu0 0
        %5204 = vmatpush1.bf16.xpose.msra.mxu0 0
        %5205 = vmatprep.subr.bf16.mxu0 0
        %5206 = vmatpush1.bf16.xpose.msra.mxu0 0
        %5207 = vmatprep.subr.bf16.mxu0 0
        %5208 = vmatpush1.bf16.xpose.msra.mxu0 0
        %5209 = vmatprep.subr.bf16.mxu0 0
        %5210 = vmatpush1.bf16.xpose.msra.mxu0 0
        %5211 = vmatprep.subr.bf16.mxu0 0
        %5212 = vmatpush1.bf16.xpose.msra.mxu0 0
        %5213 = vmatprep.subr.bf16.mxu0 0
        %5214 = vmatpush1.bf16.xpose.msra.mxu0 0
        %5215 = vmatprep.subr.bf16.mxu0 0
        %5216 = vmatpush1.bf16.xpose.msra.mxu0 0
        %5217 = vmatprep.subr.bf16.mxu0 0
        %5218 = vmatpush1.bf16.xpose.msra.mxu0 0
        %5219 = vmatprep.mubr.bf16.mxu0 0
        %5220 = vmatmul.mubr.bf16.gmra.mrb[0].mxu0 %v5164
        %v5221 = vpop.f32.mrb[0].mxu0
        %v5222 = vadd.f32 0.0, %v5221
        %v5223 = vpop.f32.mrb[0].mxu0
        %v5224 = vpop.f32.mrb[0].mxu0
        %v5225 = vadd.f32 0.0, %v5224
        %v5226 = vpop.f32.mrb[0].mxu0
        %5227 = vmatprep.mubr.bf16.mxu0 0
        %5228 = vmatmul.mubr.bf16.gmra.mrb[0].mxu0 %v5167
        %v5229 = vpop.f32.mrb[0].mxu0
        %v5230 = vadd.f32 0.0, %v5229
        %v5231 = vpop.f32.mrb[0].mxu0
        %v5232 = vpop.f32.mrb[0].mxu0
        %v5233 = vadd.f32 0.0, %v5232
        %v5234 = vpop.f32.mrb[0].mxu0
        %5235 = vmatprep.mubr.bf16.mxu0 0
        %5236 = vmatmul.mubr.bf16.gmra.mrb[0].mxu0 %v5170
        %v5237 = vpop.f32.mrb[0].mxu0
        %v5238 = vadd.f32 0.0, %v5237
        %v5239 = vpop.f32.mrb[0].mxu0
        %v5240 = vpop.f32.mrb[0].mxu0
        %v5241 = vadd.f32 0.0, %v5240
        %v5242 = vpop.f32.mrb[0].mxu0
        %5243 = vmatprep.mubr.bf16.mxu0 0
        %5244 = vmatmul.mubr.bf16.gmra.mrb[0].mxu0 %v5173
        %v5245 = vpop.f32.mrb[0].mxu0
        %v5246 = vadd.f32 0.0, %v5245
        %v5247 = vpop.f32.mrb[0].mxu0
        %v5248 = vpop.f32.mrb[0].mxu0
        %v5249 = vadd.f32 0.0, %v5248
        %v5250 = vpop.f32.mrb[0].mxu0
        %5251 = vdwg.mxu0
        %5252 = vrot.lane.b32.xlu0 %v697, 104
        %v5253 = vpop.permute.xlu0 %5252
        %5254 = vrot.lane.b32.xlu0 %v698, 104
        %v5255 = vpop.permute.xlu0 %5254
        %5256 = vrot.lane.b32.xlu0 %v699, 104
        %v5257 = vpop.permute.xlu0 %5256
        %5258 = vrot.lane.b32.xlu0 %v700, 104
        %v5259 = vpop.permute.xlu0 %5258
        %5260 = vrot.lane.b32.xlu0 %v697, 72
        %v5261 = vpop.permute.xlu0 %5260
        %5262 = vrot.lane.b32.xlu0 %v698, 72
        %v5263 = vpop.permute.xlu0 %5262
        %5264 = vrot.lane.b32.xlu0 %v699, 72
        %v5265 = vpop.permute.xlu0 %5264
        %5266 = vrot.lane.b32.xlu0 %v700, 72
        %v5267 = vpop.permute.xlu0 %5266
        %v5269 = vsel %vm713, %v5253, 0
        %v5272 = vsel %vm713, %v5255, 0
        %v5275 = vsel %vm713, %v5257, 0
        %v5278 = vsel %vm713, %v5259, 0
        %v5281 = vsel %vm713, %v5261, 0
        %v5284 = vsel %vm713, %v5263, 0
        %v5287 = vsel %vm713, %v5265, 0
        %v5290 = vsel %vm713, %v5267, 0
        %5292 = vmatprep.subr.bf16.mxu0 0
        %5293 = vmatpush1.bf16.xpose.msra.mxu0 %v5281
        %5294 = vmatprep.subr.bf16.mxu0 0
        %5295 = vmatpush1.bf16.xpose.msra.mxu0 %v5284
        %5296 = vmatprep.subr.bf16.mxu0 0
        %5297 = vmatpush1.bf16.xpose.msra.mxu0 %v5287
        %5298 = vmatprep.subr.bf16.mxu0 0
        %5299 = vmatpush1.bf16.xpose.msra.mxu0 %v5290
        %5300 = vmatprep.subr.bf16.mxu0 0
        %5301 = vmatpush1.bf16.xpose.msra.mxu0 0
        %5302 = vmatprep.subr.bf16.mxu0 0
        %5303 = vmatpush1.bf16.xpose.msra.mxu0 0
        %5304 = vmatprep.subr.bf16.mxu0 0
        %5305 = vmatpush1.bf16.xpose.msra.mxu0 0
        %5306 = vmatprep.subr.bf16.mxu0 0
        %5307 = vmatpush1.bf16.xpose.msra.mxu0 0
        %5308 = vmatprep.subr.bf16.mxu0 0
        %5309 = vmatpush1.bf16.xpose.msra.mxu0 0
        %5310 = vmatprep.subr.bf16.mxu0 0
        %5311 = vmatpush1.bf16.xpose.msra.mxu0 0
        %5312 = vmatprep.subr.bf16.mxu0 0
        %5313 = vmatpush1.bf16.xpose.msra.mxu0 0
        %5314 = vmatprep.subr.bf16.mxu0 0
        %5315 = vmatpush1.bf16.xpose.msra.mxu0 0
        %5316 = vmatprep.subr.bf16.mxu0 0
        %5317 = vmatpush1.bf16.xpose.msra.mxu0 0
        %5318 = vmatprep.subr.bf16.mxu0 0
        %5319 = vmatpush1.bf16.xpose.msra.mxu0 0
        %5320 = vmatprep.subr.bf16.mxu0 0
        %5321 = vmatpush1.bf16.xpose.msra.mxu0 0
        %5322 = vmatprep.subr.bf16.mxu0 0
        %5323 = vmatpush1.bf16.xpose.msra.mxu0 0
        %5324 = vmatprep.mubr.bf16.mxu0 0
        %5325 = vmatmul.mubr.bf16.gmra.mrb[0].mxu0 %v5269
        %v5326 = vpop.f32.mrb[0].mxu0
        %v5327 = vadd.f32 0.0, %v5326
        %v5328 = vpop.f32.mrb[0].mxu0
        %v5329 = vpop.f32.mrb[0].mxu0
        %v5330 = vadd.f32 0.0, %v5329
        %v5331 = vpop.f32.mrb[0].mxu0
        %5332 = vmatprep.mubr.bf16.mxu0 0
        %5333 = vmatmul.mubr.bf16.gmra.mrb[0].mxu0 %v5272
        %v5334 = vpop.f32.mrb[0].mxu0
        %v5335 = vadd.f32 0.0, %v5334
        %v5336 = vpop.f32.mrb[0].mxu0
        %v5337 = vpop.f32.mrb[0].mxu0
        %v5338 = vadd.f32 0.0, %v5337
        %v5339 = vpop.f32.mrb[0].mxu0
        %5340 = vmatprep.mubr.bf16.mxu0 0
        %5341 = vmatmul.mubr.bf16.gmra.mrb[0].mxu0 %v5275
        %v5342 = vpop.f32.mrb[0].mxu0
        %v5343 = vadd.f32 0.0, %v5342
        %v5344 = vpop.f32.mrb[0].mxu0
        %v5345 = vpop.f32.mrb[0].mxu0
        %v5346 = vadd.f32 0.0, %v5345
        %v5347 = vpop.f32.mrb[0].mxu0
        %5348 = vmatprep.mubr.bf16.mxu0 0
        %5349 = vmatmul.mubr.bf16.gmra.mrb[0].mxu0 %v5278
        %v5350 = vpop.f32.mrb[0].mxu0
        %v5351 = vadd.f32 0.0, %v5350
        %v5352 = vpop.f32.mrb[0].mxu0
        %v5353 = vpop.f32.mrb[0].mxu0
        %v5354 = vadd.f32 0.0, %v5353
        %v5355 = vpop.f32.mrb[0].mxu0
        %5356 = vdwg.mxu0
        %v5357 = vadd.f32 %v5012, %v645
        %v5358 = vadd.f32 %v5015, %v646
        %v5359 = vadd.f32 %v5020, %v647
        %v5360 = vadd.f32 %v5023, %v648
        %v5361 = vadd.f32 %v5028, %v649
        %v5362 = vadd.f32 %v5031, %v650
        %v5363 = vadd.f32 %v5036, %v651
        %v5364 = vadd.f32 %v5039, %v652
        %v5365 = vadd.f32 %v5117, %v677
        %v5366 = vadd.f32 %v5120, %v678
        %v5367 = vadd.f32 %v5125, %v679
        %v5368 = vadd.f32 %v5128, %v680
        %v5369 = vadd.f32 %v5133, %v681
        %v5370 = vadd.f32 %v5136, %v682
        %v5371 = vadd.f32 %v5141, %v683
        %v5372 = vadd.f32 %v5144, %v684
        %v5373 = vadd.f32 %v5222, %v645
        %v5374 = vadd.f32 %v5225, %v646
        %v5375 = vadd.f32 %v5230, %v647
        %v5376 = vadd.f32 %v5233, %v648
        %v5377 = vadd.f32 %v5238, %v649
        %v5378 = vadd.f32 %v5241, %v650
        %v5379 = vadd.f32 %v5246, %v651
        %v5380 = vadd.f32 %v5249, %v652
        %v5381 = vadd.f32 %v5327, %v677
        %v5382 = vadd.f32 %v5330, %v678
        %v5383 = vadd.f32 %v5335, %v679
        %v5384 = vadd.f32 %v5338, %v680
        %v5385 = vadd.f32 %v5343, %v681
        %v5386 = vadd.f32 %v5346, %v682
        %v5387 = vadd.f32 %v5351, %v683
        %v5388 = vadd.f32 %v5354, %v684
        %v5389 = vsel %vm1138, %v5357, -inf
        %5390 = vmax.xlane.f32.xlu0 %v5389
        %v5391 = vpop.xlane.xlu0 %5390
        %v5392 = vsel %vm1138, %v5358, -inf
        %5393 = vmax.xlane.f32.xlu0 %v5392
        %v5394 = vpop.xlane.xlu0 %5393
        %v5395 = vsel %vm1138, %v5359, -inf
        %5396 = vmax.xlane.f32.xlu0 %v5395
        %v5397 = vpop.xlane.xlu0 %5396
        %v5398 = vsel %vm1138, %v5360, -inf
        %5399 = vmax.xlane.f32.xlu0 %v5398
        %v5400 = vpop.xlane.xlu0 %5399
        %v5401 = vsel %vm1138, %v5361, -inf
        %5402 = vmax.xlane.f32.xlu0 %v5401
        %v5403 = vpop.xlane.xlu0 %5402
        %v5404 = vsel %vm1138, %v5362, -inf
        %5405 = vmax.xlane.f32.xlu0 %v5404
        %v5406 = vpop.xlane.xlu0 %5405
        %v5407 = vsel %vm1138, %v5363, -inf
        %5408 = vmax.xlane.f32.xlu0 %v5407
        %v5409 = vpop.xlane.xlu0 %5408
        %v5410 = vsel %vm1138, %v5364, -inf
        %5411 = vmax.xlane.f32.xlu0 %v5410
        %v5412 = vpop.xlane.xlu0 %5411
        %v5413 = vsel %vm1138, %v5365, -inf
        %5414 = vmax.xlane.f32.xlu0 %v5413
        %v5415 = vpop.xlane.xlu0 %5414
        %v5416 = vsel %vm1138, %v5366, -inf
        %5417 = vmax.xlane.f32.xlu0 %v5416
        %v5418 = vpop.xlane.xlu0 %5417
        %v5419 = vsel %vm1138, %v5367, -inf
        %5420 = vmax.xlane.f32.xlu0 %v5419
        %v5421 = vpop.xlane.xlu0 %5420
        %v5422 = vsel %vm1138, %v5368, -inf
        %5423 = vmax.xlane.f32.xlu0 %v5422
        %v5424 = vpop.xlane.xlu0 %5423
        %v5425 = vsel %vm1138, %v5369, -inf
        %5426 = vmax.xlane.f32.xlu0 %v5425
        %v5427 = vpop.xlane.xlu0 %5426
        %v5428 = vsel %vm1138, %v5370, -inf
        %5429 = vmax.xlane.f32.xlu0 %v5428
        %v5430 = vpop.xlane.xlu0 %5429
        %v5431 = vsel %vm1138, %v5371, -inf
        %5432 = vmax.xlane.f32.xlu0 %v5431
        %v5433 = vpop.xlane.xlu0 %5432
        %v5434 = vsel %vm1138, %v5372, -inf
        %5435 = vmax.xlane.f32.xlu0 %v5434
        %v5436 = vpop.xlane.xlu0 %5435
        %v5437 = vsel %vm1138, %v5373, -inf
        %5438 = vmax.xlane.f32.xlu0 %v5437
        %v5439 = vpop.xlane.xlu0 %5438
        %v5440 = vsel %vm1138, %v5374, -inf
        %5441 = vmax.xlane.f32.xlu0 %v5440
        %v5442 = vpop.xlane.xlu0 %5441
        %v5443 = vsel %vm1138, %v5375, -inf
        %5444 = vmax.xlane.f32.xlu0 %v5443
        %v5445 = vpop.xlane.xlu0 %5444
        %v5446 = vsel %vm1138, %v5376, -inf
        %5447 = vmax.xlane.f32.xlu0 %v5446
        %v5448 = vpop.xlane.xlu0 %5447
        %v5449 = vsel %vm1138, %v5377, -inf
        %5450 = vmax.xlane.f32.xlu0 %v5449
        %v5451 = vpop.xlane.xlu0 %5450
        %v5452 = vsel %vm1138, %v5378, -inf
        %5453 = vmax.xlane.f32.xlu0 %v5452
        %v5454 = vpop.xlane.xlu0 %5453
        %v5455 = vsel %vm1138, %v5379, -inf
        %5456 = vmax.xlane.f32.xlu0 %v5455
        %v5457 = vpop.xlane.xlu0 %5456
        %v5458 = vsel %vm1138, %v5380, -inf
        %5459 = vmax.xlane.f32.xlu0 %v5458
        %v5460 = vpop.xlane.xlu0 %5459
        %v5461 = vsel %vm1138, %v5381, -inf
        %5462 = vmax.xlane.f32.xlu0 %v5461
        %v5463 = vpop.xlane.xlu0 %5462
        %v5464 = vsel %vm1138, %v5382, -inf
        %5465 = vmax.xlane.f32.xlu0 %v5464
        %v5466 = vpop.xlane.xlu0 %5465
        %v5467 = vsel %vm1138, %v5383, -inf
        %5468 = vmax.xlane.f32.xlu0 %v5467
        %v5469 = vpop.xlane.xlu0 %5468
        %v5470 = vsel %vm1138, %v5384, -inf
        %5471 = vmax.xlane.f32.xlu0 %v5470
        %v5472 = vpop.xlane.xlu0 %5471
        %v5473 = vsel %vm1138, %v5385, -inf
        %5474 = vmax.xlane.f32.xlu0 %v5473
        %v5475 = vpop.xlane.xlu0 %5474
        %v5476 = vsel %vm1138, %v5386, -inf
        %5477 = vmax.xlane.f32.xlu0 %v5476
        %v5478 = vpop.xlane.xlu0 %5477
        %v5479 = vsel %vm1138, %v5387, -inf
        %5480 = vmax.xlane.f32.xlu0 %v5479
        %v5481 = vpop.xlane.xlu0 %5480
        %v5482 = vsel %vm1138, %v5388, -inf
        %5483 = vmax.xlane.f32.xlu0 %v5482
        %v5484 = vpop.xlane.xlu0 %5483
        %v5485 = vsub.f32 %v5357, %v5391
        %v5486 = vsub.f32 %v5358, %v5394
        %v5487 = vsub.f32 %v5359, %v5397
        %v5488 = vsub.f32 %v5360, %v5400
        %v5489 = vsub.f32 %v5361, %v5403
        %v5490 = vsub.f32 %v5362, %v5406
        %v5491 = vsub.f32 %v5363, %v5409
        %v5492 = vsub.f32 %v5364, %v5412
        %v5493 = vsub.f32 %v5365, %v5415
        %v5494 = vsub.f32 %v5366, %v5418
        %v5495 = vsub.f32 %v5367, %v5421
        %v5496 = vsub.f32 %v5368, %v5424
        %v5497 = vsub.f32 %v5369, %v5427
        %v5498 = vsub.f32 %v5370, %v5430
        %v5499 = vsub.f32 %v5371, %v5433
        %v5500 = vsub.f32 %v5372, %v5436
        %v5501 = vsub.f32 %v5373, %v5439
        %v5502 = vsub.f32 %v5374, %v5442
        %v5503 = vsub.f32 %v5375, %v5445
        %v5504 = vsub.f32 %v5376, %v5448
        %v5505 = vsub.f32 %v5377, %v5451
        %v5506 = vsub.f32 %v5378, %v5454
        %v5507 = vsub.f32 %v5379, %v5457
        %v5508 = vsub.f32 %v5380, %v5460
        %v5509 = vsub.f32 %v5381, %v5463
        %v5510 = vsub.f32 %v5382, %v5466
        %v5511 = vsub.f32 %v5383, %v5469
        %v5512 = vsub.f32 %v5384, %v5472
        %v5513 = vsub.f32 %v5385, %v5475
        %v5514 = vsub.f32 %v5386, %v5478
        %v5515 = vsub.f32 %v5387, %v5481
        %v5516 = vsub.f32 %v5388, %v5484
        %v5517 = vmul.f32 %v5485, 1.442695
        %v5518 = vpow.pop %v5517
        %v5519 = vmul.f32 %v5486, 1.442695
        %v5520 = vpow.pop %v5519
        %v5521 = vmul.f32 %v5487, 1.442695
        %v5522 = vpow.pop %v5521
        %v5523 = vmul.f32 %v5488, 1.442695
        %v5524 = vpow.pop %v5523
        %v5525 = vmul.f32 %v5489, 1.442695
        %v5526 = vpow.pop %v5525
        %v5527 = vmul.f32 %v5490, 1.442695
        %v5528 = vpow.pop %v5527
        %v5529 = vmul.f32 %v5491, 1.442695
        %v5530 = vpow.pop %v5529
        %v5531 = vmul.f32 %v5492, 1.442695
        %v5532 = vpow.pop %v5531
        %v5533 = vmul.f32 %v5493, 1.442695
        %v5534 = vpow.pop %v5533
        %v5535 = vmul.f32 %v5494, 1.442695
        %v5536 = vpow.pop %v5535
        %v5537 = vmul.f32 %v5495, 1.442695
        %v5538 = vpow.pop %v5537
        %v5539 = vmul.f32 %v5496, 1.442695
        %v5540 = vpow.pop %v5539
        %v5541 = vmul.f32 %v5497, 1.442695
        %v5542 = vpow.pop %v5541
        %v5543 = vmul.f32 %v5498, 1.442695
        %v5544 = vpow.pop %v5543
        %v5545 = vmul.f32 %v5499, 1.442695
        %v5546 = vpow.pop %v5545
        %v5547 = vmul.f32 %v5500, 1.442695
        %v5548 = vpow.pop %v5547
        %v5549 = vmul.f32 %v5501, 1.442695
        %v5550 = vpow.pop %v5549
        %v5551 = vmul.f32 %v5502, 1.442695
        %v5552 = vpow.pop %v5551
        %v5553 = vmul.f32 %v5503, 1.442695
        %v5554 = vpow.pop %v5553
        %v5555 = vmul.f32 %v5504, 1.442695
        %v5556 = vpow.pop %v5555
        %v5557 = vmul.f32 %v5505, 1.442695
        %v5558 = vpow.pop %v5557
        %v5559 = vmul.f32 %v5506, 1.442695
        %v5560 = vpow.pop %v5559
        %v5561 = vmul.f32 %v5507, 1.442695
        %v5562 = vpow.pop %v5561
        %v5563 = vmul.f32 %v5508, 1.442695
        %v5564 = vpow.pop %v5563
        %v5565 = vmul.f32 %v5509, 1.442695
        %v5566 = vpow.pop %v5565
        %v5567 = vmul.f32 %v5510, 1.442695
        %v5568 = vpow.pop %v5567
        %v5569 = vmul.f32 %v5511, 1.442695
        %v5570 = vpow.pop %v5569
        %v5571 = vmul.f32 %v5512, 1.442695
        %v5572 = vpow.pop %v5571
        %v5573 = vmul.f32 %v5513, 1.442695
        %v5574 = vpow.pop %v5573
        %v5575 = vmul.f32 %v5514, 1.442695
        %v5576 = vpow.pop %v5575
        %v5577 = vmul.f32 %v5515, 1.442695
        %v5578 = vpow.pop %v5577
        %v5579 = vmul.f32 %v5516, 1.442695
        %v5580 = vpow.pop %v5579
        %v5581 = vsel %vm1138, %v5518, 0.0
        %5582 = vadd.xlane.f32.xlu0 %v5581
        %v5583 = vpop.xlane.xlu0 %5582
        %v5584 = vsel %vm1138, %v5520, 0.0
        %5585 = vadd.xlane.f32.xlu0 %v5584
        %v5586 = vpop.xlane.xlu0 %5585
        %v5587 = vsel %vm1138, %v5522, 0.0
        %5588 = vadd.xlane.f32.xlu0 %v5587
        %v5589 = vpop.xlane.xlu0 %5588
        %v5590 = vsel %vm1138, %v5524, 0.0
        %5591 = vadd.xlane.f32.xlu0 %v5590
        %v5592 = vpop.xlane.xlu0 %5591
        %v5593 = vsel %vm1138, %v5526, 0.0
        %5594 = vadd.xlane.f32.xlu0 %v5593
        %v5595 = vpop.xlane.xlu0 %5594
        %v5596 = vsel %vm1138, %v5528, 0.0
        %5597 = vadd.xlane.f32.xlu0 %v5596
        %v5598 = vpop.xlane.xlu0 %5597
        %v5599 = vsel %vm1138, %v5530, 0.0
        %5600 = vadd.xlane.f32.xlu0 %v5599
        %v5601 = vpop.xlane.xlu0 %5600
        %v5602 = vsel %vm1138, %v5532, 0.0
        %5603 = vadd.xlane.f32.xlu0 %v5602
        %v5604 = vpop.xlane.xlu0 %5603
        %v5605 = vsel %vm1138, %v5534, 0.0
        %5606 = vadd.xlane.f32.xlu0 %v5605
        %v5607 = vpop.xlane.xlu0 %5606
        %v5608 = vsel %vm1138, %v5536, 0.0
        %5609 = vadd.xlane.f32.xlu0 %v5608
        %v5610 = vpop.xlane.xlu0 %5609
        %v5611 = vsel %vm1138, %v5538, 0.0
        %5612 = vadd.xlane.f32.xlu0 %v5611
        %v5613 = vpop.xlane.xlu0 %5612
        %v5614 = vsel %vm1138, %v5540, 0.0
        %5615 = vadd.xlane.f32.xlu0 %v5614
        %v5616 = vpop.xlane.xlu0 %5615
        %v5617 = vsel %vm1138, %v5542, 0.0
        %5618 = vadd.xlane.f32.xlu0 %v5617
        %v5619 = vpop.xlane.xlu0 %5618
        %v5620 = vsel %vm1138, %v5544, 0.0
        %5621 = vadd.xlane.f32.xlu0 %v5620
        %v5622 = vpop.xlane.xlu0 %5621
        %v5623 = vsel %vm1138, %v5546, 0.0
        %5624 = vadd.xlane.f32.xlu0 %v5623
        %v5625 = vpop.xlane.xlu0 %5624
        %v5626 = vsel %vm1138, %v5548, 0.0
        %5627 = vadd.xlane.f32.xlu0 %v5626
        %v5628 = vpop.xlane.xlu0 %5627
        %v5629 = vsel %vm1138, %v5550, 0.0
        %5630 = vadd.xlane.f32.xlu0 %v5629
        %v5631 = vpop.xlane.xlu0 %5630
        %v5632 = vsel %vm1138, %v5552, 0.0
        %5633 = vadd.xlane.f32.xlu0 %v5632
        %v5634 = vpop.xlane.xlu0 %5633
        %v5635 = vsel %vm1138, %v5554, 0.0
        %5636 = vadd.xlane.f32.xlu0 %v5635
        %v5637 = vpop.xlane.xlu0 %5636
        %v5638 = vsel %vm1138, %v5556, 0.0
        %5639 = vadd.xlane.f32.xlu0 %v5638
        %v5640 = vpop.xlane.xlu0 %5639
        %v5641 = vsel %vm1138, %v5558, 0.0
        %5642 = vadd.xlane.f32.xlu0 %v5641
        %v5643 = vpop.xlane.xlu0 %5642
        %v5644 = vsel %vm1138, %v5560, 0.0
        %5645 = vadd.xlane.f32.xlu0 %v5644
        %v5646 = vpop.xlane.xlu0 %5645
        %v5647 = vsel %vm1138, %v5562, 0.0
        %5648 = vadd.xlane.f32.xlu0 %v5647
        %v5649 = vpop.xlane.xlu0 %5648
        %v5650 = vsel %vm1138, %v5564, 0.0
        %5651 = vadd.xlane.f32.xlu0 %v5650
        %v5652 = vpop.xlane.xlu0 %5651
        %v5653 = vsel %vm1138, %v5566, 0.0
        %5654 = vadd.xlane.f32.xlu0 %v5653
        %v5655 = vpop.xlane.xlu0 %5654
        %v5656 = vsel %vm1138, %v5568, 0.0
        %5657 = vadd.xlane.f32.xlu0 %v5656
        %v5658 = vpop.xlane.xlu0 %5657
        %v5659 = vsel %vm1138, %v5570, 0.0
        %5660 = vadd.xlane.f32.xlu0 %v5659
        %v5661 = vpop.xlane.xlu0 %5660
        %v5662 = vsel %vm1138, %v5572, 0.0
        %5663 = vadd.xlane.f32.xlu0 %v5662
        %v5664 = vpop.xlane.xlu0 %5663
        %v5665 = vsel %vm1138, %v5574, 0.0
        %5666 = vadd.xlane.f32.xlu0 %v5665
        %v5667 = vpop.xlane.xlu0 %5666
        %v5668 = vsel %vm1138, %v5576, 0.0
        %5669 = vadd.xlane.f32.xlu0 %v5668
        %v5670 = vpop.xlane.xlu0 %5669
        %v5671 = vsel %vm1138, %v5578, 0.0
        %5672 = vadd.xlane.f32.xlu0 %v5671
        %v5673 = vpop.xlane.xlu0 %5672
        %v5674 = vsel %vm1138, %v5580, 0.0
        %5675 = vadd.xlane.f32.xlu0 %v5674
        %v5676 = vpop.xlane.xlu0 %5675
        %v5677 = vrcp.pop %v5583
        %v5678 = vrcp.pop %v5586
        %v5679 = vrcp.pop %v5589
        %v5680 = vrcp.pop %v5592
        %v5681 = vrcp.pop %v5595
        %v5682 = vrcp.pop %v5598
        %v5683 = vrcp.pop %v5601
        %v5684 = vrcp.pop %v5604
        %v5685 = vrcp.pop %v5607
        %v5686 = vrcp.pop %v5610
        %v5687 = vrcp.pop %v5613
        %v5688 = vrcp.pop %v5616
        %v5689 = vrcp.pop %v5619
        %v5690 = vrcp.pop %v5622
        %v5691 = vrcp.pop %v5625
        %v5692 = vrcp.pop %v5628
        %v5693 = vrcp.pop %v5631
        %v5694 = vrcp.pop %v5634
        %v5695 = vrcp.pop %v5637
        %v5696 = vrcp.pop %v5640
        %v5697 = vrcp.pop %v5643
        %v5698 = vrcp.pop %v5646
        %v5699 = vrcp.pop %v5649
        %v5700 = vrcp.pop %v5652
        %v5701 = vrcp.pop %v5655
        %v5702 = vrcp.pop %v5658
        %v5703 = vrcp.pop %v5661
        %v5704 = vrcp.pop %v5664
        %v5705 = vrcp.pop %v5667
        %v5706 = vrcp.pop %v5670
        %v5707 = vrcp.pop %v5673
        %v5708 = vrcp.pop %v5676
        %v5709 = vmul.f32 %v5518, %v5677
        %v5710 = vmul.f32 %v5520, %v5678
        %v5711 = vmul.f32 %v5522, %v5679
        %v5712 = vmul.f32 %v5524, %v5680
        %v5713 = vmul.f32 %v5526, %v5681
        %v5714 = vmul.f32 %v5528, %v5682
        %v5715 = vmul.f32 %v5530, %v5683
        %v5716 = vmul.f32 %v5532, %v5684
        %v5717 = vmul.f32 %v5534, %v5685
        %v5718 = vmul.f32 %v5536, %v5686
        %v5719 = vmul.f32 %v5538, %v5687
        %v5720 = vmul.f32 %v5540, %v5688
        %v5721 = vmul.f32 %v5542, %v5689
        %v5722 = vmul.f32 %v5544, %v5690
        %v5723 = vmul.f32 %v5546, %v5691
        %v5724 = vmul.f32 %v5548, %v5692
        %v5725 = vmul.f32 %v5550, %v5693
        %v5726 = vmul.f32 %v5552, %v5694
        %v5727 = vmul.f32 %v5554, %v5695
        %v5728 = vmul.f32 %v5556, %v5696
        %v5729 = vmul.f32 %v5558, %v5697
        %v5730 = vmul.f32 %v5560, %v5698
        %v5731 = vmul.f32 %v5562, %v5699
        %v5732 = vmul.f32 %v5564, %v5700
        %v5733 = vmul.f32 %v5566, %v5701
        %v5734 = vmul.f32 %v5568, %v5702
        %v5735 = vmul.f32 %v5570, %v5703
        %v5736 = vmul.f32 %v5572, %v5704
        %v5737 = vmul.f32 %v5574, %v5705
        %v5738 = vmul.f32 %v5576, %v5706
        %v5739 = vmul.f32 %v5578, %v5707
        %v5740 = vmul.f32 %v5580, %v5708
        %v5741 = vpack.c.bf16 %v5710, %v5709
        %v5742 = vpack.c.bf16 %v5712, %v5711
        %v5743 = vpack.c.bf16 %v5714, %v5713
        %v5744 = vpack.c.bf16 %v5716, %v5715
        %v5745 = vpack.c.bf16 %v5718, %v5717
        %v5746 = vpack.c.bf16 %v5720, %v5719
        %v5747 = vpack.c.bf16 %v5722, %v5721
        %v5748 = vpack.c.bf16 %v5724, %v5723
        %v5749 = vpack.c.bf16 %v5726, %v5725
        %v5750 = vpack.c.bf16 %v5728, %v5727
        %v5751 = vpack.c.bf16 %v5730, %v5729
        %v5752 = vpack.c.bf16 %v5732, %v5731
        %v5753 = vpack.c.bf16 %v5734, %v5733
        %v5754 = vpack.c.bf16 %v5736, %v5735
        %v5755 = vpack.c.bf16 %v5738, %v5737
        %v5756 = vpack.c.bf16 %v5740, %v5739
        %5757 = vrot.lane.b32.xlu0 %v685, 40
        %v5758 = vpop.permute.xlu0 %5757
        %5759 = vrot.lane.b32.xlu0 %v686, 40
        %v5760 = vpop.permute.xlu0 %5759
        %5761 = vrot.lane.b32.xlu0 %v687, 40
        %v5762 = vpop.permute.xlu0 %5761
        %5763 = vrot.lane.b32.xlu0 %v688, 40
        %v5764 = vpop.permute.xlu0 %5763
        %v5770 = vsel %vm1138, %v5741, 0
        %v5773 = vsel %vm1138, %v5742, 0
        %v5776 = vsel %vm1138, %v5743, 0
        %v5779 = vsel %vm1138, %v5744, 0
        %5781 = vmatprep.subr.bf16.mxu0 0
        %5782 = vmatpush1.bf16.msra.mxu0 %v5758
        %5783 = vmatprep.subr.bf16.mxu0 0
        %5784 = vmatpush1.bf16.msra.mxu0 %v5760
        %5785 = vmatprep.subr.bf16.mxu0 0
        %5786 = vmatpush1.bf16.msra.mxu0 %v5762
        %5787 = vmatprep.subr.bf16.mxu0 0
        %5788 = vmatpush1.bf16.msra.mxu0 %v5764
        %5789 = vmatprep.subr.bf16.mxu0 0
        %5790 = vmatpush1.bf16.msra.mxu0 0
        %5791 = vmatprep.subr.bf16.mxu0 0
        %5792 = vmatpush1.bf16.msra.mxu0 0
        %5793 = vmatprep.subr.bf16.mxu0 0
        %5794 = vmatpush1.bf16.msra.mxu0 0
        %5795 = vmatprep.subr.bf16.mxu0 0
        %5796 = vmatpush1.bf16.msra.mxu0 0
        %5797 = vmatprep.subr.bf16.mxu0 0
        %5798 = vmatpush1.bf16.msra.mxu0 0
        %5799 = vmatprep.subr.bf16.mxu0 0
        %5800 = vmatpush1.bf16.msra.mxu0 0
        %5801 = vmatprep.subr.bf16.mxu0 0
        %5802 = vmatpush1.bf16.msra.mxu0 0
        %5803 = vmatprep.subr.bf16.mxu0 0
        %5804 = vmatpush1.bf16.msra.mxu0 0
        %5805 = vmatprep.subr.bf16.mxu0 0
        %5806 = vmatpush1.bf16.msra.mxu0 0
        %5807 = vmatprep.subr.bf16.mxu0 0
        %5808 = vmatpush1.bf16.msra.mxu0 0
        %5809 = vmatprep.subr.bf16.mxu0 0
        %5810 = vmatpush1.bf16.msra.mxu0 0
        %5811 = vmatprep.subr.bf16.mxu0 0
        %5812 = vmatpush1.bf16.msra.mxu0 0
        %5813 = vmatprep.mubr.bf16.mxu0 0
        %5814 = vmatmul.mubr.bf16.gmra.mrb[0].mxu0 %v5770
        %v5815 = vpop.f32.mrb[0].mxu0
        %v5816 = vadd.f32 0.0, %v5815
        %v5817 = vpop.f32.mrb[0].mxu0
        %v5818 = vpop.f32.mrb[0].mxu0
        %v5819 = vadd.f32 0.0, %v5818
        %v5820 = vpop.f32.mrb[0].mxu0
        %5821 = vmatprep.mubr.bf16.mxu0 0
        %5822 = vmatmul.mubr.bf16.gmra.mrb[0].mxu0 %v5773
        %v5823 = vpop.f32.mrb[0].mxu0
        %v5824 = vadd.f32 0.0, %v5823
        %v5825 = vpop.f32.mrb[0].mxu0
        %v5826 = vpop.f32.mrb[0].mxu0
        %v5827 = vadd.f32 0.0, %v5826
        %v5828 = vpop.f32.mrb[0].mxu0
        %5829 = vmatprep.mubr.bf16.mxu0 0
        %5830 = vmatmul.mubr.bf16.gmra.mrb[0].mxu0 %v5776
        %v5831 = vpop.f32.mrb[0].mxu0
        %v5832 = vadd.f32 0.0, %v5831
        %v5833 = vpop.f32.mrb[0].mxu0
        %v5834 = vpop.f32.mrb[0].mxu0
        %v5835 = vadd.f32 0.0, %v5834
        %v5836 = vpop.f32.mrb[0].mxu0
        %5837 = vmatprep.mubr.bf16.mxu0 0
        %5838 = vmatmul.mubr.bf16.gmra.mrb[0].mxu0 %v5779
        %v5839 = vpop.f32.mrb[0].mxu0
        %v5840 = vadd.f32 0.0, %v5839
        %v5841 = vpop.f32.mrb[0].mxu0
        %v5842 = vpop.f32.mrb[0].mxu0
        %v5843 = vadd.f32 0.0, %v5842
        %v5844 = vpop.f32.mrb[0].mxu0
        %5845 = vdwg.mxu0
        %5846 = vrot.lane.b32.xlu0 %v689, 40
        %v5847 = vpop.permute.xlu0 %5846
        %5848 = vrot.lane.b32.xlu0 %v690, 40
        %v5849 = vpop.permute.xlu0 %5848
        %5850 = vrot.lane.b32.xlu0 %v691, 40
        %v5851 = vpop.permute.xlu0 %5850
        %5852 = vrot.lane.b32.xlu0 %v692, 40
        %v5853 = vpop.permute.xlu0 %5852
        %v5859 = vsel %vm1138, %v5745, 0
        %v5862 = vsel %vm1138, %v5746, 0
        %v5865 = vsel %vm1138, %v5747, 0
        %v5868 = vsel %vm1138, %v5748, 0
        %5870 = vmatprep.subr.bf16.mxu0 0
        %5871 = vmatpush1.bf16.msra.mxu0 %v5847
        %5872 = vmatprep.subr.bf16.mxu0 0
        %5873 = vmatpush1.bf16.msra.mxu0 %v5849
        %5874 = vmatprep.subr.bf16.mxu0 0
        %5875 = vmatpush1.bf16.msra.mxu0 %v5851
        %5876 = vmatprep.subr.bf16.mxu0 0
        %5877 = vmatpush1.bf16.msra.mxu0 %v5853
        %5878 = vmatprep.subr.bf16.mxu0 0
        %5879 = vmatpush1.bf16.msra.mxu0 0
        %5880 = vmatprep.subr.bf16.mxu0 0
        %5881 = vmatpush1.bf16.msra.mxu0 0
        %5882 = vmatprep.subr.bf16.mxu0 0
        %5883 = vmatpush1.bf16.msra.mxu0 0
        %5884 = vmatprep.subr.bf16.mxu0 0
        %5885 = vmatpush1.bf16.msra.mxu0 0
        %5886 = vmatprep.subr.bf16.mxu0 0
        %5887 = vmatpush1.bf16.msra.mxu0 0
        %5888 = vmatprep.subr.bf16.mxu0 0
        %5889 = vmatpush1.bf16.msra.mxu0 0
        %5890 = vmatprep.subr.bf16.mxu0 0
        %5891 = vmatpush1.bf16.msra.mxu0 0
        %5892 = vmatprep.subr.bf16.mxu0 0
        %5893 = vmatpush1.bf16.msra.mxu0 0
        %5894 = vmatprep.subr.bf16.mxu0 0
        %5895 = vmatpush1.bf16.msra.mxu0 0
        %5896 = vmatprep.subr.bf16.mxu0 0
        %5897 = vmatpush1.bf16.msra.mxu0 0
        %5898 = vmatprep.subr.bf16.mxu0 0
        %5899 = vmatpush1.bf16.msra.mxu0 0
        %5900 = vmatprep.subr.bf16.mxu0 0
        %5901 = vmatpush1.bf16.msra.mxu0 0
        %5902 = vmatprep.mubr.bf16.mxu0 0
        %5903 = vmatmul.mubr.bf16.gmra.mrb[0].mxu0 %v5859
        %v5904 = vpop.f32.mrb[0].mxu0
        %v5905 = vadd.f32 0.0, %v5904
        %v5906 = vpop.f32.mrb[0].mxu0
        %v5907 = vpop.f32.mrb[0].mxu0
        %v5908 = vadd.f32 0.0, %v5907
        %v5909 = vpop.f32.mrb[0].mxu0
        %5910 = vmatprep.mubr.bf16.mxu0 0
        %5911 = vmatmul.mubr.bf16.gmra.mrb[0].mxu0 %v5862
        %v5912 = vpop.f32.mrb[0].mxu0
        %v5913 = vadd.f32 0.0, %v5912
        %v5914 = vpop.f32.mrb[0].mxu0
        %v5915 = vpop.f32.mrb[0].mxu0
        %v5916 = vadd.f32 0.0, %v5915
        %v5917 = vpop.f32.mrb[0].mxu0
        %5918 = vmatprep.mubr.bf16.mxu0 0
        %5919 = vmatmul.mubr.bf16.gmra.mrb[0].mxu0 %v5865
        %v5920 = vpop.f32.mrb[0].mxu0
        %v5921 = vadd.f32 0.0, %v5920
        %v5922 = vpop.f32.mrb[0].mxu0
        %v5923 = vpop.f32.mrb[0].mxu0
        %v5924 = vadd.f32 0.0, %v5923
        %v5925 = vpop.f32.mrb[0].mxu0
        %5926 = vmatprep.mubr.bf16.mxu0 0
        %5927 = vmatmul.mubr.bf16.gmra.mrb[0].mxu0 %v5868
        %v5928 = vpop.f32.mrb[0].mxu0
        %v5929 = vadd.f32 0.0, %v5928
        %v5930 = vpop.f32.mrb[0].mxu0
        %v5931 = vpop.f32.mrb[0].mxu0
        %v5932 = vadd.f32 0.0, %v5931
        %v5933 = vpop.f32.mrb[0].mxu0
        %5934 = vdwg.mxu0
        %5935 = vrot.lane.b32.xlu0 %v693, 40
        %v5936 = vpop.permute.xlu0 %5935
        %5937 = vrot.lane.b32.xlu0 %v694, 40
        %v5938 = vpop.permute.xlu0 %5937
        %5939 = vrot.lane.b32.xlu0 %v695, 40
        %v5940 = vpop.permute.xlu0 %5939
        %5941 = vrot.lane.b32.xlu0 %v696, 40
        %v5942 = vpop.permute.xlu0 %5941
        %v5948 = vsel %vm1138, %v5749, 0
        %v5951 = vsel %vm1138, %v5750, 0
        %v5954 = vsel %vm1138, %v5751, 0
        %v5957 = vsel %vm1138, %v5752, 0
        %5959 = vmatprep.subr.bf16.mxu0 0
        %5960 = vmatpush1.bf16.msra.mxu0 %v5936
        %5961 = vmatprep.subr.bf16.mxu0 0
        %5962 = vmatpush1.bf16.msra.mxu0 %v5938
        %5963 = vmatprep.subr.bf16.mxu0 0
        %5964 = vmatpush1.bf16.msra.mxu0 %v5940
        %5965 = vmatprep.subr.bf16.mxu0 0
        %5966 = vmatpush1.bf16.msra.mxu0 %v5942
        %5967 = vmatprep.subr.bf16.mxu0 0
        %5968 = vmatpush1.bf16.msra.mxu0 0
        %5969 = vmatprep.subr.bf16.mxu0 0
        %5970 = vmatpush1.bf16.msra.mxu0 0
        %5971 = vmatprep.subr.bf16.mxu0 0
        %5972 = vmatpush1.bf16.msra.mxu0 0
        %5973 = vmatprep.subr.bf16.mxu0 0
        %5974 = vmatpush1.bf16.msra.mxu0 0
        %5975 = vmatprep.subr.bf16.mxu0 0
        %5976 = vmatpush1.bf16.msra.mxu0 0
        %5977 = vmatprep.subr.bf16.mxu0 0
        %5978 = vmatpush1.bf16.msra.mxu0 0
        %5979 = vmatprep.subr.bf16.mxu0 0
        %5980 = vmatpush1.bf16.msra.mxu0 0
        %5981 = vmatprep.subr.bf16.mxu0 0
        %5982 = vmatpush1.bf16.msra.mxu0 0
        %5983 = vmatprep.subr.bf16.mxu0 0
        %5984 = vmatpush1.bf16.msra.mxu0 0
        %5985 = vmatprep.subr.bf16.mxu0 0
        %5986 = vmatpush1.bf16.msra.mxu0 0
        %5987 = vmatprep.subr.bf16.mxu0 0
        %5988 = vmatpush1.bf16.msra.mxu0 0
        %5989 = vmatprep.subr.bf16.mxu0 0
        %5990 = vmatpush1.bf16.msra.mxu0 0
        %5991 = vmatprep.mubr.bf16.mxu0 0
        %5992 = vmatmul.mubr.bf16.gmra.mrb[0].mxu0 %v5948
        %v5993 = vpop.f32.mrb[0].mxu0
        %v5994 = vadd.f32 0.0, %v5993
        %v5995 = vpop.f32.mrb[0].mxu0
        %v5996 = vpop.f32.mrb[0].mxu0
        %v5997 = vadd.f32 0.0, %v5996
        %v5998 = vpop.f32.mrb[0].mxu0
        %5999 = vmatprep.mubr.bf16.mxu0 0
        %6000 = vmatmul.mubr.bf16.gmra.mrb[0].mxu0 %v5951
        %v6001 = vpop.f32.mrb[0].mxu0
        %v6002 = vadd.f32 0.0, %v6001
        %v6003 = vpop.f32.mrb[0].mxu0
        %v6004 = vpop.f32.mrb[0].mxu0
        %v6005 = vadd.f32 0.0, %v6004
        %v6006 = vpop.f32.mrb[0].mxu0
        %6007 = vmatprep.mubr.bf16.mxu0 0
        %6008 = vmatmul.mubr.bf16.gmra.mrb[0].mxu0 %v5954
        %v6009 = vpop.f32.mrb[0].mxu0
        %v6010 = vadd.f32 0.0, %v6009
        %v6011 = vpop.f32.mrb[0].mxu0
        %v6012 = vpop.f32.mrb[0].mxu0
        %v6013 = vadd.f32 0.0, %v6012
        %v6014 = vpop.f32.mrb[0].mxu0
        %6015 = vmatprep.mubr.bf16.mxu0 0
        %6016 = vmatmul.mubr.bf16.gmra.mrb[0].mxu0 %v5957
        %v6017 = vpop.f32.mrb[0].mxu0
        %v6018 = vadd.f32 0.0, %v6017
        %v6019 = vpop.f32.mrb[0].mxu0
        %v6020 = vpop.f32.mrb[0].mxu0
        %v6021 = vadd.f32 0.0, %v6020
        %v6022 = vpop.f32.mrb[0].mxu0
        %6023 = vdwg.mxu0
        %6024 = vrot.lane.b32.xlu0 %v697, 40
        %v6025 = vpop.permute.xlu0 %6024
        %6026 = vrot.lane.b32.xlu0 %v698, 40
        %v6027 = vpop.permute.xlu0 %6026
        %6028 = vrot.lane.b32.xlu0 %v699, 40
        %v6029 = vpop.permute.xlu0 %6028
        %6030 = vrot.lane.b32.xlu0 %v700, 40
        %v6031 = vpop.permute.xlu0 %6030
        %v6037 = vsel %vm1138, %v5753, 0
        %v6040 = vsel %vm1138, %v5754, 0
        %v6043 = vsel %vm1138, %v5755, 0
        %v6046 = vsel %vm1138, %v5756, 0
        %6048 = vmatprep.subr.bf16.mxu0 0
        %6049 = vmatpush1.bf16.msra.mxu0 %v6025
        %6050 = vmatprep.subr.bf16.mxu0 0
        %6051 = vmatpush1.bf16.msra.mxu0 %v6027
        %6052 = vmatprep.subr.bf16.mxu0 0
        %6053 = vmatpush1.bf16.msra.mxu0 %v6029
        %6054 = vmatprep.subr.bf16.mxu0 0
        %6055 = vmatpush1.bf16.msra.mxu0 %v6031
        %6056 = vmatprep.subr.bf16.mxu0 0
        %6057 = vmatpush1.bf16.msra.mxu0 0
        %6058 = vmatprep.subr.bf16.mxu0 0
        %6059 = vmatpush1.bf16.msra.mxu0 0
        %6060 = vmatprep.subr.bf16.mxu0 0
        %6061 = vmatpush1.bf16.msra.mxu0 0
        %6062 = vmatprep.subr.bf16.mxu0 0
        %6063 = vmatpush1.bf16.msra.mxu0 0
        %6064 = vmatprep.subr.bf16.mxu0 0
        %6065 = vmatpush1.bf16.msra.mxu0 0
        %6066 = vmatprep.subr.bf16.mxu0 0
        %6067 = vmatpush1.bf16.msra.mxu0 0
        %6068 = vmatprep.subr.bf16.mxu0 0
        %6069 = vmatpush1.bf16.msra.mxu0 0
        %6070 = vmatprep.subr.bf16.mxu0 0
        %6071 = vmatpush1.bf16.msra.mxu0 0
        %6072 = vmatprep.subr.bf16.mxu0 0
        %6073 = vmatpush1.bf16.msra.mxu0 0
        %6074 = vmatprep.subr.bf16.mxu0 0
        %6075 = vmatpush1.bf16.msra.mxu0 0
        %6076 = vmatprep.subr.bf16.mxu0 0
        %6077 = vmatpush1.bf16.msra.mxu0 0
        %6078 = vmatprep.subr.bf16.mxu0 0
        %6079 = vmatpush1.bf16.msra.mxu0 0
        %6080 = vmatprep.mubr.bf16.mxu0 0
        %6081 = vmatmul.mubr.bf16.gmra.mrb[0].mxu0 %v6037
        %v6082 = vpop.f32.mrb[0].mxu0
        %v6083 = vadd.f32 0.0, %v6082
        %v6084 = vpop.f32.mrb[0].mxu0
        %v6085 = vpop.f32.mrb[0].mxu0
        %v6086 = vadd.f32 0.0, %v6085
        %v6087 = vpop.f32.mrb[0].mxu0
        %6088 = vmatprep.mubr.bf16.mxu0 0
        %6089 = vmatmul.mubr.bf16.gmra.mrb[0].mxu0 %v6040
        %v6090 = vpop.f32.mrb[0].mxu0
        %v6091 = vadd.f32 0.0, %v6090
        %v6092 = vpop.f32.mrb[0].mxu0
        %v6093 = vpop.f32.mrb[0].mxu0
        %v6094 = vadd.f32 0.0, %v6093
        %v6095 = vpop.f32.mrb[0].mxu0
        %6096 = vmatprep.mubr.bf16.mxu0 0
        %6097 = vmatmul.mubr.bf16.gmra.mrb[0].mxu0 %v6043
        %v6098 = vpop.f32.mrb[0].mxu0
        %v6099 = vadd.f32 0.0, %v6098
        %v6100 = vpop.f32.mrb[0].mxu0
        %v6101 = vpop.f32.mrb[0].mxu0
        %v6102 = vadd.f32 0.0, %v6101
        %v6103 = vpop.f32.mrb[0].mxu0
        %6104 = vmatprep.mubr.bf16.mxu0 0
        %6105 = vmatmul.mubr.bf16.gmra.mrb[0].mxu0 %v6046
        %v6106 = vpop.f32.mrb[0].mxu0
        %v6107 = vadd.f32 0.0, %v6106
        %v6108 = vpop.f32.mrb[0].mxu0
        %v6109 = vpop.f32.mrb[0].mxu0
        %v6110 = vadd.f32 0.0, %v6109
        %v6111 = vpop.f32.mrb[0].mxu0
        %6112 = vdwg.mxu0
        %v6113 = vpack.c.bf16 %v5819, %v5816
        %v6114 = vpack.c.bf16 %v5827, %v5824
        %v6115 = vpack.c.bf16 %v5835, %v5832
        %v6116 = vpack.c.bf16 %v5843, %v5840
        %v6117 = vpack.c.bf16 %v5908, %v5905
        %v6118 = vpack.c.bf16 %v5916, %v5913
        %v6119 = vpack.c.bf16 %v5924, %v5921
        %v6120 = vpack.c.bf16 %v5932, %v5929
        %v6121 = vpack.c.bf16 %v5997, %v5994
        %v6122 = vpack.c.bf16 %v6005, %v6002
        %v6123 = vpack.c.bf16 %v6013, %v6010
        %v6124 = vpack.c.bf16 %v6021, %v6018
        %v6125 = vpack.c.bf16 %v6086, %v6083
        %v6126 = vpack.c.bf16 %v6094, %v6091
        %v6127 = vpack.c.bf16 %v6102, %v6099
        %v6128 = vpack.c.bf16 %v6110, %v6107
        %s6129 = scalar_lea.vmem %s3, 12
        %v6130 = vld [vmem:[%s6129] sm:$0xf]
        %v6132 = vsel %vm713, %v6113, 0
        %v6135 = vsel %vm713, %v6114, 0
        %v6138 = vsel %vm713, %v6115, 0
        %v6141 = vsel %vm713, %v6116, 0
        %v6144 = vsel %vm713, %v6117, 0
        %v6147 = vsel %vm713, %v6118, 0
        %v6150 = vsel %vm713, %v6119, 0
        %v6153 = vsel %vm713, %v6120, 0
        %v6156 = vsel %vm713, %v6121, 0
        %v6159 = vsel %vm713, %v6122, 0
        %v6162 = vsel %vm713, %v6123, 0
        %v6165 = vsel %vm713, %v6124, 0
        %v6168 = vsel %vm713, %v6125, 0
        %v6171 = vsel %vm713, %v6126, 0
        %v6174 = vsel %vm713, %v6127, 0
        %v6177 = vsel %vm713, %v6128, 0
        %v6180 = vsel %vm3122, %v6130, 0
        %6182 = vmatprep.subr.bf16.mxu0 0
        %6183 = vmatpush1.bf16.msra.mxu0 %v6180
        %6184 = vmatprep.subr.bf16.mxu0 0
        %6185 = vmatpush1.bf16.msra.mxu0 0
        %6186 = vmatprep.subr.bf16.mxu0 0
        %6187 = vmatpush1.bf16.msra.mxu0 0
        %6188 = vmatprep.subr.bf16.mxu0 0
        %6189 = vmatpush1.bf16.msra.mxu0 0
        %6190 = vmatprep.subr.bf16.mxu0 0
        %6191 = vmatpush1.bf16.msra.mxu0 0
        %6192 = vmatprep.subr.bf16.mxu0 0
        %6193 = vmatpush1.bf16.msra.mxu0 0
        %6194 = vmatprep.subr.bf16.mxu0 0
        %6195 = vmatpush1.bf16.msra.mxu0 0
        %6196 = vmatprep.subr.bf16.mxu0 0
        %6197 = vmatpush1.bf16.msra.mxu0 0
        %6198 = vmatprep.subr.bf16.mxu0 0
        %6199 = vmatpush1.bf16.msra.mxu0 0
        %6200 = vmatprep.subr.bf16.mxu0 0
        %6201 = vmatpush1.bf16.msra.mxu0 0
        %6202 = vmatprep.subr.bf16.mxu0 0
        %6203 = vmatpush1.bf16.msra.mxu0 0
        %6204 = vmatprep.subr.bf16.mxu0 0
        %6205 = vmatpush1.bf16.msra.mxu0 0
        %6206 = vmatprep.subr.bf16.mxu0 0
        %6207 = vmatpush1.bf16.msra.mxu0 0
        %6208 = vmatprep.subr.bf16.mxu0 0
        %6209 = vmatpush1.bf16.msra.mxu0 0
        %6210 = vmatprep.subr.bf16.mxu0 0
        %6211 = vmatpush1.bf16.msra.mxu0 0
        %6212 = vmatprep.subr.bf16.mxu0 0
        %6213 = vmatpush1.bf16.msra.mxu0 0
        %6214 = vmatprep.mubr.bf16.mxu0 0
        %6215 = vmatmul.mubr.bf16.gmra.mrb[0].mxu0 %v6132
        %v6216 = vpop.f32.mrb[0].mxu0
        %v6217 = vadd.f32 0.0, %v6216
        %v6218 = vpop.f32.mrb[0].mxu0
        %v6219 = vpop.f32.mrb[0].mxu0
        %v6220 = vadd.f32 0.0, %v6219
        %v6221 = vpop.f32.mrb[0].mxu0
        %6222 = vmatprep.mubr.bf16.mxu0 0
        %6223 = vmatmul.mubr.bf16.gmra.mrb[0].mxu0 %v6135
        %v6224 = vpop.f32.mrb[0].mxu0
        %v6225 = vadd.f32 0.0, %v6224
        %v6226 = vpop.f32.mrb[0].mxu0
        %v6227 = vpop.f32.mrb[0].mxu0
        %v6228 = vadd.f32 0.0, %v6227
        %v6229 = vpop.f32.mrb[0].mxu0
        %6230 = vmatprep.mubr.bf16.mxu0 0
        %6231 = vmatmul.mubr.bf16.gmra.mrb[0].mxu0 %v6138
        %v6232 = vpop.f32.mrb[0].mxu0
        %v6233 = vadd.f32 0.0, %v6232
        %v6234 = vpop.f32.mrb[0].mxu0
        %v6235 = vpop.f32.mrb[0].mxu0
        %v6236 = vadd.f32 0.0, %v6235
        %v6237 = vpop.f32.mrb[0].mxu0
        %6238 = vmatprep.mubr.bf16.mxu0 0
        %6239 = vmatmul.mubr.bf16.gmra.mrb[0].mxu0 %v6141
        %v6240 = vpop.f32.mrb[0].mxu0
        %v6241 = vadd.f32 0.0, %v6240
        %v6242 = vpop.f32.mrb[0].mxu0
        %v6243 = vpop.f32.mrb[0].mxu0
        %v6244 = vadd.f32 0.0, %v6243
        %v6245 = vpop.f32.mrb[0].mxu0
        %6246 = vmatprep.mubr.bf16.mxu0 0
        %6247 = vmatmul.mubr.bf16.gmra.mrb[0].mxu0 %v6144
        %v6248 = vpop.f32.mrb[0].mxu0
        %v6249 = vadd.f32 0.0, %v6248
        %v6250 = vpop.f32.mrb[0].mxu0
        %v6251 = vpop.f32.mrb[0].mxu0
        %v6252 = vadd.f32 0.0, %v6251
        %v6253 = vpop.f32.mrb[0].mxu0
        %6254 = vmatprep.mubr.bf16.mxu0 0
        %6255 = vmatmul.mubr.bf16.gmra.mrb[0].mxu0 %v6147
        %v6256 = vpop.f32.mrb[0].mxu0
        %v6257 = vadd.f32 0.0, %v6256
        %v6258 = vpop.f32.mrb[0].mxu0
        %v6259 = vpop.f32.mrb[0].mxu0
        %v6260 = vadd.f32 0.0, %v6259
        %v6261 = vpop.f32.mrb[0].mxu0
        %6262 = vmatprep.mubr.bf16.mxu0 0
        %6263 = vmatmul.mubr.bf16.gmra.mrb[0].mxu0 %v6150
        %v6264 = vpop.f32.mrb[0].mxu0
        %v6265 = vadd.f32 0.0, %v6264
        %v6266 = vpop.f32.mrb[0].mxu0
        %v6267 = vpop.f32.mrb[0].mxu0
        %v6268 = vadd.f32 0.0, %v6267
        %v6269 = vpop.f32.mrb[0].mxu0
        %6270 = vmatprep.mubr.bf16.mxu0 0
        %6271 = vmatmul.mubr.bf16.gmra.mrb[0].mxu0 %v6153
        %v6272 = vpop.f32.mrb[0].mxu0
        %v6273 = vadd.f32 0.0, %v6272
        %v6274 = vpop.f32.mrb[0].mxu0
        %v6275 = vpop.f32.mrb[0].mxu0
        %v6276 = vadd.f32 0.0, %v6275
        %v6277 = vpop.f32.mrb[0].mxu0
        %6278 = vmatprep.mubr.bf16.mxu0 0
        %6279 = vmatmul.mubr.bf16.gmra.mrb[0].mxu0 %v6156
        %v6280 = vpop.f32.mrb[0].mxu0
        %v6281 = vadd.f32 0.0, %v6280
        %v6282 = vpop.f32.mrb[0].mxu0
        %v6283 = vpop.f32.mrb[0].mxu0
        %v6284 = vadd.f32 0.0, %v6283
        %v6285 = vpop.f32.mrb[0].mxu0
        %6286 = vmatprep.mubr.bf16.mxu0 0
        %6287 = vmatmul.mubr.bf16.gmra.mrb[0].mxu0 %v6159
        %v6288 = vpop.f32.mrb[0].mxu0
        %v6289 = vadd.f32 0.0, %v6288
        %v6290 = vpop.f32.mrb[0].mxu0
        %v6291 = vpop.f32.mrb[0].mxu0
        %v6292 = vadd.f32 0.0, %v6291
        %v6293 = vpop.f32.mrb[0].mxu0
        %6294 = vmatprep.mubr.bf16.mxu0 0
        %6295 = vmatmul.mubr.bf16.gmra.mrb[0].mxu0 %v6162
        %v6296 = vpop.f32.mrb[0].mxu0
        %v6297 = vadd.f32 0.0, %v6296
        %v6298 = vpop.f32.mrb[0].mxu0
        %v6299 = vpop.f32.mrb[0].mxu0
        %v6300 = vadd.f32 0.0, %v6299
        %v6301 = vpop.f32.mrb[0].mxu0
        %6302 = vmatprep.mubr.bf16.mxu0 0
        %6303 = vmatmul.mubr.bf16.gmra.mrb[0].mxu0 %v6165
        %v6304 = vpop.f32.mrb[0].mxu0
        %v6305 = vadd.f32 0.0, %v6304
        %v6306 = vpop.f32.mrb[0].mxu0
        %v6307 = vpop.f32.mrb[0].mxu0
        %v6308 = vadd.f32 0.0, %v6307
        %v6309 = vpop.f32.mrb[0].mxu0
        %6310 = vmatprep.mubr.bf16.mxu0 0
        %6311 = vmatmul.mubr.bf16.gmra.mrb[0].mxu0 %v6168
        %v6312 = vpop.f32.mrb[0].mxu0
        %v6313 = vadd.f32 0.0, %v6312
        %v6314 = vpop.f32.mrb[0].mxu0
        %v6315 = vpop.f32.mrb[0].mxu0
        %v6316 = vadd.f32 0.0, %v6315
        %v6317 = vpop.f32.mrb[0].mxu0
        %6318 = vmatprep.mubr.bf16.mxu0 0
        %6319 = vmatmul.mubr.bf16.gmra.mrb[0].mxu0 %v6171
        %v6320 = vpop.f32.mrb[0].mxu0
        %v6321 = vadd.f32 0.0, %v6320
        %v6322 = vpop.f32.mrb[0].mxu0
        %v6323 = vpop.f32.mrb[0].mxu0
        %v6324 = vadd.f32 0.0, %v6323
        %v6325 = vpop.f32.mrb[0].mxu0
        %6326 = vmatprep.mubr.bf16.mxu0 0
        %6327 = vmatmul.mubr.bf16.gmra.mrb[0].mxu0 %v6174
        %v6328 = vpop.f32.mrb[0].mxu0
        %v6329 = vadd.f32 0.0, %v6328
        %v6330 = vpop.f32.mrb[0].mxu0
        %v6331 = vpop.f32.mrb[0].mxu0
        %v6332 = vadd.f32 0.0, %v6331
        %v6333 = vpop.f32.mrb[0].mxu0
        %6334 = vmatprep.mubr.bf16.mxu0 0
        %6335 = vmatmul.mubr.bf16.gmra.mrb[0].mxu0 %v6177
        %v6336 = vpop.f32.mrb[0].mxu0
        %v6337 = vadd.f32 0.0, %v6336
        %v6338 = vpop.f32.mrb[0].mxu0
        %v6339 = vpop.f32.mrb[0].mxu0
        %v6340 = vadd.f32 0.0, %v6339
        %v6341 = vpop.f32.mrb[0].mxu0
        %6342 = vdwg.mxu0
        %v6343 = vadd.f32 %v4905, %v6217
        %v6344 = vadd.f32 %v4906, %v6220
        %v6345 = vadd.f32 %v4907, %v6225
        %v6346 = vadd.f32 %v4908, %v6228
        %v6347 = vadd.f32 %v4909, %v6233
        %v6348 = vadd.f32 %v4910, %v6236
        %v6349 = vadd.f32 %v4911, %v6241
        %v6350 = vadd.f32 %v4912, %v6244
        %v6351 = vadd.f32 %v4913, %v6249
        %v6352 = vadd.f32 %v4914, %v6252
        %v6353 = vadd.f32 %v4915, %v6257
        %v6354 = vadd.f32 %v4916, %v6260
        %v6355 = vadd.f32 %v4917, %v6265
        %v6356 = vadd.f32 %v4918, %v6268
        %v6357 = vadd.f32 %v4919, %v6273
        %v6358 = vadd.f32 %v4920, %v6276
        %v6359 = vadd.f32 %v4921, %v6281
        %v6360 = vadd.f32 %v4922, %v6284
        %v6361 = vadd.f32 %v4923, %v6289
        %v6362 = vadd.f32 %v4924, %v6292
        %v6363 = vadd.f32 %v4925, %v6297
        %v6364 = vadd.f32 %v4926, %v6300
        %v6365 = vadd.f32 %v4927, %v6305
        %v6366 = vadd.f32 %v4928, %v6308
        %v6367 = vadd.f32 %v4929, %v6313
        %v6368 = vadd.f32 %v4930, %v6316
        %v6369 = vadd.f32 %v4931, %v6321
        %v6370 = vadd.f32 %v4932, %v6324
        %v6371 = vadd.f32 %v4933, %v6329
        %v6372 = vadd.f32 %v4934, %v6332
        %v6373 = vadd.f32 %v4935, %v6337
        %v6374 = vadd.f32 %v4936, %v6340
        %v6375 = vld [vmem:[%s4] sm:$0x1]
        %v6377 = vlaneseq
        %v6378 = vshrl.u32 %v6377, 7
        %v6379 = vsub.s32 0, %v6378
        %v6380 = vrot.slane %v6375, %v6379
        %v6382 = vadd.f32 %v6343, %v6380
        %v6383 = vadd.f32 %v6344, %v6380
        %v6384 = vadd.f32 %v6345, %v6380
        %v6385 = vadd.f32 %v6346, %v6380
        %v6386 = vadd.f32 %v6347, %v6380
        %v6387 = vadd.f32 %v6348, %v6380
        %v6388 = vadd.f32 %v6349, %v6380
        %v6389 = vadd.f32 %v6350, %v6380
        %v6390 = vadd.f32 %v6351, %v6380
        %v6391 = vadd.f32 %v6352, %v6380
        %v6392 = vadd.f32 %v6353, %v6380
        %v6393 = vadd.f32 %v6354, %v6380
        %v6394 = vadd.f32 %v6355, %v6380
        %v6395 = vadd.f32 %v6356, %v6380
        %v6396 = vadd.f32 %v6357, %v6380
        %v6397 = vadd.f32 %v6358, %v6380
        %v6398 = vadd.f32 %v6359, %v6380
        %v6399 = vadd.f32 %v6360, %v6380
        %v6400 = vadd.f32 %v6361, %v6380
        %v6401 = vadd.f32 %v6362, %v6380
        %v6402 = vadd.f32 %v6363, %v6380
        %v6403 = vadd.f32 %v6364, %v6380
        %v6404 = vadd.f32 %v6365, %v6380
        %v6405 = vadd.f32 %v6366, %v6380
        %v6406 = vadd.f32 %v6367, %v6380
        %v6407 = vadd.f32 %v6368, %v6380
        %v6408 = vadd.f32 %v6369, %v6380
        %v6409 = vadd.f32 %v6370, %v6380
        %v6410 = vadd.f32 %v6371, %v6380
        %v6411 = vadd.f32 %v6372, %v6380
        %v6412 = vadd.f32 %v6373, %v6380
        %v6413 = vadd.f32 %v6374, %v6380
        %6414 = vst.msk [vmem:[%s273] sm:$0xff] %vm411, %v6382
        %6415 = vst.msk [vmem:[%s273 + $0x8] sm:$0xff] %vm411, %v6383
        %6416 = vst.msk [vmem:[%s273 + $0x10] sm:$0xff] %vm411, %v6384
        %6417 = vst.msk [vmem:[%s273 + $0x18] sm:$0xff] %vm411, %v6385
        %6418 = vst.msk [vmem:[%s273 + $0x20] sm:$0xff] %vm411, %v6386
        %6419 = vst.msk [vmem:[%s273 + $0x28] sm:$0xff] %vm411, %v6387
        %6420 = vst.msk [vmem:[%s273 + $0x30] sm:$0xff] %vm411, %v6388
        %6421 = vst.msk [vmem:[%s273 + $0x38] sm:$0xff] %vm411, %v6389
        %6422 = vst.msk [vmem:[%s273 + $0x40] sm:$0xff] %vm411, %v6390
        %6423 = vst.msk [vmem:[%s273 + $0x48] sm:$0xff] %vm411, %v6391
        %6424 = vst.msk [vmem:[%s273 + $0x50] sm:$0xff] %vm411, %v6392
        %6425 = vst.msk [vmem:[%s273 + $0x58] sm:$0xff] %vm411, %v6393
        %6426 = vst.msk [vmem:[%s273 + $0x60] sm:$0xff] %vm411, %v6394
        %6427 = vst.msk [vmem:[%s273 + $0x68] sm:$0xff] %vm411, %v6395
        %6428 = vst.msk [vmem:[%s273 + $0x70] sm:$0xff] %vm411, %v6396
        %6429 = vst.msk [vmem:[%s273 + $0x78] sm:$0xff] %vm411, %v6397
        %6430 = vst.msk [vmem:[%s273 + $0x80] sm:$0xff] %vm411, %v6398
        %6431 = vst.msk [vmem:[%s273 + $0x88] sm:$0xff] %vm411, %v6399
        %6432 = vst.msk [vmem:[%s273 + $0x90] sm:$0xff] %vm411, %v6400
        %6433 = vst.msk [vmem:[%s273 + $0x98] sm:$0xff] %vm411, %v6401
        %6434 = vst.msk [vmem:[%s273 + $0xa0] sm:$0xff] %vm411, %v6402
        %6435 = vst.msk [vmem:[%s273 + $0xa8] sm:$0xff] %vm411, %v6403
        %6436 = vst.msk [vmem:[%s273 + $0xb0] sm:$0xff] %vm411, %v6404
        %6437 = vst.msk [vmem:[%s273 + $0xb8] sm:$0xff] %vm411, %v6405
        %6438 = vst.msk [vmem:[%s273 + $0xc0] sm:$0xff] %vm411, %v6406
        %6439 = vst.msk [vmem:[%s273 + $0xc8] sm:$0xff] %vm411, %v6407
        %6440 = vst.msk [vmem:[%s273 + $0xd0] sm:$0xff] %vm411, %v6408
        %6441 = vst.msk [vmem:[%s273 + $0xd8] sm:$0xff] %vm411, %v6409
        %6442 = vst.msk [vmem:[%s273 + $0xe0] sm:$0xff] %vm411, %v6410
        %6443 = vst.msk [vmem:[%s273 + $0xe8] sm:$0xff] %vm411, %v6411
        %6444 = vst.msk [vmem:[%s273 + $0xf0] sm:$0xff] %vm411, %v6412
        %6445 = vst.msk [vmem:[%s273 + $0xf8] sm:$0xff] %vm411, %v6413
        %s6446 = smul.u32 4, %s18
        %p6447 = scmp.lt.s32.totalorder %s6446, 7
        %s6448 = scalar_select %p6447, %s6446, 7
        %s6449 = smul.addr %s6448, 8
        %s6450 = smul.addr %s6449, 8
        %s6451 = scalar_lea.vmem %s6, %s6450
        // Predicated region
        $region49: #{tpu_custom_call.1} parent=43 // pred_check
          %p6452 = pneg %p167
        $region50: #{tpu_custom_call.1} parent=43 // pred_check_branch
          %6454 = sbr.rel (%p6452) target = $region52
        $region51: #{tpu_custom_call.1} parent=43 // pred_region
          %s6455 = smul.u32 4, %s18
        $region52: #{tpu_custom_call.1} parent=43 // pred_fallthru
          _
      $region44: #{tpu_custom_call.1} parent=5 // pred_fallthru
        _
      %p6456 = scmp.le.s32.totalorder 2, %s13
      // Predicated region
      $region53: #{tpu_custom_call.1} parent=5 // pred_check
        %p6457 = pneg %p6456
      $region54: #{tpu_custom_call.1} parent=5 // pred_check_branch
        %6459 = sbr.rel (%p6457) target = $region56
      $region55: #{tpu_custom_call.1} parent=5 // pred_region
        %s6460 = ssub.s32 %s13, 2
        // Predicated region
        $region57: #{tpu_custom_call.1} parent=55 // pred_check
          %p6461 = pneg %p173
        $region58: #{tpu_custom_call.1} parent=55 // pred_check_branch
          %6463 = sbr.rel (%p6461) target = $region60
        $region59: #{tpu_custom_call.1} parent=55 // pred_region
          %s6464 = smul.u32 4, %s19
          %p6465 = scmp.lt.s32.totalorder %s6464, 7
          %s6466 = scalar_select %p6465, %s6464, 7
          %s6467 = smul.addr %s6466, 8
          %s6468 = smul.addr %s6467, 8
          %s6469 = scalar_lea.vmem %s6, %s6468
        $region60: #{tpu_custom_call.1} parent=55 // pred_fallthru
          _
      $region56: #{tpu_custom_call.1} parent=5 // pred_fallthru
        _
    $region6: #{tpu_custom_call.1} parent=1 // loop_footer
      %s17 = sadd.s32 1, %s13
    $region7: #{tpu_custom_call.1} parent=1 // loop_footer_branch
      %12 = sbr.rel target = $region3
    $region8: #{tpu_custom_call.1} parent=1 // loop_exit
      _
    %6470 = vsyncpa [#allocation3], 1
    %s6471 = scalar_lea.sflag [#allocation3], 1
    %6472 = vsyncpa %s6471, 1

</llo_original>
